<compile_context>
chip_gen: v7x
topology: tpu7x:2x2x1
jax: 0.10.0
libtpu: 0.0.40
codegen_flags: <defaults>
</compile_context>

<pallas_src>
import jax
import jax.numpy as jnp
from jax.experimental import pallas as pl
from jax.experimental.pallas import tpu as pltpu

# ---- problem sizes (module hard-codes 1280 -> 4x128 -> 4x128 -> 64) ----
N = 16           # number of nodes (small synthetic graph)
F_IN = 1280      # input node-feature dim
H = 4            # attention heads
D = 128          # out feats per head
HD = H * D       # 512
F_OUT = 64       # fc_g1 output dim
NEG_SLOPE = 0.2  # DGL GATConv default LeakyReLU slope

N_W1_CHUNKS = 5              # 1280 = 5 x 256
W1_CHUNK = F_IN // N_W1_CHUNKS


def _elu(x):
    return jnp.where(x > 0, x, jnp.exp(x) - 1.0)


def _leaky_relu(x):
    return jnp.where(x > 0, x, NEG_SLOPE * x)


def _gat_attention(z, a_ref, edge, agg_ref):
    """Dense GATConv attention + aggregation (bias/activation applied by caller).

    z:      [N, HD] f32 projected features (head h occupies cols h*D:(h+1)*D).
    a_ref:  [HD, 2H] bf16 block-structured attention matrix (col h holds attn_l[h]
            in rows h*D:(h+1)*D, col H+h holds attn_r[h] there).
    edge:   [N, N] bool, edge[v, u] True <=> edge u -> v (dst-side softmax over the
            last / lane axis).
    agg_ref:[N, HD] f32 VMEM scratch; per-head results land in 128-aligned slices.
    """
    z16 = z.astype(jnp.bfloat16)
    # One bf16 MXU matmul gives every head's el/er (no cross-lane reductions);
    # cols 0..H-1 = el (source scores), cols H..2H-1 = er (destination scores).
    scores = jnp.dot(z16, a_ref[...], preferred_element_type=jnp.float32)   # [N, 2H]
    # Hoisted out of the head loop: one small transpose turns the source scores
    # into lane-major rows (1 XLU trip instead of H column relayouts).
    el_rows = scores[:, :H].T                                               # [H, N]
    er_cols = scores[:, H:]                                                 # [N, H]
    for hd in range(H):
        zh = z16[:, hd * D:(hd + 1) * D]                                    # [N, D]
        el = el_rows[hd:hd + 1, :]                                          # [1, N] src
        er = er_cols[:, hd:hd + 1]                                          # [N, 1] dst
        # e_t[v, u] = LeakyReLU(el[u] + er[v]) on existing edges u -> v
        e_t = _leaky_relu(er + el)                                          # [N, N]
        e_t = jnp.where(edge, e_t, -1e30)
        m = jnp.max(e_t, axis=-1, keepdims=True)
        p = jnp.where(edge, jnp.exp(e_t - m), 0.0)
        # Forced self-loops guarantee every row has sum(p) > 0 (no inf/NaN here).
        inv_l = pl.reciprocal(jnp.sum(p, axis=-1, keepdims=True), approx=True)
        alpha = (p * inv_l).astype(jnp.bfloat16)                            # [N, N]
        agg_ref[:, hd * D:(hd + 1) * D] = jnp.dot(
            alpha, zh, preferred_element_type=jnp.float32)


def net_kernel(contact_ref, feat_ref,
               w1_hbm, a1_ref, b1_ref,
               w2_hbm, a2_ref, b2_ref,
               wfc_hbm, bfc_ref,
               out_ref,
               w1_buf, w2_vmem, wfc_vmem, o1_ref, o2_ref,
               w1_sem, dma_sem):
    def w1_copy(k, slot):
        return pltpu.make_async_copy(
            w1_hbm.at[pl.ds(k * W1_CHUNK, W1_CHUNK), :],
            w1_buf.at[slot], w1_sem.at[slot])

    # Stream w1 in double-buffered chunks so its HBM transfer overlaps compute;
    # w2/wfc DMAs queue behind it and are waited on only when actually needed.
    w1_copy(0, 0).start()
    w1_copy(1, 1).start()
    w2_cp = pltpu.make_async_copy(w2_hbm, w2_vmem, dma_sem.at[0])
    wfc_cp = pltpu.make_async_copy(wfc_hbm, wfc_vmem, dma_sem.at[1])
    w2_cp.start()
    wfc_cp.start()

    # loader(): force self-loops on the diagonal, then adjacency -> edges.
    # Built in-kernel (no per-call XLA prep); transposed orientation so the
    # destination-side softmax runs over the lane axis.  edge[v, u] <=> u -> v.
    row = jax.lax.broadcasted_iota(jnp.int32, (N, N), 0)
    col = jax.lax.broadcasted_iota(jnp.int32, (N, N), 1)
    edge = (jnp.transpose(contact_ref[...]) > 0.0) | (row == col)

    # ---- gcn1: pipelined z1 = feat @ w1 (f32 accumulation in vregs) ----
    feat = feat_ref[...]
    z1 = jnp.zeros((N, HD), jnp.float32)
    for k in range(N_W1_CHUNKS):
        slot = k & 1
        w1_copy(k, slot).wait()
        z1 = z1 + jnp.dot(feat[:, k * W1_CHUNK:(k + 1) * W1_CHUNK], w1_buf[slot],
                          preferred_element_type=jnp.float32)
        if k + 2 < N_W1_CHUNKS:      # the slot was just freed by the matmul above
            w1_copy(k + 2, slot).start()

    _gat_layer_out = None  # (readability marker only)
    _gat_attention(z1, a1_ref, edge, o1_ref)
    # +bias -> ELU   (reshape(-1, 512) == head concat, already our layout)
    o1 = _elu(o1_ref[...] + b1_ref[...]).astype(jnp.bfloat16)

    # ---- gcn2: wait for its weights only now ----
    w2_cp.wait()
    z2 = jnp.dot(o1, w2_vmem[...], preferred_element_type=jnp.float32)
    _gat_attention(z2, a2_ref, edge, o2_ref)
    o2 = _elu(o2_ref[...] + b2_ref[...]).astype(jnp.bfloat16)

    # ---- fc_g1 -> ELU   (unsqueeze(0) is a pure reshape, done in the wrapper) ----
    wfc_cp.wait()
    y = jnp.dot(o2, wfc_vmem[...], preferred_element_type=jnp.float32) + bfc_ref[...]
    # TODO(synk): F_OUT=64 (<128 lanes) makes this a masked store; negligible at 4 KB,
    #             pad to 128 only if N/F_OUT ever grow.
    out_ref[...] = _elu(y)


def _attn_matrix(al, ar):
    """Block-structured [HD, 2H] bf16 matrix so el/er come from a single matmul.

    Built ONCE at parameter-creation time (not per forward call).
    """
    a = jnp.zeros((HD, 2 * H), jnp.float32)
    for h in range(H):
        a = a.at[h * D:(h + 1) * D, h].set(al[h])
        a = a.at[h * D:(h + 1) * D, H + h].set(ar[h])
    return a.astype(jnp.bfloat16)


@jax.jit
def net_forward(contact, feature_bf16, params):
    """Thin wrapper: everything (edge mask, attention, projections) runs in-kernel."""
    n = contact.shape[0]
    vmem = pl.BlockSpec(memory_space=pltpu.MemorySpace.VMEM)
    hbm = pl.BlockSpec(memory_space=pl.ANY)

    out = pl.pallas_call(
        net_kernel,
        out_shape=jax.ShapeDtypeStruct((n, F_OUT), jnp.float32),
        in_specs=[vmem, vmem,        # contact (raw), feature (bf16)
                  hbm, vmem, vmem,   # w1 (streamed from HBM), a1, b1
                  hbm, vmem, vmem,   # w2 (HBM, DMA overlapped), a2, b2
                  hbm, vmem],        # wfc (HBM, DMA overlapped), bfc
        out_specs=vmem,
        scratch_shapes=[
            pltpu.VMEM((2, W1_CHUNK, HD), jnp.bfloat16),  # w1 double buffer (2x256 KB)
            pltpu.VMEM((HD, HD), jnp.bfloat16),           # w2 landing buffer
            pltpu.VMEM((HD, F_OUT), jnp.bfloat16),        # wfc landing buffer
            pltpu.VMEM((n, HD), jnp.float32),             # layer-1 head-concat output
            pltpu.VMEM((n, HD), jnp.float32),             # layer-2 head-concat output
            pltpu.SemaphoreType.DMA((2,)),                # w1 chunk semaphores
            pltpu.SemaphoreType.DMA((2,)),                # w2 / wfc semaphores
        ],
        compiler_params=pltpu.CompilerParams(vmem_limit_bytes=8 << 20),
    )(contact, feature_bf16,
      params["w1"], params["a1"], params["b1"],
      params["w2"], params["a2"], params["b2"],
      params["wfc"], params["bfc"])
    return out[None]  # unsqueeze(0) -> [1, N, 64]


if __name__ == "__main__":
    key = jax.random.PRNGKey(0)
    ks = jax.random.split(key, 10)

    # Deterministic synthetic inputs.
    contact = (jax.random.uniform(ks[0], (N, N)) > 0.7).astype(jnp.float32)
    feature = jax.random.normal(ks[1], (N, F_IN), jnp.float32)
    # Cast once outside the per-call path (review: no per-call wrapper XLA ops).
    feature_bf16 = feature.astype(jnp.bfloat16)

    def init(k, shape, scale, dtype=jnp.float32):
        return (scale * jax.random.normal(k, shape)).astype(dtype)

    params = dict(
        # GATConv(1280, 128, 4): fc weight (no bias, stored [in, out], bf16),
        # precomputed block attention matrix, output bias
        w1=init(ks[2], (F_IN, HD), 1.0 / (F_IN ** 0.5), jnp.bfloat16),
        a1=_attn_matrix(init(ks[3], (H, D), 0.1), init(ks[4], (H, D), 0.1)),
        b1=jnp.zeros((1, HD), jnp.float32),
        # GATConv(512, 128, 4)
        w2=init(ks[5], (HD, HD), 1.0 / (HD ** 0.5), jnp.bfloat16),
        a2=_attn_matrix(init(ks[6], (H, D), 0.1), init(ks[7], (H, D), 0.1)),
        b2=jnp.zeros((1, HD), jnp.float32),
        # Linear(512, 64)
        wfc=init(ks[8], (HD, F_OUT), 1.0 / (HD ** 0.5), jnp.bfloat16),
        bfc=init(ks[9], (1, F_OUT), 0.01),
    )

    out = net_forward(contact, feature_bf16, params)
    jax.block_until_ready(out)
    assert out.shape == (1, N, F_OUT), out.shape
    assert bool(jnp.all(jnp.isfinite(out)))
    print("KERNEL_OK")
</pallas_src>

<mosaic_0001>
module attributes {stable_mosaic.version = 11 : i64} {
  func.func @net_kernel(%arg0: memref<16x16xf32, #tpu.memory_space<vmem>>, %arg1: memref<16x1280xbf16, #tpu.memory_space<vmem>>, %arg2: memref<1280x512xbf16, #tpu.memory_space<any>>, %arg3: memref<512x8xbf16, #tpu.memory_space<vmem>>, %arg4: memref<1x512xf32, #tpu.memory_space<vmem>>, %arg5: memref<512x512xbf16, #tpu.memory_space<any>>, %arg6: memref<512x8xbf16, #tpu.memory_space<vmem>>, %arg7: memref<1x512xf32, #tpu.memory_space<vmem>>, %arg8: memref<512x64xbf16, #tpu.memory_space<any>>, %arg9: memref<1x64xf32, #tpu.memory_space<vmem>>, %arg10: memref<16x64xf32, #tpu.memory_space<vmem>>, %arg11: memref<2x256x512xbf16, #tpu.memory_space<vmem>>, %arg12: memref<512x512xbf16, #tpu.memory_space<vmem>>, %arg13: memref<512x64xbf16, #tpu.memory_space<vmem>>, %arg14: memref<16x512xf32, #tpu.memory_space<vmem>>, %arg15: memref<16x512xf32, #tpu.memory_space<vmem>>, %arg16: memref<2x!tpu.dma_semaphore, #tpu.memory_space<semaphore_mem>>, %arg17: memref<2x!tpu.dma_semaphore, #tpu.memory_space<semaphore_mem>>) attributes {dimension_semantics = [], scalar_prefetch = 0 : i64, scratch_operands = 7 : i64, tpu.core_type = #tpu.core_type<tc>} {
    %c0_i32 = arith.constant 0 : i32
    %c0_i32_0 = arith.constant 0 : i32
    %c0_i32_1 = arith.constant 0 : i32
    %c0_i32_2 = arith.constant 0 : i32
    %0 = tpu.memref_slice %arg2[%c0_i32_1, %c0_i32_2] : memref<1280x512xbf16, #tpu.memory_space<any>> -> memref<256x512xbf16, #tpu.memory_space<any>>
    %c0_i32_3 = arith.constant 0 : i32
    %c0_i32_4 = arith.constant 0 : i32
    %1 = tpu.memref_slice %arg11[%c0_i32, %c0_i32_3, %c0_i32_4] : memref<2x256x512xbf16, #tpu.memory_space<vmem>> -> memref<1x256x512xbf16, #tpu.memory_space<vmem>>
    %2 = tpu.memref_squeeze %1 : memref<1x256x512xbf16, #tpu.memory_space<vmem>> -> memref<256x512xbf16, #tpu.memory_space<vmem>>
    %3 = tpu.memref_slice %arg16[%c0_i32_0] : memref<2x!tpu.dma_semaphore, #tpu.memory_space<semaphore_mem>> -> memref<1x!tpu.dma_semaphore, #tpu.memory_space<semaphore_mem>>
    %4 = tpu.memref_squeeze %3 : memref<1x!tpu.dma_semaphore, #tpu.memory_space<semaphore_mem>> -> memref<!tpu.dma_semaphore, #tpu.memory_space<semaphore_mem>>
    tpu.enqueue_dma source(%0 : memref<256x512xbf16, #tpu.memory_space<any>>) target(%2 : memref<256x512xbf16, #tpu.memory_space<vmem>>) target_semaphore(%4 : memref<!tpu.dma_semaphore, #tpu.memory_space<semaphore_mem>>)
    %c1_i32 = arith.constant 1 : i32
    %c1_i32_5 = arith.constant 1 : i32
    %c256_i32 = arith.constant 256 : i32
    %c0_i32_6 = arith.constant 0 : i32
    %5 = tpu.memref_slice %arg2[%c256_i32, %c0_i32_6] : memref<1280x512xbf16, #tpu.memory_space<any>> -> memref<256x512xbf16, #tpu.memory_space<any>>
    %c0_i32_7 = arith.constant 0 : i32
    %c0_i32_8 = arith.constant 0 : i32
    %6 = tpu.memref_slice %arg11[%c1_i32, %c0_i32_7, %c0_i32_8] : memref<2x256x512xbf16, #tpu.memory_space<vmem>> -> memref<1x256x512xbf16, #tpu.memory_space<vmem>>
    %7 = tpu.memref_squeeze %6 : memref<1x256x512xbf16, #tpu.memory_space<vmem>> -> memref<256x512xbf16, #tpu.memory_space<vmem>>
    %8 = tpu.memref_slice %arg16[%c1_i32_5] : memref<2x!tpu.dma_semaphore, #tpu.memory_space<semaphore_mem>> -> memref<1x!tpu.dma_semaphore, #tpu.memory_space<semaphore_mem>>
    %9 = tpu.memref_squeeze %8 : memref<1x!tpu.dma_semaphore, #tpu.memory_space<semaphore_mem>> -> memref<!tpu.dma_semaphore, #tpu.memory_space<semaphore_mem>>
    tpu.enqueue_dma source(%5 : memref<256x512xbf16, #tpu.memory_space<any>>) target(%7 : memref<256x512xbf16, #tpu.memory_space<vmem>>) target_semaphore(%9 : memref<!tpu.dma_semaphore, #tpu.memory_space<semaphore_mem>>)
    %c0_i32_9 = arith.constant 0 : i32
    %10 = tpu.memref_slice %arg17[%c0_i32_9] : memref<2x!tpu.dma_semaphore, #tpu.memory_space<semaphore_mem>> -> memref<1x!tpu.dma_semaphore, #tpu.memory_space<semaphore_mem>>
    %11 = tpu.memref_squeeze %10 : memref<1x!tpu.dma_semaphore, #tpu.memory_space<semaphore_mem>> -> memref<!tpu.dma_semaphore, #tpu.memory_space<semaphore_mem>>
    tpu.enqueue_dma source(%arg5 : memref<512x512xbf16, #tpu.memory_space<any>>) target(%arg12 : memref<512x512xbf16, #tpu.memory_space<vmem>>) target_semaphore(%11 : memref<!tpu.dma_semaphore, #tpu.memory_space<semaphore_mem>>)
    %c1_i32_10 = arith.constant 1 : i32
    %12 = tpu.memref_slice %arg17[%c1_i32_10] : memref<2x!tpu.dma_semaphore, #tpu.memory_space<semaphore_mem>> -> memref<1x!tpu.dma_semaphore, #tpu.memory_space<semaphore_mem>>
    %13 = tpu.memref_squeeze %12 : memref<1x!tpu.dma_semaphore, #tpu.memory_space<semaphore_mem>> -> memref<!tpu.dma_semaphore, #tpu.memory_space<semaphore_mem>>
    tpu.enqueue_dma source(%arg8 : memref<512x64xbf16, #tpu.memory_space<any>>) target(%arg13 : memref<512x64xbf16, #tpu.memory_space<vmem>>) target_semaphore(%13 : memref<!tpu.dma_semaphore, #tpu.memory_space<semaphore_mem>>)
    %14 = tpu.iota {dimensions = array<i32: 0>} : vector<16x16xi32>
    %15 = tpu.iota {dimensions = array<i32: 1>} : vector<16x16xi32>
    %c0 = arith.constant 0 : index
    %c0_11 = arith.constant 0 : index
    %16 = vector.load %arg0[%c0, %c0_11] : memref<16x16xf32, #tpu.memory_space<vmem>>, vector<16x16xf32>
    %17 = tpu.transpose %16, [1, 0] : vector<16x16xf32> -> vector<16x16xf32>
    %cst = arith.constant 0.000000e+00 : f32
    %18 = vector.broadcast %cst : f32 to vector<16x16xf32>
    %19 = arith.cmpf ogt, %17, %18 : vector<16x16xf32>
    %20 = arith.cmpi eq, %14, %15 : vector<16x16xi32>
    %21 = arith.ori %19, %20 : vector<16x16xi1>
    %c0_12 = arith.constant 0 : index
    %c0_13 = arith.constant 0 : index
    %22 = vector.load %arg1[%c0_12, %c0_13] : memref<16x1280xbf16, #tpu.memory_space<vmem>>, vector<16x1280xbf16>
    %cst_14 = arith.constant 0.000000e+00 : f32
    %23 = vector.broadcast %cst_14 : f32 to vector<16x512xf32>
    %c0_i32_15 = arith.constant 0 : i32
    %c0_i32_16 = arith.constant 0 : i32
    %c0_i32_17 = arith.constant 0 : i32
    %c0_i32_18 = arith.constant 0 : i32
    %24 = tpu.memref_slice %arg2[%c0_i32_17, %c0_i32_18] : memref<1280x512xbf16, #tpu.memory_space<any>> -> memref<256x512xbf16, #tpu.memory_space<any>>
    %c0_i32_19 = arith.constant 0 : i32
    %c0_i32_20 = arith.constant 0 : i32
    %25 = tpu.memref_slice %arg11[%c0_i32_15, %c0_i32_19, %c0_i32_20] : memref<2x256x512xbf16, #tpu.memory_space<vmem>> -> memref<1x256x512xbf16, #tpu.memory_space<vmem>>
    %26 = tpu.memref_squeeze %25 : memref<1x256x512xbf16, #tpu.memory_space<vmem>> -> memref<256x512xbf16, #tpu.memory_space<vmem>>
    %27 = tpu.memref_slice %arg16[%c0_i32_16] : memref<2x!tpu.dma_semaphore, #tpu.memory_space<semaphore_mem>> -> memref<1x!tpu.dma_semaphore, #tpu.memory_space<semaphore_mem>>
    %28 = tpu.memref_squeeze %27 : memref<1x!tpu.dma_semaphore, #tpu.memory_space<semaphore_mem>> -> memref<!tpu.dma_semaphore, #tpu.memory_space<semaphore_mem>>
    tpu.wait_dma2 semaphore(%28 : memref<!tpu.dma_semaphore, #tpu.memory_space<semaphore_mem>>) src(%24 : memref<256x512xbf16, #tpu.memory_space<any>>) dst(%26 : memref<256x512xbf16, #tpu.memory_space<vmem>>)
    %29 = vector.extract_strided_slice %22 {offsets = [0, 0], sizes = [16, 256], strides = [1, 1]} : vector<16x1280xbf16> to vector<16x256xbf16>
    %c0_21 = arith.constant 0 : index
    %c0_22 = arith.constant 0 : index
    %c0_23 = arith.constant 0 : index
    %30 = vector.load %arg11[%c0_21, %c0_22, %c0_23] : memref<2x256x512xbf16, #tpu.memory_space<vmem>>, vector<1x256x512xbf16>
    %31 = vector.shape_cast %30 : vector<1x256x512xbf16> to vector<256x512xbf16>
    %cst_24 = arith.constant dense<0.000000e+00> : vector<16x512xf32>
    %32 = tpu.matmul %29, %31, %cst_24 {dimension_numbers = #tpu.dot_dimension_numbers<[1], [0], [0], [1], [0, 0, 1, 1], [], []>} : vector<16x256xbf16>, vector<256x512xbf16>, vector<16x512xf32> -> vector<16x512xf32>
    %33 = arith.addf %23, %32 : vector<16x512xf32>
    %c0_i32_25 = arith.constant 0 : i32
    %c0_i32_26 = arith.constant 0 : i32
    %c512_i32 = arith.constant 512 : i32
    %c0_i32_27 = arith.constant 0 : i32
    %34 = tpu.memref_slice %arg2[%c512_i32, %c0_i32_27] : memref<1280x512xbf16, #tpu.memory_space<any>> -> memref<256x512xbf16, #tpu.memory_space<any>>
    %c0_i32_28 = arith.constant 0 : i32
    %c0_i32_29 = arith.constant 0 : i32
    %35 = tpu.memref_slice %arg11[%c0_i32_25, %c0_i32_28, %c0_i32_29] : memref<2x256x512xbf16, #tpu.memory_space<vmem>> -> memref<1x256x512xbf16, #tpu.memory_space<vmem>>
    %36 = tpu.memref_squeeze %35 : memref<1x256x512xbf16, #tpu.memory_space<vmem>> -> memref<256x512xbf16, #tpu.memory_space<vmem>>
    %37 = tpu.memref_slice %arg16[%c0_i32_26] : memref<2x!tpu.dma_semaphore, #tpu.memory_space<semaphore_mem>> -> memref<1x!tpu.dma_semaphore, #tpu.memory_space<semaphore_mem>>
    %38 = tpu.memref_squeeze %37 : memref<1x!tpu.dma_semaphore, #tpu.memory_space<semaphore_mem>> -> memref<!tpu.dma_semaphore, #tpu.memory_space<semaphore_mem>>
    tpu.enqueue_dma source(%34 : memref<256x512xbf16, #tpu.memory_space<any>>) target(%36 : memref<256x512xbf16, #tpu.memory_space<vmem>>) target_semaphore(%38 : memref<!tpu.dma_semaphore, #tpu.memory_space<semaphore_mem>>)
    %c1_i32_30 = arith.constant 1 : i32
    %c1_i32_31 = arith.constant 1 : i32
    %c256_i32_32 = arith.constant 256 : i32
    %c0_i32_33 = arith.constant 0 : i32
    %39 = tpu.memref_slice %arg2[%c256_i32_32, %c0_i32_33] : memref<1280x512xbf16, #tpu.memory_space<any>> -> memref<256x512xbf16, #tpu.memory_space<any>>
    %c0_i32_34 = arith.constant 0 : i32
    %c0_i32_35 = arith.constant 0 : i32
    %40 = tpu.memref_slice %arg11[%c1_i32_30, %c0_i32_34, %c0_i32_35] : memref<2x256x512xbf16, #tpu.memory_space<vmem>> -> memref<1x256x512xbf16, #tpu.memory_space<vmem>>
    %41 = tpu.memref_squeeze %40 : memref<1x256x512xbf16, #tpu.memory_space<vmem>> -> memref<256x512xbf16, #tpu.memory_space<vmem>>
    %42 = tpu.memref_slice %arg16[%c1_i32_31] : memref<2x!tpu.dma_semaphore, #tpu.memory_space<semaphore_mem>> -> memref<1x!tpu.dma_semaphore, #tpu.memory_space<semaphore_mem>>
    %43 = tpu.memref_squeeze %42 : memref<1x!tpu.dma_semaphore, #tpu.memory_space<semaphore_mem>> -> memref<!tpu.dma_semaphore, #tpu.memory_space<semaphore_mem>>
    tpu.wait_dma2 semaphore(%43 : memref<!tpu.dma_semaphore, #tpu.memory_space<semaphore_mem>>) src(%39 : memref<256x512xbf16, #tpu.memory_space<any>>) dst(%41 : memref<256x512xbf16, #tpu.memory_space<vmem>>)
    %44 = vector.extract_strided_slice %22 {offsets = [0, 256], sizes = [16, 256], strides = [1, 1]} : vector<16x1280xbf16> to vector<16x256xbf16>
    %c1 = arith.constant 1 : index
    %c0_36 = arith.constant 0 : index
    %c0_37 = arith.constant 0 : index
    %45 = vector.load %arg11[%c1, %c0_36, %c0_37] : memref<2x256x512xbf16, #tpu.memory_space<vmem>>, vector<1x256x512xbf16>
    %46 = vector.shape_cast %45 : vector<1x256x512xbf16> to vector<256x512xbf16>
    %cst_38 = arith.constant dense<0.000000e+00> : vector<16x512xf32>
    %47 = tpu.matmul %44, %46, %cst_38 {dimension_numbers = #tpu.dot_dimension_numbers<[1], [0], [0], [1], [0, 0, 1, 1], [], []>} : vector<16x256xbf16>, vector<256x512xbf16>, vector<16x512xf32> -> vector<16x512xf32>
    %48 = arith.addf %33, %47 : vector<16x512xf32>
    %c1_i32_39 = arith.constant 1 : i32
    %c1_i32_40 = arith.constant 1 : i32
    %c768_i32 = arith.constant 768 : i32
    %c0_i32_41 = arith.constant 0 : i32
    %49 = tpu.memref_slice %arg2[%c768_i32, %c0_i32_41] : memref<1280x512xbf16, #tpu.memory_space<any>> -> memref<256x512xbf16, #tpu.memory_space<any>>
    %c0_i32_42 = arith.constant 0 : i32
    %c0_i32_43 = arith.constant 0 : i32
    %50 = tpu.memref_slice %arg11[%c1_i32_39, %c0_i32_42, %c0_i32_43] : memref<2x256x512xbf16, #tpu.memory_space<vmem>> -> memref<1x256x512xbf16, #tpu.memory_space<vmem>>
    %51 = tpu.memref_squeeze %50 : memref<1x256x512xbf16, #tpu.memory_space<vmem>> -> memref<256x512xbf16, #tpu.memory_space<vmem>>
    %52 = tpu.memref_slice %arg16[%c1_i32_40] : memref<2x!tpu.dma_semaphore, #tpu.memory_space<semaphore_mem>> -> memref<1x!tpu.dma_semaphore, #tpu.memory_space<semaphore_mem>>
    %53 = tpu.memref_squeeze %52 : memref<1x!tpu.dma_semaphore, #tpu.memory_space<semaphore_mem>> -> memref<!tpu.dma_semaphore, #tpu.memory_space<semaphore_mem>>
    tpu.enqueue_dma source(%49 : memref<256x512xbf16, #tpu.memory_space<any>>) target(%51 : memref<256x512xbf16, #tpu.memory_space<vmem>>) target_semaphore(%53 : memref<!tpu.dma_semaphore, #tpu.memory_space<semaphore_mem>>)
    %c0_i32_44 = arith.constant 0 : i32
    %c0_i32_45 = arith.constant 0 : i32
    %c512_i32_46 = arith.constant 512 : i32
    %c0_i32_47 = arith.constant 0 : i32
    %54 = tpu.memref_slice %arg2[%c512_i32_46, %c0_i32_47] : memref<1280x512xbf16, #tpu.memory_space<any>> -> memref<256x512xbf16, #tpu.memory_space<any>>
    %c0_i32_48 = arith.constant 0 : i32
    %c0_i32_49 = arith.constant 0 : i32
    %55 = tpu.memref_slice %arg11[%c0_i32_44, %c0_i32_48, %c0_i32_49] : memref<2x256x512xbf16, #tpu.memory_space<vmem>> -> memref<1x256x512xbf16, #tpu.memory_space<vmem>>
    %56 = tpu.memref_squeeze %55 : memref<1x256x512xbf16, #tpu.memory_space<vmem>> -> memref<256x512xbf16, #tpu.memory_space<vmem>>
    %57 = tpu.memref_slice %arg16[%c0_i32_45] : memref<2x!tpu.dma_semaphore, #tpu.memory_space<semaphore_mem>> -> memref<1x!tpu.dma_semaphore, #tpu.memory_space<semaphore_mem>>
    %58 = tpu.memref_squeeze %57 : memref<1x!tpu.dma_semaphore, #tpu.memory_space<semaphore_mem>> -> memref<!tpu.dma_semaphore, #tpu.memory_space<semaphore_mem>>
    tpu.wait_dma2 semaphore(%58 : memref<!tpu.dma_semaphore, #tpu.memory_space<semaphore_mem>>) src(%54 : memref<256x512xbf16, #tpu.memory_space<any>>) dst(%56 : memref<256x512xbf16, #tpu.memory_space<vmem>>)
    %59 = vector.extract_strided_slice %22 {offsets = [0, 512], sizes = [16, 256], strides = [1, 1]} : vector<16x1280xbf16> to vector<16x256xbf16>
    %c0_50 = arith.constant 0 : index
    %c0_51 = arith.constant 0 : index
    %c0_52 = arith.constant 0 : index
    %60 = vector.load %arg11[%c0_50, %c0_51, %c0_52] : memref<2x256x512xbf16, #tpu.memory_space<vmem>>, vector<1x256x512xbf16>
    %61 = vector.shape_cast %60 : vector<1x256x512xbf16> to vector<256x512xbf16>
    %cst_53 = arith.constant dense<0.000000e+00> : vector<16x512xf32>
    %62 = tpu.matmul %59, %61, %cst_53 {dimension_numbers = #tpu.dot_dimension_numbers<[1], [0], [0], [1], [0, 0, 1, 1], [], []>} : vector<16x256xbf16>, vector<256x512xbf16>, vector<16x512xf32> -> vector<16x512xf32>
    %63 = arith.addf %48, %62 : vector<16x512xf32>
    %c0_i32_54 = arith.constant 0 : i32
    %c0_i32_55 = arith.constant 0 : i32
    %c1024_i32 = arith.constant 1024 : i32
    %c0_i32_56 = arith.constant 0 : i32
    %64 = tpu.memref_slice %arg2[%c1024_i32, %c0_i32_56] : memref<1280x512xbf16, #tpu.memory_space<any>> -> memref<256x512xbf16, #tpu.memory_space<any>>
    %c0_i32_57 = arith.constant 0 : i32
    %c0_i32_58 = arith.constant 0 : i32
    %65 = tpu.memref_slice %arg11[%c0_i32_54, %c0_i32_57, %c0_i32_58] : memref<2x256x512xbf16, #tpu.memory_space<vmem>> -> memref<1x256x512xbf16, #tpu.memory_space<vmem>>
    %66 = tpu.memref_squeeze %65 : memref<1x256x512xbf16, #tpu.memory_space<vmem>> -> memref<256x512xbf16, #tpu.memory_space<vmem>>
    %67 = tpu.memref_slice %arg16[%c0_i32_55] : memref<2x!tpu.dma_semaphore, #tpu.memory_space<semaphore_mem>> -> memref<1x!tpu.dma_semaphore, #tpu.memory_space<semaphore_mem>>
    %68 = tpu.memref_squeeze %67 : memref<1x!tpu.dma_semaphore, #tpu.memory_space<semaphore_mem>> -> memref<!tpu.dma_semaphore, #tpu.memory_space<semaphore_mem>>
    tpu.enqueue_dma source(%64 : memref<256x512xbf16, #tpu.memory_space<any>>) target(%66 : memref<256x512xbf16, #tpu.memory_space<vmem>>) target_semaphore(%68 : memref<!tpu.dma_semaphore, #tpu.memory_space<semaphore_mem>>)
    %c1_i32_59 = arith.constant 1 : i32
    %c1_i32_60 = arith.constant 1 : i32
    %c768_i32_61 = arith.constant 768 : i32
    %c0_i32_62 = arith.constant 0 : i32
    %69 = tpu.memref_slice %arg2[%c768_i32_61, %c0_i32_62] : memref<1280x512xbf16, #tpu.memory_space<any>> -> memref<256x512xbf16, #tpu.memory_space<any>>
    %c0_i32_63 = arith.constant 0 : i32
    %c0_i32_64 = arith.constant 0 : i32
    %70 = tpu.memref_slice %arg11[%c1_i32_59, %c0_i32_63, %c0_i32_64] : memref<2x256x512xbf16, #tpu.memory_space<vmem>> -> memref<1x256x512xbf16, #tpu.memory_space<vmem>>
    %71 = tpu.memref_squeeze %70 : memref<1x256x512xbf16, #tpu.memory_space<vmem>> -> memref<256x512xbf16, #tpu.memory_space<vmem>>
    %72 = tpu.memref_slice %arg16[%c1_i32_60] : memref<2x!tpu.dma_semaphore, #tpu.memory_space<semaphore_mem>> -> memref<1x!tpu.dma_semaphore, #tpu.memory_space<semaphore_mem>>
    %73 = tpu.memref_squeeze %72 : memref<1x!tpu.dma_semaphore, #tpu.memory_space<semaphore_mem>> -> memref<!tpu.dma_semaphore, #tpu.memory_space<semaphore_mem>>
    tpu.wait_dma2 semaphore(%73 : memref<!tpu.dma_semaphore, #tpu.memory_space<semaphore_mem>>) src(%69 : memref<256x512xbf16, #tpu.memory_space<any>>) dst(%71 : memref<256x512xbf16, #tpu.memory_space<vmem>>)
    %74 = vector.extract_strided_slice %22 {offsets = [0, 768], sizes = [16, 256], strides = [1, 1]} : vector<16x1280xbf16> to vector<16x256xbf16>
    %c1_65 = arith.constant 1 : index
    %c0_66 = arith.constant 0 : index
    %c0_67 = arith.constant 0 : index
    %75 = vector.load %arg11[%c1_65, %c0_66, %c0_67] : memref<2x256x512xbf16, #tpu.memory_space<vmem>>, vector<1x256x512xbf16>
    %76 = vector.shape_cast %75 : vector<1x256x512xbf16> to vector<256x512xbf16>
    %cst_68 = arith.constant dense<0.000000e+00> : vector<16x512xf32>
    %77 = tpu.matmul %74, %76, %cst_68 {dimension_numbers = #tpu.dot_dimension_numbers<[1], [0], [0], [1], [0, 0, 1, 1], [], []>} : vector<16x256xbf16>, vector<256x512xbf16>, vector<16x512xf32> -> vector<16x512xf32>
    %78 = arith.addf %63, %77 : vector<16x512xf32>
    %c0_i32_69 = arith.constant 0 : i32
    %c0_i32_70 = arith.constant 0 : i32
    %c1024_i32_71 = arith.constant 1024 : i32
    %c0_i32_72 = arith.constant 0 : i32
    %79 = tpu.memref_slice %arg2[%c1024_i32_71, %c0_i32_72] : memref<1280x512xbf16, #tpu.memory_space<any>> -> memref<256x512xbf16, #tpu.memory_space<any>>
    %c0_i32_73 = arith.constant 0 : i32
    %c0_i32_74 = arith.constant 0 : i32
    %80 = tpu.memref_slice %arg11[%c0_i32_69, %c0_i32_73, %c0_i32_74] : memref<2x256x512xbf16, #tpu.memory_space<vmem>> -> memref<1x256x512xbf16, #tpu.memory_space<vmem>>
    %81 = tpu.memref_squeeze %80 : memref<1x256x512xbf16, #tpu.memory_space<vmem>> -> memref<256x512xbf16, #tpu.memory_space<vmem>>
    %82 = tpu.memref_slice %arg16[%c0_i32_70] : memref<2x!tpu.dma_semaphore, #tpu.memory_space<semaphore_mem>> -> memref<1x!tpu.dma_semaphore, #tpu.memory_space<semaphore_mem>>
    %83 = tpu.memref_squeeze %82 : memref<1x!tpu.dma_semaphore, #tpu.memory_space<semaphore_mem>> -> memref<!tpu.dma_semaphore, #tpu.memory_space<semaphore_mem>>
    tpu.wait_dma2 semaphore(%83 : memref<!tpu.dma_semaphore, #tpu.memory_space<semaphore_mem>>) src(%79 : memref<256x512xbf16, #tpu.memory_space<any>>) dst(%81 : memref<256x512xbf16, #tpu.memory_space<vmem>>)
    %84 = vector.extract_strided_slice %22 {offsets = [0, 1024], sizes = [16, 256], strides = [1, 1]} : vector<16x1280xbf16> to vector<16x256xbf16>
    %c0_75 = arith.constant 0 : index
    %c0_76 = arith.constant 0 : index
    %c0_77 = arith.constant 0 : index
    %85 = vector.load %arg11[%c0_75, %c0_76, %c0_77] : memref<2x256x512xbf16, #tpu.memory_space<vmem>>, vector<1x256x512xbf16>
    %86 = vector.shape_cast %85 : vector<1x256x512xbf16> to vector<256x512xbf16>
    %cst_78 = arith.constant dense<0.000000e+00> : vector<16x512xf32>
    %87 = tpu.matmul %84, %86, %cst_78 {dimension_numbers = #tpu.dot_dimension_numbers<[1], [0], [0], [1], [0, 0, 1, 1], [], []>} : vector<16x256xbf16>, vector<256x512xbf16>, vector<16x512xf32> -> vector<16x512xf32>
    %88 = arith.addf %78, %87 : vector<16x512xf32>
    %89 = arith.truncf %88 : vector<16x512xf32> to vector<16x512xbf16>
    %c0_79 = arith.constant 0 : index
    %c0_80 = arith.constant 0 : index
    %90 = vector.load %arg3[%c0_79, %c0_80] : memref<512x8xbf16, #tpu.memory_space<vmem>>, vector<512x8xbf16>
    %cst_81 = arith.constant dense<0.000000e+00> : vector<16x8xf32>
    %91 = tpu.matmul %89, %90, %cst_81 {dimension_numbers = #tpu.dot_dimension_numbers<[1], [0], [0], [1], [0, 0, 1, 1], [], []>} : vector<16x512xbf16>, vector<512x8xbf16>, vector<16x8xf32> -> vector<16x8xf32>
    %92 = vector.extract_strided_slice %91 {offsets = [0, 0], sizes = [16, 4], strides = [1, 1]} : vector<16x8xf32> to vector<16x4xf32>
    %93 = tpu.transpose %92, [1, 0] : vector<16x4xf32> -> vector<4x16xf32>
    %94 = vector.extract_strided_slice %91 {offsets = [0, 4], sizes = [16, 4], strides = [1, 1]} : vector<16x8xf32> to vector<16x4xf32>
    %95 = vector.extract_strided_slice %89 {offsets = [0, 0], sizes = [16, 128], strides = [1, 1]} : vector<16x512xbf16> to vector<16x128xbf16>
    %96 = vector.extract_strided_slice %93 {offsets = [0, 0], sizes = [1, 16], strides = [1, 1]} : vector<4x16xf32> to vector<1x16xf32>
    %97 = vector.extract_strided_slice %94 {offsets = [0, 0], sizes = [16, 1], strides = [1, 1]} : vector<16x4xf32> to vector<16x1xf32>
    %98 = vector.broadcast %97 : vector<16x1xf32> to vector<16x16xf32>
    %99 = vector.broadcast %96 : vector<1x16xf32> to vector<16x16xf32>
    %100 = arith.addf %98, %99 : vector<16x16xf32>
    %cst_82 = arith.constant 0.000000e+00 : f32
    %101 = vector.broadcast %cst_82 : f32 to vector<16x16xf32>
    %102 = arith.cmpf ogt, %100, %101 : vector<16x16xf32>
    %cst_83 = arith.constant 2.000000e-01 : f32
    %103 = vector.broadcast %cst_83 : f32 to vector<16x16xf32>
    %104 = arith.mulf %103, %100 : vector<16x16xf32>
    %105 = arith.select %102, %100, %104 : vector<16x16xi1>, vector<16x16xf32>
    %cst_84 = arith.constant -1.000000e+30 : f32
    %106 = vector.broadcast %cst_84 : f32 to vector<16x16xf32>
    %107 = arith.select %21, %105, %106 : vector<16x16xi1>, vector<16x16xf32>
    %cst_85 = arith.constant dense<0xFF800000> : vector<16xf32>
    %108 = vector.multi_reduction <maximumf>, %107, %cst_85 [1] : vector<16x16xf32> to vector<16xf32>
    %109 = vector.shape_cast %108 : vector<16xf32> to vector<16x1xf32>
    %110 = vector.broadcast %109 : vector<16x1xf32> to vector<16x16xf32>
    %111 = arith.subf %107, %110 : vector<16x16xf32>
    %112 = math.exp %111 : vector<16x16xf32>
    %cst_86 = arith.constant 0.000000e+00 : f32
    %113 = vector.broadcast %cst_86 : f32 to vector<16x16xf32>
    %114 = arith.select %21, %112, %113 : vector<16x16xi1>, vector<16x16xf32>
    %cst_87 = arith.constant dense<0.000000e+00> : vector<16xf32>
    %115 = vector.multi_reduction <add>, %114, %cst_87 [1] : vector<16x16xf32> to vector<16xf32>
    %116 = vector.shape_cast %115 : vector<16xf32> to vector<16x1xf32>
    %117 = tpu.reciprocal %116 {approx = true} : vector<16x1xf32> -> vector<16x1xf32>
    %118 = vector.broadcast %117 : vector<16x1xf32> to vector<16x16xf32>
    %119 = arith.mulf %114, %118 : vector<16x16xf32>
    %120 = arith.truncf %119 : vector<16x16xf32> to vector<16x16xbf16>
    %cst_88 = arith.constant dense<0.000000e+00> : vector<16x128xf32>
    %121 = tpu.matmul %120, %95, %cst_88 {dimension_numbers = #tpu.dot_dimension_numbers<[1], [0], [0], [1], [0, 0, 1, 1], [], []>} : vector<16x16xbf16>, vector<16x128xbf16>, vector<16x128xf32> -> vector<16x128xf32>
    %c0_89 = arith.constant 0 : index
    %c0_90 = arith.constant 0 : index
    %122 = vector.load %arg14[%c0_89, %c0_90] : memref<16x512xf32, #tpu.memory_space<vmem>>, vector<16x128xf32>
    tpu.vector_store %arg14[%c0_89, %c0_90], %121 {strides = array<i32>} : memref<16x512xf32, #tpu.memory_space<vmem>>, vector<16x128xf32>,
    %123 = vector.extract_strided_slice %89 {offsets = [0, 128], sizes = [16, 128], strides = [1, 1]} : vector<16x512xbf16> to vector<16x128xbf16>
    %124 = vector.extract_strided_slice %93 {offsets = [1, 0], sizes = [1, 16], strides = [1, 1]} : vector<4x16xf32> to vector<1x16xf32>
    %125 = vector.extract_strided_slice %94 {offsets = [0, 1], sizes = [16, 1], strides = [1, 1]} : vector<16x4xf32> to vector<16x1xf32>
    %126 = vector.broadcast %125 : vector<16x1xf32> to vector<16x16xf32>
    %127 = vector.broadcast %124 : vector<1x16xf32> to vector<16x16xf32>
    %128 = arith.addf %126, %127 : vector<16x16xf32>
    %cst_91 = arith.constant 0.000000e+00 : f32
    %129 = vector.broadcast %cst_91 : f32 to vector<16x16xf32>
    %130 = arith.cmpf ogt, %128, %129 : vector<16x16xf32>
    %cst_92 = arith.constant 2.000000e-01 : f32
    %131 = vector.broadcast %cst_92 : f32 to vector<16x16xf32>
    %132 = arith.mulf %131, %128 : vector<16x16xf32>
    %133 = arith.select %130, %128, %132 : vector<16x16xi1>, vector<16x16xf32>
    %cst_93 = arith.constant -1.000000e+30 : f32
    %134 = vector.broadcast %cst_93 : f32 to vector<16x16xf32>
    %135 = arith.select %21, %133, %134 : vector<16x16xi1>, vector<16x16xf32>
    %cst_94 = arith.constant dense<0xFF800000> : vector<16xf32>
    %136 = vector.multi_reduction <maximumf>, %135, %cst_94 [1] : vector<16x16xf32> to vector<16xf32>
    %137 = vector.shape_cast %136 : vector<16xf32> to vector<16x1xf32>
    %138 = vector.broadcast %137 : vector<16x1xf32> to vector<16x16xf32>
    %139 = arith.subf %135, %138 : vector<16x16xf32>
    %140 = math.exp %139 : vector<16x16xf32>
    %cst_95 = arith.constant 0.000000e+00 : f32
    %141 = vector.broadcast %cst_95 : f32 to vector<16x16xf32>
    %142 = arith.select %21, %140, %141 : vector<16x16xi1>, vector<16x16xf32>
    %cst_96 = arith.constant dense<0.000000e+00> : vector<16xf32>
    %143 = vector.multi_reduction <add>, %142, %cst_96 [1] : vector<16x16xf32> to vector<16xf32>
    %144 = vector.shape_cast %143 : vector<16xf32> to vector<16x1xf32>
    %145 = tpu.reciprocal %144 {approx = true} : vector<16x1xf32> -> vector<16x1xf32>
    %146 = vector.broadcast %145 : vector<16x1xf32> to vector<16x16xf32>
    %147 = arith.mulf %142, %146 : vector<16x16xf32>
    %148 = arith.truncf %147 : vector<16x16xf32> to vector<16x16xbf16>
    %cst_97 = arith.constant dense<0.000000e+00> : vector<16x128xf32>
    %149 = tpu.matmul %148, %123, %cst_97 {dimension_numbers = #tpu.dot_dimension_numbers<[1], [0], [0], [1], [0, 0, 1, 1], [], []>} : vector<16x16xbf16>, vector<16x128xbf16>, vector<16x128xf32> -> vector<16x128xf32>
    %c0_98 = arith.constant 0 : index
    %c128 = arith.constant 128 : index
    %150 = vector.load %arg14[%c0_98, %c128] : memref<16x512xf32, #tpu.memory_space<vmem>>, vector<16x128xf32>
    tpu.vector_store %arg14[%c0_98, %c128], %149 {strides = array<i32>} : memref<16x512xf32, #tpu.memory_space<vmem>>, vector<16x128xf32>,
    %151 = vector.extract_strided_slice %89 {offsets = [0, 256], sizes = [16, 128], strides = [1, 1]} : vector<16x512xbf16> to vector<16x128xbf16>
    %152 = vector.extract_strided_slice %93 {offsets = [2, 0], sizes = [1, 16], strides = [1, 1]} : vector<4x16xf32> to vector<1x16xf32>
    %153 = vector.extract_strided_slice %94 {offsets = [0, 2], sizes = [16, 1], strides = [1, 1]} : vector<16x4xf32> to vector<16x1xf32>
    %154 = vector.broadcast %153 : vector<16x1xf32> to vector<16x16xf32>
    %155 = vector.broadcast %152 : vector<1x16xf32> to vector<16x16xf32>
    %156 = arith.addf %154, %155 : vector<16x16xf32>
    %cst_99 = arith.constant 0.000000e+00 : f32
    %157 = vector.broadcast %cst_99 : f32 to vector<16x16xf32>
    %158 = arith.cmpf ogt, %156, %157 : vector<16x16xf32>
    %cst_100 = arith.constant 2.000000e-01 : f32
    %159 = vector.broadcast %cst_100 : f32 to vector<16x16xf32>
    %160 = arith.mulf %159, %156 : vector<16x16xf32>
    %161 = arith.select %158, %156, %160 : vector<16x16xi1>, vector<16x16xf32>
    %cst_101 = arith.constant -1.000000e+30 : f32
    %162 = vector.broadcast %cst_101 : f32 to vector<16x16xf32>
    %163 = arith.select %21, %161, %162 : vector<16x16xi1>, vector<16x16xf32>
    %cst_102 = arith.constant dense<0xFF800000> : vector<16xf32>
    %164 = vector.multi_reduction <maximumf>, %163, %cst_102 [1] : vector<16x16xf32> to vector<16xf32>
    %165 = vector.shape_cast %164 : vector<16xf32> to vector<16x1xf32>
    %166 = vector.broadcast %165 : vector<16x1xf32> to vector<16x16xf32>
    %167 = arith.subf %163, %166 : vector<16x16xf32>
    %168 = math.exp %167 : vector<16x16xf32>
    %cst_103 = arith.constant 0.000000e+00 : f32
    %169 = vector.broadcast %cst_103 : f32 to vector<16x16xf32>
    %170 = arith.select %21, %168, %169 : vector<16x16xi1>, vector<16x16xf32>
    %cst_104 = arith.constant dense<0.000000e+00> : vector<16xf32>
    %171 = vector.multi_reduction <add>, %170, %cst_104 [1] : vector<16x16xf32> to vector<16xf32>
    %172 = vector.shape_cast %171 : vector<16xf32> to vector<16x1xf32>
    %173 = tpu.reciprocal %172 {approx = true} : vector<16x1xf32> -> vector<16x1xf32>
    %174 = vector.broadcast %173 : vector<16x1xf32> to vector<16x16xf32>
    %175 = arith.mulf %170, %174 : vector<16x16xf32>
    %176 = arith.truncf %175 : vector<16x16xf32> to vector<16x16xbf16>
    %cst_105 = arith.constant dense<0.000000e+00> : vector<16x128xf32>
    %177 = tpu.matmul %176, %151, %cst_105 {dimension_numbers = #tpu.dot_dimension_numbers<[1], [0], [0], [1], [0, 0, 1, 1], [], []>} : vector<16x16xbf16>, vector<16x128xbf16>, vector<16x128xf32> -> vector<16x128xf32>
    %c0_106 = arith.constant 0 : index
    %c256 = arith.constant 256 : index
    %178 = vector.load %arg14[%c0_106, %c256] : memref<16x512xf32, #tpu.memory_space<vmem>>, vector<16x128xf32>
    tpu.vector_store %arg14[%c0_106, %c256], %177 {strides = array<i32>} : memref<16x512xf32, #tpu.memory_space<vmem>>, vector<16x128xf32>,
    %179 = vector.extract_strided_slice %89 {offsets = [0, 384], sizes = [16, 128], strides = [1, 1]} : vector<16x512xbf16> to vector<16x128xbf16>
    %180 = vector.extract_strided_slice %93 {offsets = [3, 0], sizes = [1, 16], strides = [1, 1]} : vector<4x16xf32> to vector<1x16xf32>
    %181 = vector.extract_strided_slice %94 {offsets = [0, 3], sizes = [16, 1], strides = [1, 1]} : vector<16x4xf32> to vector<16x1xf32>
    %182 = vector.broadcast %181 : vector<16x1xf32> to vector<16x16xf32>
    %183 = vector.broadcast %180 : vector<1x16xf32> to vector<16x16xf32>
    %184 = arith.addf %182, %183 : vector<16x16xf32>
    %cst_107 = arith.constant 0.000000e+00 : f32
    %185 = vector.broadcast %cst_107 : f32 to vector<16x16xf32>
    %186 = arith.cmpf ogt, %184, %185 : vector<16x16xf32>
    %cst_108 = arith.constant 2.000000e-01 : f32
    %187 = vector.broadcast %cst_108 : f32 to vector<16x16xf32>
    %188 = arith.mulf %187, %184 : vector<16x16xf32>
    %189 = arith.select %186, %184, %188 : vector<16x16xi1>, vector<16x16xf32>
    %cst_109 = arith.constant -1.000000e+30 : f32
    %190 = vector.broadcast %cst_109 : f32 to vector<16x16xf32>
    %191 = arith.select %21, %189, %190 : vector<16x16xi1>, vector<16x16xf32>
    %cst_110 = arith.constant dense<0xFF800000> : vector<16xf32>
    %192 = vector.multi_reduction <maximumf>, %191, %cst_110 [1] : vector<16x16xf32> to vector<16xf32>
    %193 = vector.shape_cast %192 : vector<16xf32> to vector<16x1xf32>
    %194 = vector.broadcast %193 : vector<16x1xf32> to vector<16x16xf32>
    %195 = arith.subf %191, %194 : vector<16x16xf32>
    %196 = math.exp %195 : vector<16x16xf32>
    %cst_111 = arith.constant 0.000000e+00 : f32
    %197 = vector.broadcast %cst_111 : f32 to vector<16x16xf32>
    %198 = arith.select %21, %196, %197 : vector<16x16xi1>, vector<16x16xf32>
    %cst_112 = arith.constant dense<0.000000e+00> : vector<16xf32>
    %199 = vector.multi_reduction <add>, %198, %cst_112 [1] : vector<16x16xf32> to vector<16xf32>
    %200 = vector.shape_cast %199 : vector<16xf32> to vector<16x1xf32>
    %201 = tpu.reciprocal %200 {approx = true} : vector<16x1xf32> -> vector<16x1xf32>
    %202 = vector.broadcast %201 : vector<16x1xf32> to vector<16x16xf32>
    %203 = arith.mulf %198, %202 : vector<16x16xf32>
    %204 = arith.truncf %203 : vector<16x16xf32> to vector<16x16xbf16>
    %cst_113 = arith.constant dense<0.000000e+00> : vector<16x128xf32>
    %205 = tpu.matmul %204, %179, %cst_113 {dimension_numbers = #tpu.dot_dimension_numbers<[1], [0], [0], [1], [0, 0, 1, 1], [], []>} : vector<16x16xbf16>, vector<16x128xbf16>, vector<16x128xf32> -> vector<16x128xf32>
    %c0_114 = arith.constant 0 : index
    %c384 = arith.constant 384 : index
    %206 = vector.load %arg14[%c0_114, %c384] : memref<16x512xf32, #tpu.memory_space<vmem>>, vector<16x128xf32>
    tpu.vector_store %arg14[%c0_114, %c384], %205 {strides = array<i32>} : memref<16x512xf32, #tpu.memory_space<vmem>>, vector<16x128xf32>,
    %c0_115 = arith.constant 0 : index
    %c0_116 = arith.constant 0 : index
    %207 = vector.load %arg14[%c0_115, %c0_116] : memref<16x512xf32, #tpu.memory_space<vmem>>, vector<16x512xf32>
    %c0_117 = arith.constant 0 : index
    %c0_118 = arith.constant 0 : index
    %208 = vector.load %arg4[%c0_117, %c0_118] : memref<1x512xf32, #tpu.memory_space<vmem>>, vector<1x512xf32>
    %209 = vector.broadcast %208 : vector<1x512xf32> to vector<16x512xf32>
    %210 = arith.addf %207, %209 : vector<16x512xf32>
    %cst_119 = arith.constant 0.000000e+00 : f32
    %211 = vector.broadcast %cst_119 : f32 to vector<16x512xf32>
    %212 = arith.cmpf ogt, %210, %211 : vector<16x512xf32>
    %213 = math.exp %210 : vector<16x512xf32>
    %cst_120 = arith.constant 1.000000e+00 : f32
    %214 = vector.broadcast %cst_120 : f32 to vector<16x512xf32>
    %215 = arith.subf %213, %214 : vector<16x512xf32>
    %216 = arith.select %212, %210, %215 : vector<16x512xi1>, vector<16x512xf32>
    %217 = arith.truncf %216 : vector<16x512xf32> to vector<16x512xbf16>
    %c0_i32_121 = arith.constant 0 : i32
    %218 = tpu.memref_slice %arg17[%c0_i32_121] : memref<2x!tpu.dma_semaphore, #tpu.memory_space<semaphore_mem>> -> memref<1x!tpu.dma_semaphore, #tpu.memory_space<semaphore_mem>>
    %219 = tpu.memref_squeeze %218 : memref<1x!tpu.dma_semaphore, #tpu.memory_space<semaphore_mem>> -> memref<!tpu.dma_semaphore, #tpu.memory_space<semaphore_mem>>
    tpu.wait_dma2 semaphore(%219 : memref<!tpu.dma_semaphore, #tpu.memory_space<semaphore_mem>>) src(%arg5 : memref<512x512xbf16, #tpu.memory_space<any>>) dst(%arg12 : memref<512x512xbf16, #tpu.memory_space<vmem>>)
    %c0_122 = arith.constant 0 : index
    %c0_123 = arith.constant 0 : index
    %220 = vector.load %arg12[%c0_122, %c0_123] : memref<512x512xbf16, #tpu.memory_space<vmem>>, vector<512x512xbf16>
    %cst_124 = arith.constant dense<0.000000e+00> : vector<16x512xf32>
    %221 = tpu.matmul %217, %220, %cst_124 {dimension_numbers = #tpu.dot_dimension_numbers<[1], [0], [0], [1], [0, 0, 1, 1], [], []>} : vector<16x512xbf16>, vector<512x512xbf16>, vector<16x512xf32> -> vector<16x512xf32>
    %222 = arith.truncf %221 : vector<16x512xf32> to vector<16x512xbf16>
    %c0_125 = arith.constant 0 : index
    %c0_126 = arith.constant 0 : index
    %223 = vector.load %arg6[%c0_125, %c0_126] : memref<512x8xbf16, #tpu.memory_space<vmem>>, vector<512x8xbf16>
    %cst_127 = arith.constant dense<0.000000e+00> : vector<16x8xf32>
    %224 = tpu.matmul %222, %223, %cst_127 {dimension_numbers = #tpu.dot_dimension_numbers<[1], [0], [0], [1], [0, 0, 1, 1], [], []>} : vector<16x512xbf16>, vector<512x8xbf16>, vector<16x8xf32> -> vector<16x8xf32>
    %225 = vector.extract_strided_slice %224 {offsets = [0, 0], sizes = [16, 4], strides = [1, 1]} : vector<16x8xf32> to vector<16x4xf32>
    %226 = tpu.transpose %225, [1, 0] : vector<16x4xf32> -> vector<4x16xf32>
    %227 = vector.extract_strided_slice %224 {offsets = [0, 4], sizes = [16, 4], strides = [1, 1]} : vector<16x8xf32> to vector<16x4xf32>
    %228 = vector.extract_strided_slice %222 {offsets = [0, 0], sizes = [16, 128], strides = [1, 1]} : vector<16x512xbf16> to vector<16x128xbf16>
    %229 = vector.extract_strided_slice %226 {offsets = [0, 0], sizes = [1, 16], strides = [1, 1]} : vector<4x16xf32> to vector<1x16xf32>
    %230 = vector.extract_strided_slice %227 {offsets = [0, 0], sizes = [16, 1], strides = [1, 1]} : vector<16x4xf32> to vector<16x1xf32>
    %231 = vector.broadcast %230 : vector<16x1xf32> to vector<16x16xf32>
    %232 = vector.broadcast %229 : vector<1x16xf32> to vector<16x16xf32>
    %233 = arith.addf %231, %232 : vector<16x16xf32>
    %cst_128 = arith.constant 0.000000e+00 : f32
    %234 = vector.broadcast %cst_128 : f32 to vector<16x16xf32>
    %235 = arith.cmpf ogt, %233, %234 : vector<16x16xf32>
    %cst_129 = arith.constant 2.000000e-01 : f32
    %236 = vector.broadcast %cst_129 : f32 to vector<16x16xf32>
    %237 = arith.mulf %236, %233 : vector<16x16xf32>
    %238 = arith.select %235, %233, %237 : vector<16x16xi1>, vector<16x16xf32>
    %cst_130 = arith.constant -1.000000e+30 : f32
    %239 = vector.broadcast %cst_130 : f32 to vector<16x16xf32>
    %240 = arith.select %21, %238, %239 : vector<16x16xi1>, vector<16x16xf32>
    %cst_131 = arith.constant dense<0xFF800000> : vector<16xf32>
    %241 = vector.multi_reduction <maximumf>, %240, %cst_131 [1] : vector<16x16xf32> to vector<16xf32>
    %242 = vector.shape_cast %241 : vector<16xf32> to vector<16x1xf32>
    %243 = vector.broadcast %242 : vector<16x1xf32> to vector<16x16xf32>
    %244 = arith.subf %240, %243 : vector<16x16xf32>
    %245 = math.exp %244 : vector<16x16xf32>
    %cst_132 = arith.constant 0.000000e+00 : f32
    %246 = vector.broadcast %cst_132 : f32 to vector<16x16xf32>
    %247 = arith.select %21, %245, %246 : vector<16x16xi1>, vector<16x16xf32>
    %cst_133 = arith.constant dense<0.000000e+00> : vector<16xf32>
    %248 = vector.multi_reduction <add>, %247, %cst_133 [1] : vector<16x16xf32> to vector<16xf32>
    %249 = vector.shape_cast %248 : vector<16xf32> to vector<16x1xf32>
    %250 = tpu.reciprocal %249 {approx = true} : vector<16x1xf32> -> vector<16x1xf32>
    %251 = vector.broadcast %250 : vector<16x1xf32> to vector<16x16xf32>
    %252 = arith.mulf %247, %251 : vector<16x16xf32>
    %253 = arith.truncf %252 : vector<16x16xf32> to vector<16x16xbf16>
    %cst_134 = arith.constant dense<0.000000e+00> : vector<16x128xf32>
    %254 = tpu.matmul %253, %228, %cst_134 {dimension_numbers = #tpu.dot_dimension_numbers<[1], [0], [0], [1], [0, 0, 1, 1], [], []>} : vector<16x16xbf16>, vector<16x128xbf16>, vector<16x128xf32> -> vector<16x128xf32>
    %c0_135 = arith.constant 0 : index
    %c0_136 = arith.constant 0 : index
    %255 = vector.load %arg15[%c0_135, %c0_136] : memref<16x512xf32, #tpu.memory_space<vmem>>, vector<16x128xf32>
    tpu.vector_store %arg15[%c0_135, %c0_136], %254 {strides = array<i32>} : memref<16x512xf32, #tpu.memory_space<vmem>>, vector<16x128xf32>,
    %256 = vector.extract_strided_slice %222 {offsets = [0, 128], sizes = [16, 128], strides = [1, 1]} : vector<16x512xbf16> to vector<16x128xbf16>
    %257 = vector.extract_strided_slice %226 {offsets = [1, 0], sizes = [1, 16], strides = [1, 1]} : vector<4x16xf32> to vector<1x16xf32>
    %258 = vector.extract_strided_slice %227 {offsets = [0, 1], sizes = [16, 1], strides = [1, 1]} : vector<16x4xf32> to vector<16x1xf32>
    %259 = vector.broadcast %258 : vector<16x1xf32> to vector<16x16xf32>
    %260 = vector.broadcast %257 : vector<1x16xf32> to vector<16x16xf32>
    %261 = arith.addf %259, %260 : vector<16x16xf32>
    %cst_137 = arith.constant 0.000000e+00 : f32
    %262 = vector.broadcast %cst_137 : f32 to vector<16x16xf32>
    %263 = arith.cmpf ogt, %261, %262 : vector<16x16xf32>
    %cst_138 = arith.constant 2.000000e-01 : f32
    %264 = vector.broadcast %cst_138 : f32 to vector<16x16xf32>
    %265 = arith.mulf %264, %261 : vector<16x16xf32>
    %266 = arith.select %263, %261, %265 : vector<16x16xi1>, vector<16x16xf32>
    %cst_139 = arith.constant -1.000000e+30 : f32
    %267 = vector.broadcast %cst_139 : f32 to vector<16x16xf32>
    %268 = arith.select %21, %266, %267 : vector<16x16xi1>, vector<16x16xf32>
    %cst_140 = arith.constant dense<0xFF800000> : vector<16xf32>
    %269 = vector.multi_reduction <maximumf>, %268, %cst_140 [1] : vector<16x16xf32> to vector<16xf32>
    %270 = vector.shape_cast %269 : vector<16xf32> to vector<16x1xf32>
    %271 = vector.broadcast %270 : vector<16x1xf32> to vector<16x16xf32>
    %272 = arith.subf %268, %271 : vector<16x16xf32>
    %273 = math.exp %272 : vector<16x16xf32>
    %cst_141 = arith.constant 0.000000e+00 : f32
    %274 = vector.broadcast %cst_141 : f32 to vector<16x16xf32>
    %275 = arith.select %21, %273, %274 : vector<16x16xi1>, vector<16x16xf32>
    %cst_142 = arith.constant dense<0.000000e+00> : vector<16xf32>
    %276 = vector.multi_reduction <add>, %275, %cst_142 [1] : vector<16x16xf32> to vector<16xf32>
    %277 = vector.shape_cast %276 : vector<16xf32> to vector<16x1xf32>
    %278 = tpu.reciprocal %277 {approx = true} : vector<16x1xf32> -> vector<16x1xf32>
    %279 = vector.broadcast %278 : vector<16x1xf32> to vector<16x16xf32>
    %280 = arith.mulf %275, %279 : vector<16x16xf32>
    %281 = arith.truncf %280 : vector<16x16xf32> to vector<16x16xbf16>
    %cst_143 = arith.constant dense<0.000000e+00> : vector<16x128xf32>
    %282 = tpu.matmul %281, %256, %cst_143 {dimension_numbers = #tpu.dot_dimension_numbers<[1], [0], [0], [1], [0, 0, 1, 1], [], []>} : vector<16x16xbf16>, vector<16x128xbf16>, vector<16x128xf32> -> vector<16x128xf32>
    %c0_144 = arith.constant 0 : index
    %c128_145 = arith.constant 128 : index
    %283 = vector.load %arg15[%c0_144, %c128_145] : memref<16x512xf32, #tpu.memory_space<vmem>>, vector<16x128xf32>
    tpu.vector_store %arg15[%c0_144, %c128_145], %282 {strides = array<i32>} : memref<16x512xf32, #tpu.memory_space<vmem>>, vector<16x128xf32>,
    %284 = vector.extract_strided_slice %222 {offsets = [0, 256], sizes = [16, 128], strides = [1, 1]} : vector<16x512xbf16> to vector<16x128xbf16>
    %285 = vector.extract_strided_slice %226 {offsets = [2, 0], sizes = [1, 16], strides = [1, 1]} : vector<4x16xf32> to vector<1x16xf32>
    %286 = vector.extract_strided_slice %227 {offsets = [0, 2], sizes = [16, 1], strides = [1, 1]} : vector<16x4xf32> to vector<16x1xf32>
    %287 = vector.broadcast %286 : vector<16x1xf32> to vector<16x16xf32>
    %288 = vector.broadcast %285 : vector<1x16xf32> to vector<16x16xf32>
    %289 = arith.addf %287, %288 : vector<16x16xf32>
    %cst_146 = arith.constant 0.000000e+00 : f32
    %290 = vector.broadcast %cst_146 : f32 to vector<16x16xf32>
    %291 = arith.cmpf ogt, %289, %290 : vector<16x16xf32>
    %cst_147 = arith.constant 2.000000e-01 : f32
    %292 = vector.broadcast %cst_147 : f32 to vector<16x16xf32>
    %293 = arith.mulf %292, %289 : vector<16x16xf32>
    %294 = arith.select %291, %289, %293 : vector<16x16xi1>, vector<16x16xf32>
    %cst_148 = arith.constant -1.000000e+30 : f32
    %295 = vector.broadcast %cst_148 : f32 to vector<16x16xf32>
    %296 = arith.select %21, %294, %295 : vector<16x16xi1>, vector<16x16xf32>
    %cst_149 = arith.constant dense<0xFF800000> : vector<16xf32>
    %297 = vector.multi_reduction <maximumf>, %296, %cst_149 [1] : vector<16x16xf32> to vector<16xf32>
    %298 = vector.shape_cast %297 : vector<16xf32> to vector<16x1xf32>
    %299 = vector.broadcast %298 : vector<16x1xf32> to vector<16x16xf32>
    %300 = arith.subf %296, %299 : vector<16x16xf32>
    %301 = math.exp %300 : vector<16x16xf32>
    %cst_150 = arith.constant 0.000000e+00 : f32
    %302 = vector.broadcast %cst_150 : f32 to vector<16x16xf32>
    %303 = arith.select %21, %301, %302 : vector<16x16xi1>, vector<16x16xf32>
    %cst_151 = arith.constant dense<0.000000e+00> : vector<16xf32>
    %304 = vector.multi_reduction <add>, %303, %cst_151 [1] : vector<16x16xf32> to vector<16xf32>
    %305 = vector.shape_cast %304 : vector<16xf32> to vector<16x1xf32>
    %306 = tpu.reciprocal %305 {approx = true} : vector<16x1xf32> -> vector<16x1xf32>
    %307 = vector.broadcast %306 : vector<16x1xf32> to vector<16x16xf32>
    %308 = arith.mulf %303, %307 : vector<16x16xf32>
    %309 = arith.truncf %308 : vector<16x16xf32> to vector<16x16xbf16>
    %cst_152 = arith.constant dense<0.000000e+00> : vector<16x128xf32>
    %310 = tpu.matmul %309, %284, %cst_152 {dimension_numbers = #tpu.dot_dimension_numbers<[1], [0], [0], [1], [0, 0, 1, 1], [], []>} : vector<16x16xbf16>, vector<16x128xbf16>, vector<16x128xf32> -> vector<16x128xf32>
    %c0_153 = arith.constant 0 : index
    %c256_154 = arith.constant 256 : index
    %311 = vector.load %arg15[%c0_153, %c256_154] : memref<16x512xf32, #tpu.memory_space<vmem>>, vector<16x128xf32>
    tpu.vector_store %arg15[%c0_153, %c256_154], %310 {strides = array<i32>} : memref<16x512xf32, #tpu.memory_space<vmem>>, vector<16x128xf32>,
    %312 = vector.extract_strided_slice %222 {offsets = [0, 384], sizes = [16, 128], strides = [1, 1]} : vector<16x512xbf16> to vector<16x128xbf16>
    %313 = vector.extract_strided_slice %226 {offsets = [3, 0], sizes = [1, 16], strides = [1, 1]} : vector<4x16xf32> to vector<1x16xf32>
    %314 = vector.extract_strided_slice %227 {offsets = [0, 3], sizes = [16, 1], strides = [1, 1]} : vector<16x4xf32> to vector<16x1xf32>
    %315 = vector.broadcast %314 : vector<16x1xf32> to vector<16x16xf32>
    %316 = vector.broadcast %313 : vector<1x16xf32> to vector<16x16xf32>
    %317 = arith.addf %315, %316 : vector<16x16xf32>
    %cst_155 = arith.constant 0.000000e+00 : f32
    %318 = vector.broadcast %cst_155 : f32 to vector<16x16xf32>
    %319 = arith.cmpf ogt, %317, %318 : vector<16x16xf32>
    %cst_156 = arith.constant 2.000000e-01 : f32
    %320 = vector.broadcast %cst_156 : f32 to vector<16x16xf32>
    %321 = arith.mulf %320, %317 : vector<16x16xf32>
    %322 = arith.select %319, %317, %321 : vector<16x16xi1>, vector<16x16xf32>
    %cst_157 = arith.constant -1.000000e+30 : f32
    %323 = vector.broadcast %cst_157 : f32 to vector<16x16xf32>
    %324 = arith.select %21, %322, %323 : vector<16x16xi1>, vector<16x16xf32>
    %cst_158 = arith.constant dense<0xFF800000> : vector<16xf32>
    %325 = vector.multi_reduction <maximumf>, %324, %cst_158 [1] : vector<16x16xf32> to vector<16xf32>
    %326 = vector.shape_cast %325 : vector<16xf32> to vector<16x1xf32>
    %327 = vector.broadcast %326 : vector<16x1xf32> to vector<16x16xf32>
    %328 = arith.subf %324, %327 : vector<16x16xf32>
    %329 = math.exp %328 : vector<16x16xf32>
    %cst_159 = arith.constant 0.000000e+00 : f32
    %330 = vector.broadcast %cst_159 : f32 to vector<16x16xf32>
    %331 = arith.select %21, %329, %330 : vector<16x16xi1>, vector<16x16xf32>
    %cst_160 = arith.constant dense<0.000000e+00> : vector<16xf32>
    %332 = vector.multi_reduction <add>, %331, %cst_160 [1] : vector<16x16xf32> to vector<16xf32>
    %333 = vector.shape_cast %332 : vector<16xf32> to vector<16x1xf32>
    %334 = tpu.reciprocal %333 {approx = true} : vector<16x1xf32> -> vector<16x1xf32>
    %335 = vector.broadcast %334 : vector<16x1xf32> to vector<16x16xf32>
    %336 = arith.mulf %331, %335 : vector<16x16xf32>
    %337 = arith.truncf %336 : vector<16x16xf32> to vector<16x16xbf16>
    %cst_161 = arith.constant dense<0.000000e+00> : vector<16x128xf32>
    %338 = tpu.matmul %337, %312, %cst_161 {dimension_numbers = #tpu.dot_dimension_numbers<[1], [0], [0], [1], [0, 0, 1, 1], [], []>} : vector<16x16xbf16>, vector<16x128xbf16>, vector<16x128xf32> -> vector<16x128xf32>
    %c0_162 = arith.constant 0 : index
    %c384_163 = arith.constant 384 : index
    %339 = vector.load %arg15[%c0_162, %c384_163] : memref<16x512xf32, #tpu.memory_space<vmem>>, vector<16x128xf32>
    tpu.vector_store %arg15[%c0_162, %c384_163], %338 {strides = array<i32>} : memref<16x512xf32, #tpu.memory_space<vmem>>, vector<16x128xf32>,
    %c0_164 = arith.constant 0 : index
    %c0_165 = arith.constant 0 : index
    %340 = vector.load %arg15[%c0_164, %c0_165] : memref<16x512xf32, #tpu.memory_space<vmem>>, vector<16x512xf32>
    %c0_166 = arith.constant 0 : index
    %c0_167 = arith.constant 0 : index
    %341 = vector.load %arg7[%c0_166, %c0_167] : memref<1x512xf32, #tpu.memory_space<vmem>>, vector<1x512xf32>
    %342 = vector.broadcast %341 : vector<1x512xf32> to vector<16x512xf32>
    %343 = arith.addf %340, %342 : vector<16x512xf32>
    %cst_168 = arith.constant 0.000000e+00 : f32
    %344 = vector.broadcast %cst_168 : f32 to vector<16x512xf32>
    %345 = arith.cmpf ogt, %343, %344 : vector<16x512xf32>
    %346 = math.exp %343 : vector<16x512xf32>
    %cst_169 = arith.constant 1.000000e+00 : f32
    %347 = vector.broadcast %cst_169 : f32 to vector<16x512xf32>
    %348 = arith.subf %346, %347 : vector<16x512xf32>
    %349 = arith.select %345, %343, %348 : vector<16x512xi1>, vector<16x512xf32>
    %350 = arith.truncf %349 : vector<16x512xf32> to vector<16x512xbf16>
    %c1_i32_170 = arith.constant 1 : i32
    %351 = tpu.memref_slice %arg17[%c1_i32_170] : memref<2x!tpu.dma_semaphore, #tpu.memory_space<semaphore_mem>> -> memref<1x!tpu.dma_semaphore, #tpu.memory_space<semaphore_mem>>
    %352 = tpu.memref_squeeze %351 : memref<1x!tpu.dma_semaphore, #tpu.memory_space<semaphore_mem>> -> memref<!tpu.dma_semaphore, #tpu.memory_space<semaphore_mem>>
    tpu.wait_dma2 semaphore(%352 : memref<!tpu.dma_semaphore, #tpu.memory_space<semaphore_mem>>) src(%arg8 : memref<512x64xbf16, #tpu.memory_space<any>>) dst(%arg13 : memref<512x64xbf16, #tpu.memory_space<vmem>>)
    %c0_171 = arith.constant 0 : index
    %c0_172 = arith.constant 0 : index
    %353 = vector.load %arg13[%c0_171, %c0_172] : memref<512x64xbf16, #tpu.memory_space<vmem>>, vector<512x64xbf16>
    %cst_173 = arith.constant dense<0.000000e+00> : vector<16x64xf32>
    %354 = tpu.matmul %350, %353, %cst_173 {dimension_numbers = #tpu.dot_dimension_numbers<[1], [0], [0], [1], [0, 0, 1, 1], [], []>} : vector<16x512xbf16>, vector<512x64xbf16>, vector<16x64xf32> -> vector<16x64xf32>
    %c0_174 = arith.constant 0 : index
    %c0_175 = arith.constant 0 : index
    %355 = vector.load %arg9[%c0_174, %c0_175] : memref<1x64xf32, #tpu.memory_space<vmem>>, vector<1x64xf32>
    %356 = vector.broadcast %355 : vector<1x64xf32> to vector<16x64xf32>
    %357 = arith.addf %354, %356 : vector<16x64xf32>
    %cst_176 = arith.constant 0.000000e+00 : f32
    %358 = vector.broadcast %cst_176 : f32 to vector<16x64xf32>
    %359 = arith.cmpf ogt, %357, %358 : vector<16x64xf32>
    %360 = math.exp %357 : vector<16x64xf32>
    %cst_177 = arith.constant 1.000000e+00 : f32
    %361 = vector.broadcast %cst_177 : f32 to vector<16x64xf32>
    %362 = arith.subf %360, %361 : vector<16x64xf32>
    %363 = arith.select %359, %357, %362 : vector<16x64xi1>, vector<16x64xf32>
    %c0_178 = arith.constant 0 : index
    %c0_179 = arith.constant 0 : index
    %364 = vector.load %arg10[%c0_178, %c0_179] : memref<16x64xf32, #tpu.memory_space<vmem>>, vector<16x64xf32>
    tpu.vector_store %arg10[%c0_178, %c0_179], %363 {strides = array<i32>} : memref<16x64xf32, #tpu.memory_space<vmem>>, vector<16x64xf32>,
    return
  }
}

</mosaic_0001>

<llo_original>
// kernel: net_forward.1
$region0: #{net_forward.1}
  #allocation0 [shape = 'u32[]', space=smem, size = 0x4, offset = 0x4, fixed_abs, tag = 'smem constant byte address 0x4 - core index']
  #allocation1 [shape = 'u32[144,128]{1,0:T(1,128)}', space=vmem, size = 0x12000, scoped, tag = 'internal scratch']
  #allocation2 [shape = 'bf16[2,256,512]{2,1,0:T(16,128)(2,1)}', space=vmem, size = 0x80000, scoped, tag = 'scratch operand']
  #allocation3 [shape = 'bf16[512,512]{1,0:T(16,128)(2,1)}', space=vmem, size = 0x80000, scoped, tag = 'scratch operand']
  #allocation4 [shape = 'bf16[512,64]{1,0:T(16,128)(2,1)}', space=vmem, size = 0x20000, scoped, tag = 'scratch operand']
  #allocation5 [shape = 'f32[16,512]{1,0:T(8,128)}', space=vmem, size = 0x8000, scoped, tag = 'scratch operand']
  #allocation6 [shape = 'f32[16,512]{1,0:T(8,128)}', space=vmem, size = 0x8000, scoped, tag = 'scratch operand']
  #allocation7 [shape = 's32[2]{0}', space=sflag, size = 0x8, scoped, tag = 'scratch operand']
  #allocation8 [shape = 's32[2]{0}', space=sflag, size = 0x8, scoped, tag = 'scratch operand']
  #allocation19 [shape = 's32[]', space=sflag, size = 0x4, offset = 0, fixed_abs, tag = 'sflag constant byte address 0x0 - dummy sync flag']
  #allocation21 [shape = 's32[]', space=sflag, size = 0x4, offset = 0, fixed_abs, tag = 'sflag constant byte address 0x0 - dummy sync flag']
  #allocation23 [shape = 's32[]', space=sflag, size = 0x4, offset = 0, fixed_abs, tag = 'sflag constant byte address 0x0 - dummy sync flag']
  #allocation25 [shape = 's32[]', space=sflag, size = 0x4, offset = 0, fixed_abs, tag = 'sflag constant byte address 0x0 - dummy sync flag']
  #allocation26 [shape = 's32[]', space=sflag, size = 0x4, offset = 0, fixed_abs, tag = 'sflag constant byte address 0x0 - dummy sync flag']
  #allocation28 [shape = 's32[]', space=sflag, size = 0x4, offset = 0, fixed_abs, tag = 'sflag constant byte address 0x0 - dummy sync flag']
  #allocation30 [shape = 's32[]', space=sflag, size = 0x4, offset = 0, fixed_abs, tag = 'sflag constant byte address 0x0 - dummy sync flag']
  %s0 = inlined_call_operand.hbm [shape: f32[16,16], index: 0, kind: input, shape index: {}]
  %s1 = inlined_call_operand.hbm [shape: bf16[16,1280], index: 1, kind: input, shape index: {}]
  %s2 = inlined_call_operand.hbm [shape: bf16[1280,512], index: 2, kind: input, shape index: {}]
  %s3 = inlined_call_operand.vmem [shape: bf16[512,8], index: 3, kind: input, shape index: {}]
  %s4 = inlined_call_operand.hbm [shape: f32[1,512], index: 4, kind: input, shape index: {}]
  %s5 = inlined_call_operand.hbm [shape: bf16[512,512], index: 5, kind: input, shape index: {}]
  %s6 = inlined_call_operand.vmem [shape: bf16[512,8], index: 6, kind: input, shape index: {}]
  %s7 = inlined_call_operand.hbm [shape: f32[1,512], index: 7, kind: input, shape index: {}]
  %s8 = inlined_call_operand.vmem [shape: bf16[512,64], index: 8, kind: input, shape index: {}]
  %s9 = inlined_call_operand.hbm [shape: f32[1,64], index: 9, kind: input, shape index: {}]
  %s10 = inlined_call_operand.hbm [shape: f32[16,64], index: 10, kind: output, shape index: {}]
  %s11 = sld [smem:[#allocation0]]
  $region92: #{net_forward.1} parent=0
    _
  %s13 = ssub.s32 1, %s11
  %s14 = scalar_select 0, %s13, %s11
  $region1: #{net_forward.1} parent=0
    #allocation9 [shape = 'u8[8192]{0}', space=vmem, size = 0x2000, scoped, tag = 'input window, operand 0, single buffered']
    #allocation10 [shape = 's32[1]{0}', space=sflag, size = 0x4, scoped, tag = 'scoped memory for net_forward.1']
    #allocation11 [shape = 's32[1]{0}', space=sflag, size = 0x4, scoped, tag = 'scoped memory for net_forward.1']
    #allocation12 [shape = 'u8[40960]{0}', space=vmem, size = 0xa000, scoped, tag = 'input window, operand 1, single buffered']
    #allocation13 [shape = 's32[1]{0}', space=sflag, size = 0x4, scoped, tag = 'scoped memory for net_forward.1']
    #allocation14 [shape = 'u8[2048]{0}', space=vmem, size = 0x800, scoped, tag = 'input window, operand 4, single buffered']
    #allocation15 [shape = 'u8[2048]{0}', space=vmem, size = 0x800, scoped, tag = 'input window, operand 7, single buffered']
    #allocation16 [shape = 's32[1]{0}', space=sflag, size = 0x4, scoped, tag = 'scoped memory for net_forward.1']
    #allocation17 [shape = 'u8[512]{0}', space=vmem, size = 0x400, scoped, tag = 'input window, operand 9, single buffered']
    #allocation18 [shape = 'u8[8192]{0}', space=vmem, size = 0x2000, scoped, tag = 'output window, operand 0, single buffered']
    #allocation20 [shape = 'u32[9]{0}', space=smem, size = 0x24, scoped, tag = 'DMA stride descriptor']
    #allocation22 [shape = 'u32[9]{0}', space=smem, size = 0x24, scoped, tag = 'DMA stride descriptor']
    #allocation24 [shape = 'u32[9]{0}', space=smem, size = 0x24, scoped, tag = 'DMA stride descriptor']
    #allocation27 [shape = 'u32[9]{0}', space=smem, size = 0x24, scoped, tag = 'DMA stride descriptor']
    #allocation29 [shape = 'u32[9]{0}', space=smem, size = 0x24, scoped, tag = 'DMA stride descriptor']
    #allocation31 [shape = 'u32[9]{0}', space=smem, size = 0x24, scoped, tag = 'DMA stride descriptor']
    %15 = vsyncpa [#allocation10], 0
    %16 = vsyncpa [#allocation13], 0
    %17 = vsyncpa [#allocation16], 0
    %18 = vsyncpa [#allocation11], 0
    // Predicated region
    $region2: #{net_forward.1} parent=1 // pred_check
      _
    $region3: #{net_forward.1} parent=1 // pred_check_branch
      %20 = sbr.rel (0) target = $region5
    $region4: #{net_forward.1} parent=1 // pred_region
      %s22 = ssub.s32 256, 256
      %23 = vsyncadd [#allocation10], %s22
      %s24 = sshll.u32 [#allocation9], 4
      %s25 = int_to_ptr.vmem [resolvable:$true] %s24
      %30 = dma.hbm_to_vmem [thread:$0]  %s0, 256, %s25, [#allocation10], 128, 128, 8
    $region5: #{net_forward.1} parent=1 // pred_fallthru
      _
    // Predicated region
    $region6: #{net_forward.1} parent=1 // pred_check
      _
    $region7: #{net_forward.1} parent=1 // pred_check_branch
      %32 = sbr.rel (0) target = $region9
    $region8: #{net_forward.1} parent=1 // pred_region
      %s34 = ssub.s32 1280, 1280
      %35 = vsyncadd [#allocation13], %s34
      %s36 = sshll.u32 [#allocation12], 4
      %s37 = int_to_ptr.vmem [resolvable:$true] %s36
      %42 = dma.hbm_to_vmem [thread:$0]  %s1, 1280, %s37, [#allocation13], 640, 640, 40
    $region9: #{net_forward.1} parent=1 // pred_fallthru
      _
    // Predicated region
    $region10: #{net_forward.1} parent=1 // pred_check
      _
    $region11: #{net_forward.1} parent=1 // pred_check_branch
      %44 = sbr.rel (0) target = $region13
    $region12: #{net_forward.1} parent=1 // pred_region
      _
    $region13: #{net_forward.1} parent=1 // pred_fallthru
      _
    // Predicated region
    $region14: #{net_forward.1} parent=1 // pred_check
      _
    $region15: #{net_forward.1} parent=1 // pred_check_branch
      %46 = sbr.rel (0) target = $region17
    $region16: #{net_forward.1} parent=1 // pred_region
      %s48 = ssub.s32 64, 64
      %49 = vsyncadd [#allocation13], %s48
      %s51 = sshll.u32 [#allocation14], 4
      %s52 = int_to_ptr.vmem [resolvable:$true] %s51
      %54 = dma.hbm_to_vmem [thread:$0]  %s4, 64, %s52, [#allocation13]
    $region17: #{net_forward.1} parent=1 // pred_fallthru
      _
    // Predicated region
    $region18: #{net_forward.1} parent=1 // pred_check
      _
    $region19: #{net_forward.1} parent=1 // pred_check_branch
      %56 = sbr.rel (0) target = $region21
    $region20: #{net_forward.1} parent=1 // pred_region
      _
    $region21: #{net_forward.1} parent=1 // pred_fallthru
      _
    // Predicated region
    $region22: #{net_forward.1} parent=1 // pred_check
      _
    $region23: #{net_forward.1} parent=1 // pred_check_branch
      %58 = sbr.rel (0) target = $region25
    $region24: #{net_forward.1} parent=1 // pred_region
      %s60 = ssub.s32 64, 64
      %61 = vsyncadd [#allocation16], %s60
      %s63 = sshll.u32 [#allocation15], 4
      %s64 = int_to_ptr.vmem [resolvable:$true] %s63
      %66 = dma.hbm_to_vmem [thread:$0]  %s7, 64, %s64, [#allocation16]
    $region25: #{net_forward.1} parent=1 // pred_fallthru
      _
    // Predicated region
    $region26: #{net_forward.1} parent=1 // pred_check
      _
    $region27: #{net_forward.1} parent=1 // pred_check_branch
      %68 = sbr.rel (0) target = $region29
    $region28: #{net_forward.1} parent=1 // pred_region
      %s70 = ssub.s32 16, 16
      %71 = vsyncadd [#allocation16], %s70
      %s73 = sshll.u32 [#allocation17], 4
      %s74 = int_to_ptr.vmem [resolvable:$true] %s73
      %76 = dma.hbm_to_vmem [thread:$0]  %s9, 16, %s74, [#allocation16]
    $region29: #{net_forward.1} parent=1 // pred_fallthru
      _
    // Predicated region
    $region30: #{net_forward.1} parent=1 // pred_check
      _
    $region31: #{net_forward.1} parent=1 // pred_check_branch
      %78 = sbr.rel (0) target = $region33
    $region32: #{net_forward.1} parent=1 // pred_region
      %79 = dma.done [#allocation10], 256
    $region33: #{net_forward.1} parent=1 // pred_fallthru
      _
    // Predicated region
    $region34: #{net_forward.1} parent=1 // pred_check
      _
    $region35: #{net_forward.1} parent=1 // pred_check_branch
      %81 = sbr.rel (0) target = $region37
    $region36: #{net_forward.1} parent=1 // pred_region
      %82 = dma.done [#allocation13], 1280
    $region37: #{net_forward.1} parent=1 // pred_fallthru
      _
    // Predicated region
    $region38: #{net_forward.1} parent=1 // pred_check
      _
    $region39: #{net_forward.1} parent=1 // pred_check_branch
      %84 = sbr.rel (0) target = $region41
    $region40: #{net_forward.1} parent=1 // pred_region
      %85 = dma.done [#allocation13], 64
    $region41: #{net_forward.1} parent=1 // pred_fallthru
      _
    // Predicated region
    $region42: #{net_forward.1} parent=1 // pred_check
      _
    $region43: #{net_forward.1} parent=1 // pred_check_branch
      %87 = sbr.rel (0) target = $region45
    $region44: #{net_forward.1} parent=1 // pred_region
      %88 = dma.done [#allocation16], 64
    $region45: #{net_forward.1} parent=1 // pred_fallthru
      _
    // Predicated region
    $region46: #{net_forward.1} parent=1 // pred_check
      _
    $region47: #{net_forward.1} parent=1 // pred_check_branch
      %90 = sbr.rel (0) target = $region49
    $region48: #{net_forward.1} parent=1 // pred_region
      %91 = dma.done [#allocation16], 16
    $region49: #{net_forward.1} parent=1 // pred_fallthru
      _
    %s94 = sshll.u32 1, 14
    %s95 = sxor.u32 4294967295, %s94
    %s97 = sld [smem:[#allocation0]]
    %s98 = sadd.s32 2, %s97
    %s100 = sshll.u32 7, 26
    %s101 = sxor.u32 4294967295, %s100
    %s102 = sand.u32 0, %s101
    %s103 = sshll.u32 %s98, 26
    %s104 = sor.u32 %s102, %s103
    %s105 = sshll.u32 [#allocation2], 4
    %s106 = int_to_ptr.vmem [resolvable:$true] %s105
    %109 = sst [smem:[#allocation20]] 512
    %s110 = scalar_lea.smem [#allocation20], 1
    %111 = sst [smem:[%s110]] 512
    %s112 = scalar_lea.smem [#allocation20], 2
    %113 = sst [smem:[%s112]] 4
    %s114 = scalar_lea.smem [#allocation20], 3
    %115 = sst [smem:[%s114]] 64
    %s116 = scalar_lea.smem [#allocation20], 4
    %117 = sst [smem:[%s116]] 128
    %s118 = scalar_lea.smem [#allocation20], 5
    %119 = sst [smem:[%s118]] 2
    %s120 = scalar_lea.smem [#allocation20], 6
    %121 = sst [smem:[%s120]] 256
    %s122 = scalar_lea.smem [#allocation20], 7
    %123 = sst [smem:[%s122]] 64
    %s124 = scalar_lea.smem [#allocation20], 8
    %125 = sst [smem:[%s124]] 4
    %127 = dma.general %s2, 8192, %s106, [#allocation7], [#allocation19], [#allocation20], %s104, 0
    %s128 = scalar_lea.hbm %s2, 8192
    %s129 = scalar_lea.vmem [#allocation2], 512
    %s130 = scalar_lea.sflag [#allocation7], 1
    %s132 = sshll.u32 1, 14
    %s133 = sxor.u32 4294967295, %s132
    %s135 = sadd.s32 2, %s97
    %s137 = sshll.u32 7, 26
    %s138 = sxor.u32 4294967295, %s137
    %s139 = sand.u32 0, %s138
    %s140 = sshll.u32 %s135, 26
    %s141 = sor.u32 %s139, %s140
    %s142 = sshll.u32 %s129, 4
    %s143 = int_to_ptr.vmem [resolvable:$true] %s142
    %146 = sst [smem:[#allocation22]] 512
    %s147 = scalar_lea.smem [#allocation22], 1
    %148 = sst [smem:[%s147]] 512
    %s149 = scalar_lea.smem [#allocation22], 2
    %150 = sst [smem:[%s149]] 4
    %s151 = scalar_lea.smem [#allocation22], 3
    %152 = sst [smem:[%s151]] 64
    %s153 = scalar_lea.smem [#allocation22], 4
    %154 = sst [smem:[%s153]] 128
    %s155 = scalar_lea.smem [#allocation22], 5
    %156 = sst [smem:[%s155]] 2
    %s157 = scalar_lea.smem [#allocation22], 6
    %158 = sst [smem:[%s157]] 256
    %s159 = scalar_lea.smem [#allocation22], 7
    %160 = sst [smem:[%s159]] 64
    %s161 = scalar_lea.smem [#allocation22], 8
    %162 = sst [smem:[%s161]] 4
    %164 = dma.general %s128, 8192, %s143, %s130, [#allocation21], [#allocation22], %s141, 0
    %s166 = sshll.u32 1, 14
    %s167 = sxor.u32 4294967295, %s166
    %s169 = sadd.s32 2, %s97
    %s171 = sshll.u32 7, 26
    %s172 = sxor.u32 4294967295, %s171
    %s173 = sand.u32 0, %s172
    %s174 = sshll.u32 %s169, 26
    %s175 = sor.u32 %s173, %s174
    %s176 = sshll.u32 [#allocation3], 4
    %s177 = int_to_ptr.vmem [resolvable:$true] %s176
    %180 = sst [smem:[#allocation24]] 512
    %s181 = scalar_lea.smem [#allocation24], 1
    %182 = sst [smem:[%s181]] 512
    %s183 = scalar_lea.smem [#allocation24], 2
    %184 = sst [smem:[%s183]] 4
    %s185 = scalar_lea.smem [#allocation24], 3
    %186 = sst [smem:[%s185]] 64
    %s187 = scalar_lea.smem [#allocation24], 4
    %188 = sst [smem:[%s187]] 128
    %s189 = scalar_lea.smem [#allocation24], 5
    %190 = sst [smem:[%s189]] 2
    %s191 = scalar_lea.smem [#allocation24], 6
    %192 = sst [smem:[%s191]] 256
    %s193 = scalar_lea.smem [#allocation24], 7
    %194 = sst [smem:[%s193]] 64
    %s195 = scalar_lea.smem [#allocation24], 8
    %196 = sst [smem:[%s195]] 4
    %198 = dma.general %s5, 16384, %s177, [#allocation8], [#allocation23], [#allocation24], %s175, 0
    %s199 = scalar_lea.sflag [#allocation8], 1
    %p201 = scmp.lt.u32.totalorder 256, 8
    %p202 = pneg %p201
    // Predicated region
    $region50: #{net_forward.1} parent=1 // pred_check
      _
    $region51: #{net_forward.1} parent=1 // pred_check_branch
      %204 = sbr.rel (%p201) target = $region53
    $region52: #{net_forward.1} parent=1 // pred_region
      %s219 = sand.u32 256, 7
      %p220 = scmp.eq.s32.totalorder %s219, 0
      // Predicated region
      $region65: #{net_forward.1} parent=52 // pred_check
        %p221 = pneg %p220
      $region66: #{net_forward.1} parent=52 // pred_check_branch
        %223 = sbr.rel (%p221) target = $region68
      $region67: #{net_forward.1} parent=52 // pred_region
        loop: start=0, step=1, limit=1
        $region69: #{net_forward.1} parent=67 // loop_pre_header
          _
        $region70: #{net_forward.1} parent=67 // loop_header
          %s225 = sphi 0, %s229
          %p226 = scmp.ge.s32.totalorder %s225, 1
          %s230 = sphi %s8, %s8
          %s231 = sphi [#allocation4], [#allocation4]
        $region71: #{net_forward.1} parent=67 // loop_header_branch
          %228 = sbr.rel (%p226) target = $region75
        $region72: #{net_forward.1} parent=67 // loop_body
          %v232 = vld [vmem:[%s230] sm:$0xff]
          %233 = vst [vmem:[%s231] sm:$0xff] %v232
          %v234 = vld [vmem:[%s230 + $0x8] sm:$0xff]
          %235 = vst [vmem:[%s231 + $0x8] sm:$0xff] %v234
          %v236 = vld [vmem:[%s230 + $0x10] sm:$0xff]
          %237 = vst [vmem:[%s231 + $0x10] sm:$0xff] %v236
          %v238 = vld [vmem:[%s230 + $0x18] sm:$0xff]
          %239 = vst [vmem:[%s231 + $0x18] sm:$0xff] %v238
          %v240 = vld [vmem:[%s230 + $0x20] sm:$0xff]
          %241 = vst [vmem:[%s231 + $0x20] sm:$0xff] %v240
          %v242 = vld [vmem:[%s230 + $0x28] sm:$0xff]
          %243 = vst [vmem:[%s231 + $0x28] sm:$0xff] %v242
          %v244 = vld [vmem:[%s230 + $0x30] sm:$0xff]
          %245 = vst [vmem:[%s231 + $0x30] sm:$0xff] %v244
          %v246 = vld [vmem:[%s230 + $0x38] sm:$0xff]
          %247 = vst [vmem:[%s231 + $0x38] sm:$0xff] %v246
          %v248 = vld [vmem:[%s230 + $0x40] sm:$0xff]
          %249 = vst [vmem:[%s231 + $0x40] sm:$0xff] %v248
          %v250 = vld [vmem:[%s230 + $0x48] sm:$0xff]
          %251 = vst [vmem:[%s231 + $0x48] sm:$0xff] %v250
          %v252 = vld [vmem:[%s230 + $0x50] sm:$0xff]
          %253 = vst [vmem:[%s231 + $0x50] sm:$0xff] %v252
          %v254 = vld [vmem:[%s230 + $0x58] sm:$0xff]
          %255 = vst [vmem:[%s231 + $0x58] sm:$0xff] %v254
          %v256 = vld [vmem:[%s230 + $0x60] sm:$0xff]
          %257 = vst [vmem:[%s231 + $0x60] sm:$0xff] %v256
          %v258 = vld [vmem:[%s230 + $0x68] sm:$0xff]
          %259 = vst [vmem:[%s231 + $0x68] sm:$0xff] %v258
          %v260 = vld [vmem:[%s230 + $0x70] sm:$0xff]
          %261 = vst [vmem:[%s231 + $0x70] sm:$0xff] %v260
          %v262 = vld [vmem:[%s230 + $0x78] sm:$0xff]
          %263 = vst [vmem:[%s231 + $0x78] sm:$0xff] %v262
          %v264 = vld [vmem:[%s230 + $0x80] sm:$0xff]
          %265 = vst [vmem:[%s231 + $0x80] sm:$0xff] %v264
          %v266 = vld [vmem:[%s230 + $0x88] sm:$0xff]
          %267 = vst [vmem:[%s231 + $0x88] sm:$0xff] %v266
          %v268 = vld [vmem:[%s230 + $0x90] sm:$0xff]
          %269 = vst [vmem:[%s231 + $0x90] sm:$0xff] %v268
          %v270 = vld [vmem:[%s230 + $0x98] sm:$0xff]
          %271 = vst [vmem:[%s231 + $0x98] sm:$0xff] %v270
          %v272 = vld [vmem:[%s230 + $0xa0] sm:$0xff]
          %273 = vst [vmem:[%s231 + $0xa0] sm:$0xff] %v272
          %v274 = vld [vmem:[%s230 + $0xa8] sm:$0xff]
          %275 = vst [vmem:[%s231 + $0xa8] sm:$0xff] %v274
          %v276 = vld [vmem:[%s230 + $0xb0] sm:$0xff]
          %277 = vst [vmem:[%s231 + $0xb0] sm:$0xff] %v276
          %v278 = vld [vmem:[%s230 + $0xb8] sm:$0xff]
          %279 = vst [vmem:[%s231 + $0xb8] sm:$0xff] %v278
          %v280 = vld [vmem:[%s230 + $0xc0] sm:$0xff]
          %281 = vst [vmem:[%s231 + $0xc0] sm:$0xff] %v280
          %v282 = vld [vmem:[%s230 + $0xc8] sm:$0xff]
          %283 = vst [vmem:[%s231 + $0xc8] sm:$0xff] %v282
          %v284 = vld [vmem:[%s230 + $0xd0] sm:$0xff]
          %285 = vst [vmem:[%s231 + $0xd0] sm:$0xff] %v284
          %v286 = vld [vmem:[%s230 + $0xd8] sm:$0xff]
          %287 = vst [vmem:[%s231 + $0xd8] sm:$0xff] %v286
          %v288 = vld [vmem:[%s230 + $0xe0] sm:$0xff]
          %289 = vst [vmem:[%s231 + $0xe0] sm:$0xff] %v288
          %v290 = vld [vmem:[%s230 + $0xe8] sm:$0xff]
          %291 = vst [vmem:[%s231 + $0xe8] sm:$0xff] %v290
          %v292 = vld [vmem:[%s230 + $0xf0] sm:$0xff]
          %293 = vst [vmem:[%s231 + $0xf0] sm:$0xff] %v292
          %v294 = vld [vmem:[%s230 + $0xf8] sm:$0xff]
          %295 = vst [vmem:[%s231 + $0xf8] sm:$0xff] %v294
        $region73: #{net_forward.1} parent=67 // loop_footer
          %s229 = sadd.s32 1, %s225
        $region74: #{net_forward.1} parent=67 // loop_footer_branch
          %224 = sbr.rel target = $region70
        $region75: #{net_forward.1} parent=67 // loop_exit
          _
      $region68: #{net_forward.1} parent=52 // pred_fallthru
        _
      %p296 = pneg %p220
      // Predicated region
      $region76: #{net_forward.1} parent=52 // pred_check
        _
      $region77: #{net_forward.1} parent=52 // pred_check_branch
        %298 = sbr.rel (%p220) target = $region79
      $region78: #{net_forward.1} parent=52 // pred_region
        %s299 = sand.u32 256, 7
      $region79: #{net_forward.1} parent=52 // pred_fallthru
        _
    $region53: #{net_forward.1} parent=1 // pred_fallthru
      _
    // Predicated region
    $region54: #{net_forward.1} parent=1 // pred_check
      %p205 = pneg %p201
    $region55: #{net_forward.1} parent=1 // pred_check_branch
      %207 = sbr.rel (%p205) target = $region57
    $region56: #{net_forward.1} parent=1 // pred_region
      %s208 = sshllo.u32 0, 256
      loop: start=0, step=1, limit=1
      $region58: #{net_forward.1} parent=56 // loop_pre_header
        _
      $region59: #{net_forward.1} parent=56 // loop_header
        %s210 = sphi 0, %s214
        %p211 = scmp.ge.s32.totalorder %s210, 1
        %s215 = sphi %s8, %s8
        %s216 = sphi [#allocation4], [#allocation4]
      $region60: #{net_forward.1} parent=56 // loop_header_branch
        %213 = sbr.rel (%p211) target = $region64
      $region61: #{net_forward.1} parent=56 // loop_body
        %v217 = vld [vmem:[%s215] sm:%s208]
        %218 = vst [vmem:[%s216] sm:%s208] %v217
      $region62: #{net_forward.1} parent=56 // loop_footer
        %s214 = sadd.s32 1, %s210
      $region63: #{net_forward.1} parent=56 // loop_footer_branch
        %209 = sbr.rel target = $region59
      $region64: #{net_forward.1} parent=56 // loop_exit
        _
    $region57: #{net_forward.1} parent=1 // pred_fallthru
      _
    // Predicated region
    $region80: #{net_forward.1} parent=1 // pred_check
      _
    $region81: #{net_forward.1} parent=1 // pred_check_branch
      %302 = sbr.rel (0) target = $region83
    $region82: #{net_forward.1} parent=1 // pred_region
      %303 = vsyncadd %s199, 4096
    $region83: #{net_forward.1} parent=1 // pred_fallthru
      _
    %v304 = vlaneseq
    %v305 = vshrl.u32 %v304, 7
    %v306 = vadd.s32 %v305, 8
    %v307 = vlaneseq
    %v308 = vand.u32 %v307, 127
    %v309 = vld [vmem:[#allocation9] sm:$0xff]
    %v310 = vld [vmem:[#allocation9 + $0x8] sm:$0xff]
    %311 = vxpose.xlu0.b32.start [1/16] %v309, 128
    %312 = vxpose.xlu0.b32.cont [2/16] %v310, 128
    %313 = vxpose.xlu0.b32.cont [3/16] 0.0, 128
    %314 = vxpose.xlu0.b32.cont [4/16] 0.0, 128
    %315 = vxpose.xlu0.b32.cont [5/16] 0.0, 128
    %316 = vxpose.xlu0.b32.cont [6/16] 0.0, 128
    %317 = vxpose.xlu0.b32.cont [7/16] 0.0, 128
    %318 = vxpose.xlu0.b32.cont [8/16] 0.0, 128
    %319 = vxpose.xlu0.b32.cont [9/16] 0.0, 128
    %320 = vxpose.xlu0.b32.cont [10/16] 0.0, 128
    %321 = vxpose.xlu0.b32.cont [11/16] 0.0, 128
    %322 = vxpose.xlu0.b32.cont [12/16] 0.0, 128
    %323 = vxpose.xlu0.b32.cont [13/16] 0.0, 128
    %324 = vxpose.xlu0.b32.cont [14/16] 0.0, 128
    %325 = vxpose.xlu0.b32.cont [15/16] 0.0, 128
    %326 = vxpose.xlu0.b32.end [16/16] 0.0, 128
    %v327 = vpop.trf.xlu0
    %v328 = vpop.trf.xlu0
    %v329 = vpop.trf.xlu0
    %v330 = vpop.trf.xlu0
    %v331 = vpop.trf.xlu0
    %v332 = vpop.trf.xlu0
    %v333 = vpop.trf.xlu0
    %v334 = vpop.trf.xlu0
    %v335 = vpop.trf.xlu0
    %v336 = vpop.trf.xlu0
    %v337 = vpop.trf.xlu0
    %v338 = vpop.trf.xlu0
    %v339 = vpop.trf.xlu0
    %v340 = vpop.trf.xlu0
    %v341 = vpop.trf.xlu0
    %v342 = vpop.trf.xlu0
    %vm343 = vcmp.gt.f32.partialorder %v327, 0.0
    %vm344 = vcmp.gt.f32.partialorder %v328, 0.0
    %vm345 = vcmp.eq.s32.totalorder %v305, %v308
    %vm346 = vcmp.eq.s32.totalorder %v306, %v308
    %vm347 = vmor %vm343, %vm345
    %vm348 = vmor %vm344, %vm346
    %v349 = vld [vmem:[#allocation12] sm:$0xff]
    %v350 = vld [vmem:[#allocation12 + $0x8] sm:$0xff]
    %v351 = vld [vmem:[#allocation12 + $0x10] sm:$0xff]
    %v352 = vld [vmem:[#allocation12 + $0x18] sm:$0xff]
    %v353 = vld [vmem:[#allocation12 + $0x20] sm:$0xff]
    %v354 = vld [vmem:[#allocation12 + $0x28] sm:$0xff]
    %v355 = vld [vmem:[#allocation12 + $0x30] sm:$0xff]
    %v356 = vld [vmem:[#allocation12 + $0x38] sm:$0xff]
    %v357 = vld [vmem:[#allocation12 + $0x40] sm:$0xff]
    %v358 = vld [vmem:[#allocation12 + $0x48] sm:$0xff]
    %s359 = smul.u32 4, 32
    %s360 = smul.u32 %s359, 4
    %s361 = sshll.u32 %s360, 4
    %362 = dma.done [#allocation7], %s361
    %v363 = vld [vmem:[#allocation2] sm:$0xff]
    %v364 = vld [vmem:[#allocation2 + $0x8] sm:$0xff]
    %v365 = vld [vmem:[#allocation2 + $0x10] sm:$0xff]
    %v366 = vld [vmem:[#allocation2 + $0x18] sm:$0xff]
    %v367 = vld [vmem:[#allocation2 + $0x20] sm:$0xff]
    %v368 = vld [vmem:[#allocation2 + $0x28] sm:$0xff]
    %v369 = vld [vmem:[#allocation2 + $0x30] sm:$0xff]
    %v370 = vld [vmem:[#allocation2 + $0x38] sm:$0xff]
    %v371 = vld [vmem:[#allocation2 + $0x40] sm:$0xff]
    %v372 = vld [vmem:[#allocation2 + $0x48] sm:$0xff]
    %v373 = vld [vmem:[#allocation2 + $0x50] sm:$0xff]
    %v374 = vld [vmem:[#allocation2 + $0x58] sm:$0xff]
    %v375 = vld [vmem:[#allocation2 + $0x60] sm:$0xff]
    %v376 = vld [vmem:[#allocation2 + $0x68] sm:$0xff]
    %v377 = vld [vmem:[#allocation2 + $0x70] sm:$0xff]
    %v378 = vld [vmem:[#allocation2 + $0x78] sm:$0xff]
    %v379 = vld [vmem:[#allocation2 + $0x80] sm:$0xff]
    %v380 = vld [vmem:[#allocation2 + $0x88] sm:$0xff]
    %v381 = vld [vmem:[#allocation2 + $0x90] sm:$0xff]
    %v382 = vld [vmem:[#allocation2 + $0x98] sm:$0xff]
    %v383 = vld [vmem:[#allocation2 + $0xa0] sm:$0xff]
    %v384 = vld [vmem:[#allocation2 + $0xa8] sm:$0xff]
    %v385 = vld [vmem:[#allocation2 + $0xb0] sm:$0xff]
    %v386 = vld [vmem:[#allocation2 + $0xb8] sm:$0xff]
    %v387 = vld [vmem:[#allocation2 + $0xc0] sm:$0xff]
    %v388 = vld [vmem:[#allocation2 + $0xc8] sm:$0xff]
    %v389 = vld [vmem:[#allocation2 + $0xd0] sm:$0xff]
    %v390 = vld [vmem:[#allocation2 + $0xd8] sm:$0xff]
    %v391 = vld [vmem:[#allocation2 + $0xe0] sm:$0xff]
    %v392 = vld [vmem:[#allocation2 + $0xe8] sm:$0xff]
    %v393 = vld [vmem:[#allocation2 + $0xf0] sm:$0xff]
    %v394 = vld [vmem:[#allocation2 + $0xf8] sm:$0xff]
    %v395 = vld [vmem:[#allocation2 + $0x100] sm:$0xff]
    %v396 = vld [vmem:[#allocation2 + $0x108] sm:$0xff]
    %v397 = vld [vmem:[#allocation2 + $0x110] sm:$0xff]
    %v398 = vld [vmem:[#allocation2 + $0x118] sm:$0xff]
    %v399 = vld [vmem:[#allocation2 + $0x120] sm:$0xff]
    %v400 = vld [vmem:[#allocation2 + $0x128] sm:$0xff]
    %v401 = vld [vmem:[#allocation2 + $0x130] sm:$0xff]
    %v402 = vld [vmem:[#allocation2 + $0x138] sm:$0xff]
    %v403 = vld [vmem:[#allocation2 + $0x140] sm:$0xff]
    %v404 = vld [vmem:[#allocation2 + $0x148] sm:$0xff]
    %v405 = vld [vmem:[#allocation2 + $0x150] sm:$0xff]
    %v406 = vld [vmem:[#allocation2 + $0x158] sm:$0xff]
    %v407 = vld [vmem:[#allocation2 + $0x160] sm:$0xff]
    %v408 = vld [vmem:[#allocation2 + $0x168] sm:$0xff]
    %v409 = vld [vmem:[#allocation2 + $0x170] sm:$0xff]
    %v410 = vld [vmem:[#allocation2 + $0x178] sm:$0xff]
    %v411 = vld [vmem:[#allocation2 + $0x180] sm:$0xff]
    %v412 = vld [vmem:[#allocation2 + $0x188] sm:$0xff]
    %v413 = vld [vmem:[#allocation2 + $0x190] sm:$0xff]
    %v414 = vld [vmem:[#allocation2 + $0x198] sm:$0xff]
    %v415 = vld [vmem:[#allocation2 + $0x1a0] sm:$0xff]
    %v416 = vld [vmem:[#allocation2 + $0x1a8] sm:$0xff]
    %v417 = vld [vmem:[#allocation2 + $0x1b0] sm:$0xff]
    %v418 = vld [vmem:[#allocation2 + $0x1b8] sm:$0xff]
    %v419 = vld [vmem:[#allocation2 + $0x1c0] sm:$0xff]
    %v420 = vld [vmem:[#allocation2 + $0x1c8] sm:$0xff]
    %v421 = vld [vmem:[#allocation2 + $0x1d0] sm:$0xff]
    %v422 = vld [vmem:[#allocation2 + $0x1d8] sm:$0xff]
    %v423 = vld [vmem:[#allocation2 + $0x1e0] sm:$0xff]
    %v424 = vld [vmem:[#allocation2 + $0x1e8] sm:$0xff]
    %v425 = vld [vmem:[#allocation2 + $0x1f0] sm:$0xff]
    %v426 = vld [vmem:[#allocation2 + $0x1f8] sm:$0xff]
    %s427 = scalar_lea.hbm %s2, 16384
    %s429 = sshll.u32 1, 14
    %s430 = sxor.u32 4294967295, %s429
    %s432 = sadd.s32 2, %s97
    %s434 = sshll.u32 7, 26
    %s435 = sxor.u32 4294967295, %s434
    %s436 = sand.u32 0, %s435
    %s437 = sshll.u32 %s432, 26
    %s438 = sor.u32 %s436, %s437
    %s439 = sshll.u32 [#allocation2], 4
    %s440 = int_to_ptr.vmem [resolvable:$true] %s439
    %443 = sst [smem:[#allocation27]] 512
    %s444 = scalar_lea.smem [#allocation27], 1
    %445 = sst [smem:[%s444]] 512
    %s446 = scalar_lea.smem [#allocation27], 2
    %447 = sst [smem:[%s446]] 4
    %s448 = scalar_lea.smem [#allocation27], 3
    %449 = sst [smem:[%s448]] 64
    %s450 = scalar_lea.smem [#allocation27], 4
    %451 = sst [smem:[%s450]] 128
    %s452 = scalar_lea.smem [#allocation27], 5
    %453 = sst [smem:[%s452]] 2
    %s454 = scalar_lea.smem [#allocation27], 6
    %455 = sst [smem:[%s454]] 256
    %s456 = scalar_lea.smem [#allocation27], 7
    %457 = sst [smem:[%s456]] 64
    %s458 = scalar_lea.smem [#allocation27], 8
    %459 = sst [smem:[%s458]] 4
    %461 = dma.general %s427, 8192, %s440, [#allocation7], [#allocation26], [#allocation27], %s438, 0
    %s462 = sshll.u32 %s360, 4
    %463 = dma.done %s130, %s462
    %v464 = vld [vmem:[%s129] sm:$0xff]
    %v465 = vld [vmem:[%s129 + $0x8] sm:$0xff]
    %v466 = vld [vmem:[%s129 + $0x10] sm:$0xff]
    %v467 = vld [vmem:[%s129 + $0x18] sm:$0xff]
    %v468 = vld [vmem:[%s129 + $0x20] sm:$0xff]
    %v469 = vld [vmem:[%s129 + $0x28] sm:$0xff]
    %v470 = vld [vmem:[%s129 + $0x30] sm:$0xff]
    %v471 = vld [vmem:[%s129 + $0x38] sm:$0xff]
    %v472 = vld [vmem:[%s129 + $0x40] sm:$0xff]
    %v473 = vld [vmem:[%s129 + $0x48] sm:$0xff]
    %v474 = vld [vmem:[%s129 + $0x50] sm:$0xff]
    %v475 = vld [vmem:[%s129 + $0x58] sm:$0xff]
    %v476 = vld [vmem:[%s129 + $0x60] sm:$0xff]
    %v477 = vld [vmem:[%s129 + $0x68] sm:$0xff]
    %v478 = vld [vmem:[%s129 + $0x70] sm:$0xff]
    %v479 = vld [vmem:[%s129 + $0x78] sm:$0xff]
    %v480 = vld [vmem:[%s129 + $0x80] sm:$0xff]
    %v481 = vld [vmem:[%s129 + $0x88] sm:$0xff]
    %v482 = vld [vmem:[%s129 + $0x90] sm:$0xff]
    %v483 = vld [vmem:[%s129 + $0x98] sm:$0xff]
    %v484 = vld [vmem:[%s129 + $0xa0] sm:$0xff]
    %v485 = vld [vmem:[%s129 + $0xa8] sm:$0xff]
    %v486 = vld [vmem:[%s129 + $0xb0] sm:$0xff]
    %v487 = vld [vmem:[%s129 + $0xb8] sm:$0xff]
    %v488 = vld [vmem:[%s129 + $0xc0] sm:$0xff]
    %v489 = vld [vmem:[%s129 + $0xc8] sm:$0xff]
    %v490 = vld [vmem:[%s129 + $0xd0] sm:$0xff]
    %v491 = vld [vmem:[%s129 + $0xd8] sm:$0xff]
    %v492 = vld [vmem:[%s129 + $0xe0] sm:$0xff]
    %v493 = vld [vmem:[%s129 + $0xe8] sm:$0xff]
    %v494 = vld [vmem:[%s129 + $0xf0] sm:$0xff]
    %v495 = vld [vmem:[%s129 + $0xf8] sm:$0xff]
    %v496 = vld [vmem:[%s129 + $0x100] sm:$0xff]
    %v497 = vld [vmem:[%s129 + $0x108] sm:$0xff]
    %v498 = vld [vmem:[%s129 + $0x110] sm:$0xff]
    %v499 = vld [vmem:[%s129 + $0x118] sm:$0xff]
    %v500 = vld [vmem:[%s129 + $0x120] sm:$0xff]
    %v501 = vld [vmem:[%s129 + $0x128] sm:$0xff]
    %v502 = vld [vmem:[%s129 + $0x130] sm:$0xff]
    %v503 = vld [vmem:[%s129 + $0x138] sm:$0xff]
    %v504 = vld [vmem:[%s129 + $0x140] sm:$0xff]
    %v505 = vld [vmem:[%s129 + $0x148] sm:$0xff]
    %v506 = vld [vmem:[%s129 + $0x150] sm:$0xff]
    %v507 = vld [vmem:[%s129 + $0x158] sm:$0xff]
    %v508 = vld [vmem:[%s129 + $0x160] sm:$0xff]
    %v509 = vld [vmem:[%s129 + $0x168] sm:$0xff]
    %v510 = vld [vmem:[%s129 + $0x170] sm:$0xff]
    %v511 = vld [vmem:[%s129 + $0x178] sm:$0xff]
    %v512 = vld [vmem:[%s129 + $0x180] sm:$0xff]
    %v513 = vld [vmem:[%s129 + $0x188] sm:$0xff]
    %v514 = vld [vmem:[%s129 + $0x190] sm:$0xff]
    %v515 = vld [vmem:[%s129 + $0x198] sm:$0xff]
    %v516 = vld [vmem:[%s129 + $0x1a0] sm:$0xff]
    %v517 = vld [vmem:[%s129 + $0x1a8] sm:$0xff]
    %v518 = vld [vmem:[%s129 + $0x1b0] sm:$0xff]
    %v519 = vld [vmem:[%s129 + $0x1b8] sm:$0xff]
    %v520 = vld [vmem:[%s129 + $0x1c0] sm:$0xff]
    %v521 = vld [vmem:[%s129 + $0x1c8] sm:$0xff]
    %v522 = vld [vmem:[%s129 + $0x1d0] sm:$0xff]
    %v523 = vld [vmem:[%s129 + $0x1d8] sm:$0xff]
    %v524 = vld [vmem:[%s129 + $0x1e0] sm:$0xff]
    %v525 = vld [vmem:[%s129 + $0x1e8] sm:$0xff]
    %v526 = vld [vmem:[%s129 + $0x1f0] sm:$0xff]
    %v527 = vld [vmem:[%s129 + $0x1f8] sm:$0xff]
    %v530 = vunpack.c.l.b16 %v350
    %v531 = vunpack.c.h.b16 %v350
    %v532 = vunpack.c.l.b16 %v355
    %v533 = vunpack.c.h.b16 %v355
    %v534 = vpack.c.b16 %v532, %v530
    %v535 = vpack.c.b16 %v533, %v531
    %538 = vmatprep.subr.bf16.mxu0 %v465
    %539 = vmatpush1.bf16.msra.mxu0 %v464
    %540 = vmatprep.subr.bf16.mxu0 %v469
    %541 = vmatpush1.bf16.msra.mxu0 %v468
    %542 = vmatprep.subr.bf16.mxu0 %v473
    %543 = vmatpush1.bf16.msra.mxu0 %v472
    %544 = vmatprep.subr.bf16.mxu0 %v477
    %545 = vmatpush1.bf16.msra.mxu0 %v476
    %546 = vmatprep.subr.bf16.mxu0 %v481
    %547 = vmatpush1.bf16.msra.mxu0 %v480
    %548 = vmatprep.subr.bf16.mxu0 %v485
    %549 = vmatpush1.bf16.msra.mxu0 %v484
    %550 = vmatprep.subr.bf16.mxu0 %v489
    %551 = vmatpush1.bf16.msra.mxu0 %v488
    %552 = vmatprep.subr.bf16.mxu0 %v493
    %553 = vmatpush1.bf16.msra.mxu0 %v492
    %554 = vmatprep.subr.bf16.mxu0 %v497
    %555 = vmatpush1.bf16.msra.mxu0 %v496
    %556 = vmatprep.subr.bf16.mxu0 %v501
    %557 = vmatpush1.bf16.msra.mxu0 %v500
    %558 = vmatprep.subr.bf16.mxu0 %v505
    %559 = vmatpush1.bf16.msra.mxu0 %v504
    %560 = vmatprep.subr.bf16.mxu0 %v509
    %561 = vmatpush1.bf16.msra.mxu0 %v508
    %562 = vmatprep.subr.bf16.mxu0 %v513
    %563 = vmatpush1.bf16.msra.mxu0 %v512
    %564 = vmatprep.subr.bf16.mxu0 %v517
    %565 = vmatpush1.bf16.msra.mxu0 %v516
    %566 = vmatprep.subr.bf16.mxu0 %v521
    %567 = vmatpush1.bf16.msra.mxu0 %v520
    %568 = vmatprep.subr.bf16.mxu0 %v525
    %569 = vmatpush1.bf16.msra.mxu0 %v524
    %570 = vmatprep.mubr.bf16.mxu0 %v535
    %571 = vmatmul.mubr.bf16.gmra.mrb[0].mxu0 %v534
    %v572 = vpop.f32.mrb[0].mxu0
    %v573 = vadd.f32 0.0, %v572
    %v574 = vpop.f32.mrb[0].mxu0
    %v575 = vadd.f32 0.0, %v574
    %v576 = vpop.f32.mrb[0].mxu0
    %v577 = vadd.f32 0.0, %v576
    %v578 = vpop.f32.mrb[0].mxu0
    %v579 = vadd.f32 0.0, %v578
    %580 = vdwg.mxu0
    %581 = vmatprep.subr.bf16.mxu0 %v467
    %582 = vmatpush1.bf16.msra.mxu0 %v466
    %583 = vmatprep.subr.bf16.mxu0 %v471
    %584 = vmatpush1.bf16.msra.mxu0 %v470
    %585 = vmatprep.subr.bf16.mxu0 %v475
    %586 = vmatpush1.bf16.msra.mxu0 %v474
    %587 = vmatprep.subr.bf16.mxu0 %v479
    %588 = vmatpush1.bf16.msra.mxu0 %v478
    %589 = vmatprep.subr.bf16.mxu0 %v483
    %590 = vmatpush1.bf16.msra.mxu0 %v482
    %591 = vmatprep.subr.bf16.mxu0 %v487
    %592 = vmatpush1.bf16.msra.mxu0 %v486
    %593 = vmatprep.subr.bf16.mxu0 %v491
    %594 = vmatpush1.bf16.msra.mxu0 %v490
    %595 = vmatprep.subr.bf16.mxu0 %v495
    %596 = vmatpush1.bf16.msra.mxu0 %v494
    %597 = vmatprep.subr.bf16.mxu0 %v499
    %598 = vmatpush1.bf16.msra.mxu0 %v498
    %599 = vmatprep.subr.bf16.mxu0 %v503
    %600 = vmatpush1.bf16.msra.mxu0 %v502
    %601 = vmatprep.subr.bf16.mxu0 %v507
    %602 = vmatpush1.bf16.msra.mxu0 %v506
    %603 = vmatprep.subr.bf16.mxu0 %v511
    %604 = vmatpush1.bf16.msra.mxu0 %v510
    %605 = vmatprep.subr.bf16.mxu0 %v515
    %606 = vmatpush1.bf16.msra.mxu0 %v514
    %607 = vmatprep.subr.bf16.mxu0 %v519
    %608 = vmatpush1.bf16.msra.mxu0 %v518
    %609 = vmatprep.subr.bf16.mxu0 %v523
    %610 = vmatpush1.bf16.msra.mxu0 %v522
    %611 = vmatprep.subr.bf16.mxu0 %v527
    %612 = vmatpush1.bf16.msra.mxu0 %v526
    %613 = vmatprep.mubr.bf16.mxu0 %v535
    %614 = vmatmul.mubr.bf16.gmra.mrb[0].mxu0 %v534
    %v615 = vpop.f32.mrb[0].mxu0
    %v616 = vadd.f32 0.0, %v615
    %v617 = vpop.f32.mrb[0].mxu0
    %v618 = vadd.f32 0.0, %v617
    %v619 = vpop.f32.mrb[0].mxu0
    %v620 = vadd.f32 0.0, %v619
    %v621 = vpop.f32.mrb[0].mxu0
    %v622 = vadd.f32 0.0, %v621
    %623 = vdwg.mxu0
    %v626 = vunpack.c.l.b16 %v349
    %v627 = vunpack.c.h.b16 %v349
    %v628 = vunpack.c.l.b16 %v354
    %v629 = vunpack.c.h.b16 %v354
    %v630 = vpack.c.b16 %v628, %v626
    %v631 = vpack.c.b16 %v629, %v627
    %634 = vmatprep.subr.bf16.mxu0 %v364
    %635 = vmatpush1.bf16.msra.mxu0 %v363
    %636 = vmatprep.subr.bf16.mxu0 %v368
    %637 = vmatpush1.bf16.msra.mxu0 %v367
    %638 = vmatprep.subr.bf16.mxu0 %v372
    %639 = vmatpush1.bf16.msra.mxu0 %v371
    %640 = vmatprep.subr.bf16.mxu0 %v376
    %641 = vmatpush1.bf16.msra.mxu0 %v375
    %642 = vmatprep.subr.bf16.mxu0 %v380
    %643 = vmatpush1.bf16.msra.mxu0 %v379
    %644 = vmatprep.subr.bf16.mxu0 %v384
    %645 = vmatpush1.bf16.msra.mxu0 %v383
    %646 = vmatprep.subr.bf16.mxu0 %v388
    %647 = vmatpush1.bf16.msra.mxu0 %v387
    %648 = vmatprep.subr.bf16.mxu0 %v392
    %649 = vmatpush1.bf16.msra.mxu0 %v391
    %650 = vmatprep.subr.bf16.mxu0 %v396
    %651 = vmatpush1.bf16.msra.mxu0 %v395
    %652 = vmatprep.subr.bf16.mxu0 %v400
    %653 = vmatpush1.bf16.msra.mxu0 %v399
    %654 = vmatprep.subr.bf16.mxu0 %v404
    %655 = vmatpush1.bf16.msra.mxu0 %v403
    %656 = vmatprep.subr.bf16.mxu0 %v408
    %657 = vmatpush1.bf16.msra.mxu0 %v407
    %658 = vmatprep.subr.bf16.mxu0 %v412
    %659 = vmatpush1.bf16.msra.mxu0 %v411
    %660 = vmatprep.subr.bf16.mxu0 %v416
    %661 = vmatpush1.bf16.msra.mxu0 %v415
    %662 = vmatprep.subr.bf16.mxu0 %v420
    %663 = vmatpush1.bf16.msra.mxu0 %v419
    %664 = vmatprep.subr.bf16.mxu0 %v424
    %665 = vmatpush1.bf16.msra.mxu0 %v423
    %666 = vmatprep.mubr.bf16.mxu0 %v631
    %667 = vmatmul.mubr.bf16.gmra.mrb[0].mxu0 %v630
    %v668 = vpop.f32.mrb[0].mxu0
    %v669 = vadd.f32 %v573, %v668
    %v670 = vpop.f32.mrb[0].mxu0
    %v671 = vadd.f32 %v575, %v670
    %v672 = vpop.f32.mrb[0].mxu0
    %v673 = vadd.f32 %v577, %v672
    %v674 = vpop.f32.mrb[0].mxu0
    %v675 = vadd.f32 %v579, %v674
    %676 = vdwg.mxu0
    %677 = vmatprep.subr.bf16.mxu0 %v366
    %678 = vmatpush1.bf16.msra.mxu0 %v365
    %679 = vmatprep.subr.bf16.mxu0 %v370
    %680 = vmatpush1.bf16.msra.mxu0 %v369
    %681 = vmatprep.subr.bf16.mxu0 %v374
    %682 = vmatpush1.bf16.msra.mxu0 %v373
    %683 = vmatprep.subr.bf16.mxu0 %v378
    %684 = vmatpush1.bf16.msra.mxu0 %v377
    %685 = vmatprep.subr.bf16.mxu0 %v382
    %686 = vmatpush1.bf16.msra.mxu0 %v381
    %687 = vmatprep.subr.bf16.mxu0 %v386
    %688 = vmatpush1.bf16.msra.mxu0 %v385
    %689 = vmatprep.subr.bf16.mxu0 %v390
    %690 = vmatpush1.bf16.msra.mxu0 %v389
    %691 = vmatprep.subr.bf16.mxu0 %v394
    %692 = vmatpush1.bf16.msra.mxu0 %v393
    %693 = vmatprep.subr.bf16.mxu0 %v398
    %694 = vmatpush1.bf16.msra.mxu0 %v397
    %695 = vmatprep.subr.bf16.mxu0 %v402
    %696 = vmatpush1.bf16.msra.mxu0 %v401
    %697 = vmatprep.subr.bf16.mxu0 %v406
    %698 = vmatpush1.bf16.msra.mxu0 %v405
    %699 = vmatprep.subr.bf16.mxu0 %v410
    %700 = vmatpush1.bf16.msra.mxu0 %v409
    %701 = vmatprep.subr.bf16.mxu0 %v414
    %702 = vmatpush1.bf16.msra.mxu0 %v413
    %703 = vmatprep.subr.bf16.mxu0 %v418
    %704 = vmatpush1.bf16.msra.mxu0 %v417
    %705 = vmatprep.subr.bf16.mxu0 %v422
    %706 = vmatpush1.bf16.msra.mxu0 %v421
    %707 = vmatprep.subr.bf16.mxu0 %v426
    %708 = vmatpush1.bf16.msra.mxu0 %v425
    %709 = vmatprep.mubr.bf16.mxu0 %v631
    %710 = vmatmul.mubr.bf16.gmra.mrb[0].mxu0 %v630
    %v711 = vpop.f32.mrb[0].mxu0
    %v712 = vadd.f32 %v616, %v711
    %v713 = vpop.f32.mrb[0].mxu0
    %v714 = vadd.f32 %v618, %v713
    %v715 = vpop.f32.mrb[0].mxu0
    %v716 = vadd.f32 %v620, %v715
    %v717 = vpop.f32.mrb[0].mxu0
    %v718 = vadd.f32 %v622, %v717
    %719 = vdwg.mxu0
    %s720 = scalar_lea.hbm %s2, 24576
    %s722 = sshll.u32 1, 14
    %s723 = sxor.u32 4294967295, %s722
    %s725 = sadd.s32 2, %s97
    %s727 = sshll.u32 7, 26
    %s728 = sxor.u32 4294967295, %s727
    %s729 = sand.u32 0, %s728
    %s730 = sshll.u32 %s725, 26
    %s731 = sor.u32 %s729, %s730
    %s732 = sshll.u32 %s129, 4
    %s733 = int_to_ptr.vmem [resolvable:$true] %s732
    %736 = sst [smem:[#allocation29]] 512
    %s737 = scalar_lea.smem [#allocation29], 1
    %738 = sst [smem:[%s737]] 512
    %s739 = scalar_lea.smem [#allocation29], 2
    %740 = sst [smem:[%s739]] 4
    %s741 = scalar_lea.smem [#allocation29], 3
    %742 = sst [smem:[%s741]] 64
    %s743 = scalar_lea.smem [#allocation29], 4
    %744 = sst [smem:[%s743]] 128
    %s745 = scalar_lea.smem [#allocation29], 5
    %746 = sst [smem:[%s745]] 2
    %s747 = scalar_lea.smem [#allocation29], 6
    %748 = sst [smem:[%s747]] 256
    %s749 = scalar_lea.smem [#allocation29], 7
    %750 = sst [smem:[%s749]] 64
    %s751 = scalar_lea.smem [#allocation29], 8
    %752 = sst [smem:[%s751]] 4
    %754 = dma.general %s720, 8192, %s733, %s130, [#allocation28], [#allocation29], %s731, 0
    %s755 = sshll.u32 %s360, 4
    %756 = dma.done [#allocation7], %s755
    %v757 = vld [vmem:[#allocation2] sm:$0xff]
    %v758 = vld [vmem:[#allocation2 + $0x8] sm:$0xff]
    %v759 = vld [vmem:[#allocation2 + $0x10] sm:$0xff]
    %v760 = vld [vmem:[#allocation2 + $0x18] sm:$0xff]
    %v761 = vld [vmem:[#allocation2 + $0x20] sm:$0xff]
    %v762 = vld [vmem:[#allocation2 + $0x28] sm:$0xff]
    %v763 = vld [vmem:[#allocation2 + $0x30] sm:$0xff]
    %v764 = vld [vmem:[#allocation2 + $0x38] sm:$0xff]
    %v765 = vld [vmem:[#allocation2 + $0x40] sm:$0xff]
    %v766 = vld [vmem:[#allocation2 + $0x48] sm:$0xff]
    %v767 = vld [vmem:[#allocation2 + $0x50] sm:$0xff]
    %v768 = vld [vmem:[#allocation2 + $0x58] sm:$0xff]
    %v769 = vld [vmem:[#allocation2 + $0x60] sm:$0xff]
    %v770 = vld [vmem:[#allocation2 + $0x68] sm:$0xff]
    %v771 = vld [vmem:[#allocation2 + $0x70] sm:$0xff]
    %v772 = vld [vmem:[#allocation2 + $0x78] sm:$0xff]
    %v773 = vld [vmem:[#allocation2 + $0x80] sm:$0xff]
    %v774 = vld [vmem:[#allocation2 + $0x88] sm:$0xff]
    %v775 = vld [vmem:[#allocation2 + $0x90] sm:$0xff]
    %v776 = vld [vmem:[#allocation2 + $0x98] sm:$0xff]
    %v777 = vld [vmem:[#allocation2 + $0xa0] sm:$0xff]
    %v778 = vld [vmem:[#allocation2 + $0xa8] sm:$0xff]
    %v779 = vld [vmem:[#allocation2 + $0xb0] sm:$0xff]
    %v780 = vld [vmem:[#allocation2 + $0xb8] sm:$0xff]
    %v781 = vld [vmem:[#allocation2 + $0xc0] sm:$0xff]
    %v782 = vld [vmem:[#allocation2 + $0xc8] sm:$0xff]
    %v783 = vld [vmem:[#allocation2 + $0xd0] sm:$0xff]
    %v784 = vld [vmem:[#allocation2 + $0xd8] sm:$0xff]
    %v785 = vld [vmem:[#allocation2 + $0xe0] sm:$0xff]
    %v786 = vld [vmem:[#allocation2 + $0xe8] sm:$0xff]
    %v787 = vld [vmem:[#allocation2 + $0xf0] sm:$0xff]
    %v788 = vld [vmem:[#allocation2 + $0xf8] sm:$0xff]
    %v789 = vld [vmem:[#allocation2 + $0x100] sm:$0xff]
    %v790 = vld [vmem:[#allocation2 + $0x108] sm:$0xff]
    %v791 = vld [vmem:[#allocation2 + $0x110] sm:$0xff]
    %v792 = vld [vmem:[#allocation2 + $0x118] sm:$0xff]
    %v793 = vld [vmem:[#allocation2 + $0x120] sm:$0xff]
    %v794 = vld [vmem:[#allocation2 + $0x128] sm:$0xff]
    %v795 = vld [vmem:[#allocation2 + $0x130] sm:$0xff]
    %v796 = vld [vmem:[#allocation2 + $0x138] sm:$0xff]
    %v797 = vld [vmem:[#allocation2 + $0x140] sm:$0xff]
    %v798 = vld [vmem:[#allocation2 + $0x148] sm:$0xff]
    %v799 = vld [vmem:[#allocation2 + $0x150] sm:$0xff]
    %v800 = vld [vmem:[#allocation2 + $0x158] sm:$0xff]
    %v801 = vld [vmem:[#allocation2 + $0x160] sm:$0xff]
    %v802 = vld [vmem:[#allocation2 + $0x168] sm:$0xff]
    %v803 = vld [vmem:[#allocation2 + $0x170] sm:$0xff]
    %v804 = vld [vmem:[#allocation2 + $0x178] sm:$0xff]
    %v805 = vld [vmem:[#allocation2 + $0x180] sm:$0xff]
    %v806 = vld [vmem:[#allocation2 + $0x188] sm:$0xff]
    %v807 = vld [vmem:[#allocation2 + $0x190] sm:$0xff]
    %v808 = vld [vmem:[#allocation2 + $0x198] sm:$0xff]
    %v809 = vld [vmem:[#allocation2 + $0x1a0] sm:$0xff]
    %v810 = vld [vmem:[#allocation2 + $0x1a8] sm:$0xff]
    %v811 = vld [vmem:[#allocation2 + $0x1b0] sm:$0xff]
    %v812 = vld [vmem:[#allocation2 + $0x1b8] sm:$0xff]
    %v813 = vld [vmem:[#allocation2 + $0x1c0] sm:$0xff]
    %v814 = vld [vmem:[#allocation2 + $0x1c8] sm:$0xff]
    %v815 = vld [vmem:[#allocation2 + $0x1d0] sm:$0xff]
    %v816 = vld [vmem:[#allocation2 + $0x1d8] sm:$0xff]
    %v817 = vld [vmem:[#allocation2 + $0x1e0] sm:$0xff]
    %v818 = vld [vmem:[#allocation2 + $0x1e8] sm:$0xff]
    %v819 = vld [vmem:[#allocation2 + $0x1f0] sm:$0xff]
    %v820 = vld [vmem:[#allocation2 + $0x1f8] sm:$0xff]
    %v823 = vunpack.c.l.b16 %v351
    %v824 = vunpack.c.h.b16 %v351
    %v825 = vunpack.c.l.b16 %v356
    %v826 = vunpack.c.h.b16 %v356
    %v827 = vpack.c.b16 %v825, %v823
    %v828 = vpack.c.b16 %v826, %v824
    %831 = vmatprep.subr.bf16.mxu0 %v758
    %832 = vmatpush1.bf16.msra.mxu0 %v757
    %833 = vmatprep.subr.bf16.mxu0 %v762
    %834 = vmatpush1.bf16.msra.mxu0 %v761
    %835 = vmatprep.subr.bf16.mxu0 %v766
    %836 = vmatpush1.bf16.msra.mxu0 %v765
    %837 = vmatprep.subr.bf16.mxu0 %v770
    %838 = vmatpush1.bf16.msra.mxu0 %v769
    %839 = vmatprep.subr.bf16.mxu0 %v774
    %840 = vmatpush1.bf16.msra.mxu0 %v773
    %841 = vmatprep.subr.bf16.mxu0 %v778
    %842 = vmatpush1.bf16.msra.mxu0 %v777
    %843 = vmatprep.subr.bf16.mxu0 %v782
    %844 = vmatpush1.bf16.msra.mxu0 %v781
    %845 = vmatprep.subr.bf16.mxu0 %v786
    %846 = vmatpush1.bf16.msra.mxu0 %v785
    %847 = vmatprep.subr.bf16.mxu0 %v790
    %848 = vmatpush1.bf16.msra.mxu0 %v789
    %849 = vmatprep.subr.bf16.mxu0 %v794
    %850 = vmatpush1.bf16.msra.mxu0 %v793
    %851 = vmatprep.subr.bf16.mxu0 %v798
    %852 = vmatpush1.bf16.msra.mxu0 %v797
    %853 = vmatprep.subr.bf16.mxu0 %v802
    %854 = vmatpush1.bf16.msra.mxu0 %v801
    %855 = vmatprep.subr.bf16.mxu0 %v806
    %856 = vmatpush1.bf16.msra.mxu0 %v805
    %857 = vmatprep.subr.bf16.mxu0 %v810
    %858 = vmatpush1.bf16.msra.mxu0 %v809
    %859 = vmatprep.subr.bf16.mxu0 %v814
    %860 = vmatpush1.bf16.msra.mxu0 %v813
    %861 = vmatprep.subr.bf16.mxu0 %v818
    %862 = vmatpush1.bf16.msra.mxu0 %v817
    %863 = vmatprep.mubr.bf16.mxu0 %v828
    %864 = vmatmul.mubr.bf16.gmra.mrb[0].mxu0 %v827
    %v865 = vpop.f32.mrb[0].mxu0
    %v866 = vadd.f32 0.0, %v865
    %v867 = vpop.f32.mrb[0].mxu0
    %v868 = vadd.f32 0.0, %v867
    %v869 = vpop.f32.mrb[0].mxu0
    %v870 = vadd.f32 0.0, %v869
    %v871 = vpop.f32.mrb[0].mxu0
    %v872 = vadd.f32 0.0, %v871
    %873 = vdwg.mxu0
    %874 = vmatprep.subr.bf16.mxu0 %v760
    %875 = vmatpush1.bf16.msra.mxu0 %v759
    %876 = vmatprep.subr.bf16.mxu0 %v764
    %877 = vmatpush1.bf16.msra.mxu0 %v763
    %878 = vmatprep.subr.bf16.mxu0 %v768
    %879 = vmatpush1.bf16.msra.mxu0 %v767
    %880 = vmatprep.subr.bf16.mxu0 %v772
    %881 = vmatpush1.bf16.msra.mxu0 %v771
    %882 = vmatprep.subr.bf16.mxu0 %v776
    %883 = vmatpush1.bf16.msra.mxu0 %v775
    %884 = vmatprep.subr.bf16.mxu0 %v780
    %885 = vmatpush1.bf16.msra.mxu0 %v779
    %886 = vmatprep.subr.bf16.mxu0 %v784
    %887 = vmatpush1.bf16.msra.mxu0 %v783
    %888 = vmatprep.subr.bf16.mxu0 %v788
    %889 = vmatpush1.bf16.msra.mxu0 %v787
    %890 = vmatprep.subr.bf16.mxu0 %v792
    %891 = vmatpush1.bf16.msra.mxu0 %v791
    %892 = vmatprep.subr.bf16.mxu0 %v796
    %893 = vmatpush1.bf16.msra.mxu0 %v795
    %894 = vmatprep.subr.bf16.mxu0 %v800
    %895 = vmatpush1.bf16.msra.mxu0 %v799
    %896 = vmatprep.subr.bf16.mxu0 %v804
    %897 = vmatpush1.bf16.msra.mxu0 %v803
    %898 = vmatprep.subr.bf16.mxu0 %v808
    %899 = vmatpush1.bf16.msra.mxu0 %v807
    %900 = vmatprep.subr.bf16.mxu0 %v812
    %901 = vmatpush1.bf16.msra.mxu0 %v811
    %902 = vmatprep.subr.bf16.mxu0 %v816
    %903 = vmatpush1.bf16.msra.mxu0 %v815
    %904 = vmatprep.subr.bf16.mxu0 %v820
    %905 = vmatpush1.bf16.msra.mxu0 %v819
    %906 = vmatprep.mubr.bf16.mxu0 %v828
    %907 = vmatmul.mubr.bf16.gmra.mrb[0].mxu0 %v827
    %v908 = vpop.f32.mrb[0].mxu0
    %v909 = vadd.f32 0.0, %v908
    %v910 = vpop.f32.mrb[0].mxu0
    %v911 = vadd.f32 0.0, %v910
    %v912 = vpop.f32.mrb[0].mxu0
    %v913 = vadd.f32 0.0, %v912
    %v914 = vpop.f32.mrb[0].mxu0
    %v915 = vadd.f32 0.0, %v914
    %916 = vdwg.mxu0
    %v917 = vadd.f32 %v669, %v866
    %v918 = vadd.f32 %v671, %v868
    %v919 = vadd.f32 %v712, %v909
    %v920 = vadd.f32 %v714, %v911
    %v921 = vadd.f32 %v673, %v870
    %v922 = vadd.f32 %v675, %v872
    %v923 = vadd.f32 %v716, %v913
    %v924 = vadd.f32 %v718, %v915
    %s925 = scalar_lea.hbm %s2, 32768
    %s927 = sshll.u32 1, 14
    %s928 = sxor.u32 4294967295, %s927
    %s930 = sadd.s32 2, %s97
    %s932 = sshll.u32 7, 26
    %s933 = sxor.u32 4294967295, %s932
    %s934 = sand.u32 0, %s933
    %s935 = sshll.u32 %s930, 26
    %s936 = sor.u32 %s934, %s935
    %s937 = sshll.u32 [#allocation2], 4
    %s938 = int_to_ptr.vmem [resolvable:$true] %s937
    %941 = sst [smem:[#allocation31]] 512
    %s942 = scalar_lea.smem [#allocation31], 1
    %943 = sst [smem:[%s942]] 512
    %s944 = scalar_lea.smem [#allocation31], 2
    %945 = sst [smem:[%s944]] 4
    %s946 = scalar_lea.smem [#allocation31], 3
    %947 = sst [smem:[%s946]] 64
    %s948 = scalar_lea.smem [#allocation31], 4
    %949 = sst [smem:[%s948]] 128
    %s950 = scalar_lea.smem [#allocation31], 5
    %951 = sst [smem:[%s950]] 2
    %s952 = scalar_lea.smem [#allocation31], 6
    %953 = sst [smem:[%s952]] 256
    %s954 = scalar_lea.smem [#allocation31], 7
    %955 = sst [smem:[%s954]] 64
    %s956 = scalar_lea.smem [#allocation31], 8
    %957 = sst [smem:[%s956]] 4
    %959 = dma.general %s925, 8192, %s938, [#allocation7], [#allocation30], [#allocation31], %s936, 0
    %s960 = sshll.u32 %s360, 4
    %961 = dma.done %s130, %s960
    %v962 = vld [vmem:[%s129] sm:$0xff]
    %v963 = vld [vmem:[%s129 + $0x8] sm:$0xff]
    %v964 = vld [vmem:[%s129 + $0x10] sm:$0xff]
    %v965 = vld [vmem:[%s129 + $0x18] sm:$0xff]
    %v966 = vld [vmem:[%s129 + $0x20] sm:$0xff]
    %v967 = vld [vmem:[%s129 + $0x28] sm:$0xff]
    %v968 = vld [vmem:[%s129 + $0x30] sm:$0xff]
    %v969 = vld [vmem:[%s129 + $0x38] sm:$0xff]
    %v970 = vld [vmem:[%s129 + $0x40] sm:$0xff]
    %v971 = vld [vmem:[%s129 + $0x48] sm:$0xff]
    %v972 = vld [vmem:[%s129 + $0x50] sm:$0xff]
    %v973 = vld [vmem:[%s129 + $0x58] sm:$0xff]
    %v974 = vld [vmem:[%s129 + $0x60] sm:$0xff]
    %v975 = vld [vmem:[%s129 + $0x68] sm:$0xff]
    %v976 = vld [vmem:[%s129 + $0x70] sm:$0xff]
    %v977 = vld [vmem:[%s129 + $0x78] sm:$0xff]
    %v978 = vld [vmem:[%s129 + $0x80] sm:$0xff]
    %v979 = vld [vmem:[%s129 + $0x88] sm:$0xff]
    %v980 = vld [vmem:[%s129 + $0x90] sm:$0xff]
    %v981 = vld [vmem:[%s129 + $0x98] sm:$0xff]
    %v982 = vld [vmem:[%s129 + $0xa0] sm:$0xff]
    %v983 = vld [vmem:[%s129 + $0xa8] sm:$0xff]
    %v984 = vld [vmem:[%s129 + $0xb0] sm:$0xff]
    %v985 = vld [vmem:[%s129 + $0xb8] sm:$0xff]
    %v986 = vld [vmem:[%s129 + $0xc0] sm:$0xff]
    %v987 = vld [vmem:[%s129 + $0xc8] sm:$0xff]
    %v988 = vld [vmem:[%s129 + $0xd0] sm:$0xff]
    %v989 = vld [vmem:[%s129 + $0xd8] sm:$0xff]
    %v990 = vld [vmem:[%s129 + $0xe0] sm:$0xff]
    %v991 = vld [vmem:[%s129 + $0xe8] sm:$0xff]
    %v992 = vld [vmem:[%s129 + $0xf0] sm:$0xff]
    %v993 = vld [vmem:[%s129 + $0xf8] sm:$0xff]
    %v994 = vld [vmem:[%s129 + $0x100] sm:$0xff]
    %v995 = vld [vmem:[%s129 + $0x108] sm:$0xff]
    %v996 = vld [vmem:[%s129 + $0x110] sm:$0xff]
    %v997 = vld [vmem:[%s129 + $0x118] sm:$0xff]
    %v998 = vld [vmem:[%s129 + $0x120] sm:$0xff]
    %v999 = vld [vmem:[%s129 + $0x128] sm:$0xff]
    %v1000 = vld [vmem:[%s129 + $0x130] sm:$0xff]
    %v1001 = vld [vmem:[%s129 + $0x138] sm:$0xff]
    %v1002 = vld [vmem:[%s129 + $0x140] sm:$0xff]
    %v1003 = vld [vmem:[%s129 + $0x148] sm:$0xff]
    %v1004 = vld [vmem:[%s129 + $0x150] sm:$0xff]
    %v1005 = vld [vmem:[%s129 + $0x158] sm:$0xff]
    %v1006 = vld [vmem:[%s129 + $0x160] sm:$0xff]
    %v1007 = vld [vmem:[%s129 + $0x168] sm:$0xff]
    %v1008 = vld [vmem:[%s129 + $0x170] sm:$0xff]
    %v1009 = vld [vmem:[%s129 + $0x178] sm:$0xff]
    %v1010 = vld [vmem:[%s129 + $0x180] sm:$0xff]
    %v1011 = vld [vmem:[%s129 + $0x188] sm:$0xff]
    %v1012 = vld [vmem:[%s129 + $0x190] sm:$0xff]
    %v1013 = vld [vmem:[%s129 + $0x198] sm:$0xff]
    %v1014 = vld [vmem:[%s129 + $0x1a0] sm:$0xff]
    %v1015 = vld [vmem:[%s129 + $0x1a8] sm:$0xff]
    %v1016 = vld [vmem:[%s129 + $0x1b0] sm:$0xff]
    %v1017 = vld [vmem:[%s129 + $0x1b8] sm:$0xff]
    %v1018 = vld [vmem:[%s129 + $0x1c0] sm:$0xff]
    %v1019 = vld [vmem:[%s129 + $0x1c8] sm:$0xff]
    %v1020 = vld [vmem:[%s129 + $0x1d0] sm:$0xff]
    %v1021 = vld [vmem:[%s129 + $0x1d8] sm:$0xff]
    %v1022 = vld [vmem:[%s129 + $0x1e0] sm:$0xff]
    %v1023 = vld [vmem:[%s129 + $0x1e8] sm:$0xff]
    %v1024 = vld [vmem:[%s129 + $0x1f0] sm:$0xff]
    %v1025 = vld [vmem:[%s129 + $0x1f8] sm:$0xff]
    %v1028 = vunpack.c.l.b16 %v352
    %v1029 = vunpack.c.h.b16 %v352
    %v1030 = vunpack.c.l.b16 %v357
    %v1031 = vunpack.c.h.b16 %v357
    %v1032 = vpack.c.b16 %v1030, %v1028
    %v1033 = vpack.c.b16 %v1031, %v1029
    %1036 = vmatprep.subr.bf16.mxu0 %v963
    %1037 = vmatpush1.bf16.msra.mxu0 %v962
    %1038 = vmatprep.subr.bf16.mxu0 %v967
    %1039 = vmatpush1.bf16.msra.mxu0 %v966
    %1040 = vmatprep.subr.bf16.mxu0 %v971
    %1041 = vmatpush1.bf16.msra.mxu0 %v970
    %1042 = vmatprep.subr.bf16.mxu0 %v975
    %1043 = vmatpush1.bf16.msra.mxu0 %v974
    %1044 = vmatprep.subr.bf16.mxu0 %v979
    %1045 = vmatpush1.bf16.msra.mxu0 %v978
    %1046 = vmatprep.subr.bf16.mxu0 %v983
    %1047 = vmatpush1.bf16.msra.mxu0 %v982
    %1048 = vmatprep.subr.bf16.mxu0 %v987
    %1049 = vmatpush1.bf16.msra.mxu0 %v986
    %1050 = vmatprep.subr.bf16.mxu0 %v991
    %1051 = vmatpush1.bf16.msra.mxu0 %v990
    %1052 = vmatprep.subr.bf16.mxu0 %v995
    %1053 = vmatpush1.bf16.msra.mxu0 %v994
    %1054 = vmatprep.subr.bf16.mxu0 %v999
    %1055 = vmatpush1.bf16.msra.mxu0 %v998
    %1056 = vmatprep.subr.bf16.mxu0 %v1003
    %1057 = vmatpush1.bf16.msra.mxu0 %v1002
    %1058 = vmatprep.subr.bf16.mxu0 %v1007
    %1059 = vmatpush1.bf16.msra.mxu0 %v1006
    %1060 = vmatprep.subr.bf16.mxu0 %v1011
    %1061 = vmatpush1.bf16.msra.mxu0 %v1010
    %1062 = vmatprep.subr.bf16.mxu0 %v1015
    %1063 = vmatpush1.bf16.msra.mxu0 %v1014
    %1064 = vmatprep.subr.bf16.mxu0 %v1019
    %1065 = vmatpush1.bf16.msra.mxu0 %v1018
    %1066 = vmatprep.subr.bf16.mxu0 %v1023
    %1067 = vmatpush1.bf16.msra.mxu0 %v1022
    %1068 = vmatprep.mubr.bf16.mxu0 %v1033
    %1069 = vmatmul.mubr.bf16.gmra.mrb[0].mxu0 %v1032
    %v1070 = vpop.f32.mrb[0].mxu0
    %v1071 = vadd.f32 0.0, %v1070
    %v1072 = vpop.f32.mrb[0].mxu0
    %v1073 = vadd.f32 0.0, %v1072
    %v1074 = vpop.f32.mrb[0].mxu0
    %v1075 = vadd.f32 0.0, %v1074
    %v1076 = vpop.f32.mrb[0].mxu0
    %v1077 = vadd.f32 0.0, %v1076
    %1078 = vdwg.mxu0
    %1079 = vmatprep.subr.bf16.mxu0 %v965
    %1080 = vmatpush1.bf16.msra.mxu0 %v964
    %1081 = vmatprep.subr.bf16.mxu0 %v969
    %1082 = vmatpush1.bf16.msra.mxu0 %v968
    %1083 = vmatprep.subr.bf16.mxu0 %v973
    %1084 = vmatpush1.bf16.msra.mxu0 %v972
    %1085 = vmatprep.subr.bf16.mxu0 %v977
    %1086 = vmatpush1.bf16.msra.mxu0 %v976
    %1087 = vmatprep.subr.bf16.mxu0 %v981
    %1088 = vmatpush1.bf16.msra.mxu0 %v980
    %1089 = vmatprep.subr.bf16.mxu0 %v985
    %1090 = vmatpush1.bf16.msra.mxu0 %v984
    %1091 = vmatprep.subr.bf16.mxu0 %v989
    %1092 = vmatpush1.bf16.msra.mxu0 %v988
    %1093 = vmatprep.subr.bf16.mxu0 %v993
    %1094 = vmatpush1.bf16.msra.mxu0 %v992
    %1095 = vmatprep.subr.bf16.mxu0 %v997
    %1096 = vmatpush1.bf16.msra.mxu0 %v996
    %1097 = vmatprep.subr.bf16.mxu0 %v1001
    %1098 = vmatpush1.bf16.msra.mxu0 %v1000
    %1099 = vmatprep.subr.bf16.mxu0 %v1005
    %1100 = vmatpush1.bf16.msra.mxu0 %v1004
    %1101 = vmatprep.subr.bf16.mxu0 %v1009
    %1102 = vmatpush1.bf16.msra.mxu0 %v1008
    %1103 = vmatprep.subr.bf16.mxu0 %v1013
    %1104 = vmatpush1.bf16.msra.mxu0 %v1012
    %1105 = vmatprep.subr.bf16.mxu0 %v1017
    %1106 = vmatpush1.bf16.msra.mxu0 %v1016
    %1107 = vmatprep.subr.bf16.mxu0 %v1021
    %1108 = vmatpush1.bf16.msra.mxu0 %v1020
    %1109 = vmatprep.subr.bf16.mxu0 %v1025
    %1110 = vmatpush1.bf16.msra.mxu0 %v1024
    %1111 = vmatprep.mubr.bf16.mxu0 %v1033
    %1112 = vmatmul.mubr.bf16.gmra.mrb[0].mxu0 %v1032
    %v1113 = vpop.f32.mrb[0].mxu0
    %v1114 = vadd.f32 0.0, %v1113
    %v1115 = vpop.f32.mrb[0].mxu0
    %v1116 = vadd.f32 0.0, %v1115
    %v1117 = vpop.f32.mrb[0].mxu0
    %v1118 = vadd.f32 0.0, %v1117
    %v1119 = vpop.f32.mrb[0].mxu0
    %v1120 = vadd.f32 0.0, %v1119
    %1121 = vdwg.mxu0
    %v1122 = vadd.f32 %v917, %v1071
    %v1123 = vadd.f32 %v918, %v1073
    %v1124 = vadd.f32 %v919, %v1114
    %v1125 = vadd.f32 %v920, %v1116
    %v1126 = vadd.f32 %v921, %v1075
    %v1127 = vadd.f32 %v922, %v1077
    %v1128 = vadd.f32 %v923, %v1118
    %v1129 = vadd.f32 %v924, %v1120
    %s1130 = sshll.u32 %s360, 4
    %1131 = dma.done [#allocation7], %s1130
    %v1132 = vld [vmem:[#allocation2] sm:$0xff]
    %v1133 = vld [vmem:[#allocation2 + $0x8] sm:$0xff]
    %v1134 = vld [vmem:[#allocation2 + $0x10] sm:$0xff]
    %v1135 = vld [vmem:[#allocation2 + $0x18] sm:$0xff]
    %v1136 = vld [vmem:[#allocation2 + $0x20] sm:$0xff]
    %v1137 = vld [vmem:[#allocation2 + $0x28] sm:$0xff]
    %v1138 = vld [vmem:[#allocation2 + $0x30] sm:$0xff]
    %v1139 = vld [vmem:[#allocation2 + $0x38] sm:$0xff]
    %v1140 = vld [vmem:[#allocation2 + $0x40] sm:$0xff]
    %v1141 = vld [vmem:[#allocation2 + $0x48] sm:$0xff]
    %v1142 = vld [vmem:[#allocation2 + $0x50] sm:$0xff]
    %v1143 = vld [vmem:[#allocation2 + $0x58] sm:$0xff]
    %v1144 = vld [vmem:[#allocation2 + $0x60] sm:$0xff]
    %v1145 = vld [vmem:[#allocation2 + $0x68] sm:$0xff]
    %v1146 = vld [vmem:[#allocation2 + $0x70] sm:$0xff]
    %v1147 = vld [vmem:[#allocation2 + $0x78] sm:$0xff]
    %v1148 = vld [vmem:[#allocation2 + $0x80] sm:$0xff]
    %v1149 = vld [vmem:[#allocation2 + $0x88] sm:$0xff]
    %v1150 = vld [vmem:[#allocation2 + $0x90] sm:$0xff]
    %v1151 = vld [vmem:[#allocation2 + $0x98] sm:$0xff]
    %v1152 = vld [vmem:[#allocation2 + $0xa0] sm:$0xff]
    %v1153 = vld [vmem:[#allocation2 + $0xa8] sm:$0xff]
    %v1154 = vld [vmem:[#allocation2 + $0xb0] sm:$0xff]
    %v1155 = vld [vmem:[#allocation2 + $0xb8] sm:$0xff]
    %v1156 = vld [vmem:[#allocation2 + $0xc0] sm:$0xff]
    %v1157 = vld [vmem:[#allocation2 + $0xc8] sm:$0xff]
    %v1158 = vld [vmem:[#allocation2 + $0xd0] sm:$0xff]
    %v1159 = vld [vmem:[#allocation2 + $0xd8] sm:$0xff]
    %v1160 = vld [vmem:[#allocation2 + $0xe0] sm:$0xff]
    %v1161 = vld [vmem:[#allocation2 + $0xe8] sm:$0xff]
    %v1162 = vld [vmem:[#allocation2 + $0xf0] sm:$0xff]
    %v1163 = vld [vmem:[#allocation2 + $0xf8] sm:$0xff]
    %v1164 = vld [vmem:[#allocation2 + $0x100] sm:$0xff]
    %v1165 = vld [vmem:[#allocation2 + $0x108] sm:$0xff]
    %v1166 = vld [vmem:[#allocation2 + $0x110] sm:$0xff]
    %v1167 = vld [vmem:[#allocation2 + $0x118] sm:$0xff]
    %v1168 = vld [vmem:[#allocation2 + $0x120] sm:$0xff]
    %v1169 = vld [vmem:[#allocation2 + $0x128] sm:$0xff]
    %v1170 = vld [vmem:[#allocation2 + $0x130] sm:$0xff]
    %v1171 = vld [vmem:[#allocation2 + $0x138] sm:$0xff]
    %v1172 = vld [vmem:[#allocation2 + $0x140] sm:$0xff]
    %v1173 = vld [vmem:[#allocation2 + $0x148] sm:$0xff]
    %v1174 = vld [vmem:[#allocation2 + $0x150] sm:$0xff]
    %v1175 = vld [vmem:[#allocation2 + $0x158] sm:$0xff]
    %v1176 = vld [vmem:[#allocation2 + $0x160] sm:$0xff]
    %v1177 = vld [vmem:[#allocation2 + $0x168] sm:$0xff]
    %v1178 = vld [vmem:[#allocation2 + $0x170] sm:$0xff]
    %v1179 = vld [vmem:[#allocation2 + $0x178] sm:$0xff]
    %v1180 = vld [vmem:[#allocation2 + $0x180] sm:$0xff]
    %v1181 = vld [vmem:[#allocation2 + $0x188] sm:$0xff]
    %v1182 = vld [vmem:[#allocation2 + $0x190] sm:$0xff]
    %v1183 = vld [vmem:[#allocation2 + $0x198] sm:$0xff]
    %v1184 = vld [vmem:[#allocation2 + $0x1a0] sm:$0xff]
    %v1185 = vld [vmem:[#allocation2 + $0x1a8] sm:$0xff]
    %v1186 = vld [vmem:[#allocation2 + $0x1b0] sm:$0xff]
    %v1187 = vld [vmem:[#allocation2 + $0x1b8] sm:$0xff]
    %v1188 = vld [vmem:[#allocation2 + $0x1c0] sm:$0xff]
    %v1189 = vld [vmem:[#allocation2 + $0x1c8] sm:$0xff]
    %v1190 = vld [vmem:[#allocation2 + $0x1d0] sm:$0xff]
    %v1191 = vld [vmem:[#allocation2 + $0x1d8] sm:$0xff]
    %v1192 = vld [vmem:[#allocation2 + $0x1e0] sm:$0xff]
    %v1193 = vld [vmem:[#allocation2 + $0x1e8] sm:$0xff]
    %v1194 = vld [vmem:[#allocation2 + $0x1f0] sm:$0xff]
    %v1195 = vld [vmem:[#allocation2 + $0x1f8] sm:$0xff]
    %v1198 = vunpack.c.l.b16 %v353
    %v1199 = vunpack.c.h.b16 %v353
    %v1200 = vunpack.c.l.b16 %v358
    %v1201 = vunpack.c.h.b16 %v358
    %v1202 = vpack.c.b16 %v1200, %v1198
    %v1203 = vpack.c.b16 %v1201, %v1199
    %1206 = vmatprep.subr.bf16.mxu0 %v1133
    %1207 = vmatpush1.bf16.msra.mxu0 %v1132
    %1208 = vmatprep.subr.bf16.mxu0 %v1137
    %1209 = vmatpush1.bf16.msra.mxu0 %v1136
    %1210 = vmatprep.subr.bf16.mxu0 %v1141
    %1211 = vmatpush1.bf16.msra.mxu0 %v1140
    %1212 = vmatprep.subr.bf16.mxu0 %v1145
    %1213 = vmatpush1.bf16.msra.mxu0 %v1144
    %1214 = vmatprep.subr.bf16.mxu0 %v1149
    %1215 = vmatpush1.bf16.msra.mxu0 %v1148
    %1216 = vmatprep.subr.bf16.mxu0 %v1153
    %1217 = vmatpush1.bf16.msra.mxu0 %v1152
    %1218 = vmatprep.subr.bf16.mxu0 %v1157
    %1219 = vmatpush1.bf16.msra.mxu0 %v1156
    %1220 = vmatprep.subr.bf16.mxu0 %v1161
    %1221 = vmatpush1.bf16.msra.mxu0 %v1160
    %1222 = vmatprep.subr.bf16.mxu0 %v1165
    %1223 = vmatpush1.bf16.msra.mxu0 %v1164
    %1224 = vmatprep.subr.bf16.mxu0 %v1169
    %1225 = vmatpush1.bf16.msra.mxu0 %v1168
    %1226 = vmatprep.subr.bf16.mxu0 %v1173
    %1227 = vmatpush1.bf16.msra.mxu0 %v1172
    %1228 = vmatprep.subr.bf16.mxu0 %v1177
    %1229 = vmatpush1.bf16.msra.mxu0 %v1176
    %1230 = vmatprep.subr.bf16.mxu0 %v1181
    %1231 = vmatpush1.bf16.msra.mxu0 %v1180
    %1232 = vmatprep.subr.bf16.mxu0 %v1185
    %1233 = vmatpush1.bf16.msra.mxu0 %v1184
    %1234 = vmatprep.subr.bf16.mxu0 %v1189
    %1235 = vmatpush1.bf16.msra.mxu0 %v1188
    %1236 = vmatprep.subr.bf16.mxu0 %v1193
    %1237 = vmatpush1.bf16.msra.mxu0 %v1192
    %1238 = vmatprep.mubr.bf16.mxu0 %v1203
    %1239 = vmatmul.mubr.bf16.gmra.mrb[0].mxu0 %v1202
    %v1240 = vpop.f32.mrb[0].mxu0
    %v1241 = vadd.f32 0.0, %v1240
    %v1242 = vpop.f32.mrb[0].mxu0
    %v1243 = vadd.f32 0.0, %v1242
    %v1244 = vpop.f32.mrb[0].mxu0
    %v1245 = vadd.f32 0.0, %v1244
    %v1246 = vpop.f32.mrb[0].mxu0
    %v1247 = vadd.f32 0.0, %v1246
    %1248 = vdwg.mxu0
    %1249 = vmatprep.subr.bf16.mxu0 %v1135
    %1250 = vmatpush1.bf16.msra.mxu0 %v1134
    %1251 = vmatprep.subr.bf16.mxu0 %v1139
    %1252 = vmatpush1.bf16.msra.mxu0 %v1138
    %1253 = vmatprep.subr.bf16.mxu0 %v1143
    %1254 = vmatpush1.bf16.msra.mxu0 %v1142
    %1255 = vmatprep.subr.bf16.mxu0 %v1147
    %1256 = vmatpush1.bf16.msra.mxu0 %v1146
    %1257 = vmatprep.subr.bf16.mxu0 %v1151
    %1258 = vmatpush1.bf16.msra.mxu0 %v1150
    %1259 = vmatprep.subr.bf16.mxu0 %v1155
    %1260 = vmatpush1.bf16.msra.mxu0 %v1154
    %1261 = vmatprep.subr.bf16.mxu0 %v1159
    %1262 = vmatpush1.bf16.msra.mxu0 %v1158
    %1263 = vmatprep.subr.bf16.mxu0 %v1163
    %1264 = vmatpush1.bf16.msra.mxu0 %v1162
    %1265 = vmatprep.subr.bf16.mxu0 %v1167
    %1266 = vmatpush1.bf16.msra.mxu0 %v1166
    %1267 = vmatprep.subr.bf16.mxu0 %v1171
    %1268 = vmatpush1.bf16.msra.mxu0 %v1170
    %1269 = vmatprep.subr.bf16.mxu0 %v1175
    %1270 = vmatpush1.bf16.msra.mxu0 %v1174
    %1271 = vmatprep.subr.bf16.mxu0 %v1179
    %1272 = vmatpush1.bf16.msra.mxu0 %v1178
    %1273 = vmatprep.subr.bf16.mxu0 %v1183
    %1274 = vmatpush1.bf16.msra.mxu0 %v1182
    %1275 = vmatprep.subr.bf16.mxu0 %v1187
    %1276 = vmatpush1.bf16.msra.mxu0 %v1186
    %1277 = vmatprep.subr.bf16.mxu0 %v1191
    %1278 = vmatpush1.bf16.msra.mxu0 %v1190
    %1279 = vmatprep.subr.bf16.mxu0 %v1195
    %1280 = vmatpush1.bf16.msra.mxu0 %v1194
    %1281 = vmatprep.mubr.bf16.mxu0 %v1203
    %1282 = vmatmul.mubr.bf16.gmra.mrb[0].mxu0 %v1202
    %v1283 = vpop.f32.mrb[0].mxu0
    %v1284 = vadd.f32 0.0, %v1283
    %v1285 = vpop.f32.mrb[0].mxu0
    %v1286 = vadd.f32 0.0, %v1285
    %v1287 = vpop.f32.mrb[0].mxu0
    %v1288 = vadd.f32 0.0, %v1287
    %v1289 = vpop.f32.mrb[0].mxu0
    %v1290 = vadd.f32 0.0, %v1289
    %1291 = vdwg.mxu0
    %v1292 = vadd.f32 %v1122, %v1241
    %v1293 = vadd.f32 %v1123, %v1243
    %v1294 = vadd.f32 %v1124, %v1284
    %v1295 = vadd.f32 %v1125, %v1286
    %v1296 = vadd.f32 %v1126, %v1245
    %v1297 = vadd.f32 %v1127, %v1247
    %v1298 = vadd.f32 %v1128, %v1288
    %v1299 = vadd.f32 %v1129, %v1290
    %v1300 = vpack.c.bf16 %v1296, %v1292
    %v1301 = vpack.c.bf16 %v1297, %v1293
    %v1302 = vpack.c.bf16 %v1298, %v1294
    %v1303 = vpack.c.bf16 %v1299, %v1295
    %v1304 = vld [vmem:[%s3] sm:$0xf]
    %v1305 = vld [vmem:[%s3 + $0x4] sm:$0xf]
    %v1306 = vld [vmem:[%s3 + $0x8] sm:$0xf]
    %v1307 = vld [vmem:[%s3 + $0xc] sm:$0xf]
    %v1308 = vld [vmem:[%s3 + $0x10] sm:$0xf]
    %v1309 = vld [vmem:[%s3 + $0x14] sm:$0xf]
    %v1310 = vld [vmem:[%s3 + $0x18] sm:$0xf]
    %v1311 = vld [vmem:[%s3 + $0x1c] sm:$0xf]
    %v1312 = vld [vmem:[%s3 + $0x20] sm:$0xf]
    %v1313 = vld [vmem:[%s3 + $0x24] sm:$0xf]
    %v1314 = vld [vmem:[%s3 + $0x28] sm:$0xf]
    %v1315 = vld [vmem:[%s3 + $0x2c] sm:$0xf]
    %v1316 = vld [vmem:[%s3 + $0x30] sm:$0xf]
    %v1317 = vld [vmem:[%s3 + $0x34] sm:$0xf]
    %v1318 = vld [vmem:[%s3 + $0x38] sm:$0xf]
    %v1319 = vld [vmem:[%s3 + $0x3c] sm:$0xf]
    %v1320 = vld [vmem:[%s3 + $0x40] sm:$0xf]
    %v1321 = vld [vmem:[%s3 + $0x44] sm:$0xf]
    %v1322 = vld [vmem:[%s3 + $0x48] sm:$0xf]
    %v1323 = vld [vmem:[%s3 + $0x4c] sm:$0xf]
    %v1324 = vld [vmem:[%s3 + $0x50] sm:$0xf]
    %v1325 = vld [vmem:[%s3 + $0x54] sm:$0xf]
    %v1326 = vld [vmem:[%s3 + $0x58] sm:$0xf]
    %v1327 = vld [vmem:[%s3 + $0x5c] sm:$0xf]
    %v1328 = vld [vmem:[%s3 + $0x60] sm:$0xf]
    %v1329 = vld [vmem:[%s3 + $0x64] sm:$0xf]
    %v1330 = vld [vmem:[%s3 + $0x68] sm:$0xf]
    %v1331 = vld [vmem:[%s3 + $0x6c] sm:$0xf]
    %v1332 = vld [vmem:[%s3 + $0x70] sm:$0xf]
    %v1333 = vld [vmem:[%s3 + $0x74] sm:$0xf]
    %v1334 = vld [vmem:[%s3 + $0x78] sm:$0xf]
    %v1335 = vld [vmem:[%s3 + $0x7c] sm:$0xf]
    %v1336 = vld [vmem:[%s3 + $0x80] sm:$0xf]
    %v1337 = vld [vmem:[%s3 + $0x84] sm:$0xf]
    %v1338 = vld [vmem:[%s3 + $0x88] sm:$0xf]
    %v1339 = vld [vmem:[%s3 + $0x8c] sm:$0xf]
    %v1340 = vld [vmem:[%s3 + $0x90] sm:$0xf]
    %v1341 = vld [vmem:[%s3 + $0x94] sm:$0xf]
    %v1342 = vld [vmem:[%s3 + $0x98] sm:$0xf]
    %v1343 = vld [vmem:[%s3 + $0x9c] sm:$0xf]
    %v1344 = vld [vmem:[%s3 + $0xa0] sm:$0xf]
    %v1345 = vld [vmem:[%s3 + $0xa4] sm:$0xf]
    %v1346 = vld [vmem:[%s3 + $0xa8] sm:$0xf]
    %v1347 = vld [vmem:[%s3 + $0xac] sm:$0xf]
    %v1348 = vld [vmem:[%s3 + $0xb0] sm:$0xf]
    %v1349 = vld [vmem:[%s3 + $0xb4] sm:$0xf]
    %v1350 = vld [vmem:[%s3 + $0xb8] sm:$0xf]
    %v1351 = vld [vmem:[%s3 + $0xbc] sm:$0xf]
    %v1352 = vld [vmem:[%s3 + $0xc0] sm:$0xf]
    %v1353 = vld [vmem:[%s3 + $0xc4] sm:$0xf]
    %v1354 = vld [vmem:[%s3 + $0xc8] sm:$0xf]
    %v1355 = vld [vmem:[%s3 + $0xcc] sm:$0xf]
    %v1356 = vld [vmem:[%s3 + $0xd0] sm:$0xf]
    %v1357 = vld [vmem:[%s3 + $0xd4] sm:$0xf]
    %v1358 = vld [vmem:[%s3 + $0xd8] sm:$0xf]
    %v1359 = vld [vmem:[%s3 + $0xdc] sm:$0xf]
    %v1360 = vld [vmem:[%s3 + $0xe0] sm:$0xf]
    %v1361 = vld [vmem:[%s3 + $0xe4] sm:$0xf]
    %v1362 = vld [vmem:[%s3 + $0xe8] sm:$0xf]
    %v1363 = vld [vmem:[%s3 + $0xec] sm:$0xf]
    %v1364 = vld [vmem:[%s3 + $0xf0] sm:$0xf]
    %v1365 = vld [vmem:[%s3 + $0xf4] sm:$0xf]
    %v1366 = vld [vmem:[%s3 + $0xf8] sm:$0xf]
    %v1367 = vld [vmem:[%s3 + $0xfc] sm:$0xf]
    %v1432 = vunpack.c.l.b16 %v1304
    %v1433 = vunpack.c.l.b16 %v1305
    %v1434 = vunpack.c.l.b16 %v1306
    %v1435 = vunpack.c.l.b16 %v1307
    %v1436 = vunpack.c.l.b16 %v1308
    %v1437 = vunpack.c.l.b16 %v1309
    %v1438 = vunpack.c.l.b16 %v1310
    %v1439 = vunpack.c.l.b16 %v1311
    %v1440 = vunpack.c.l.b16 %v1312
    %v1441 = vunpack.c.l.b16 %v1313
    %v1442 = vunpack.c.l.b16 %v1314
    %v1443 = vunpack.c.l.b16 %v1315
    %v1444 = vunpack.c.l.b16 %v1316
    %v1445 = vunpack.c.l.b16 %v1317
    %v1446 = vunpack.c.l.b16 %v1318
    %v1447 = vunpack.c.l.b16 %v1319
    %v1448 = vunpack.c.l.b16 %v1320
    %v1449 = vunpack.c.l.b16 %v1321
    %v1450 = vunpack.c.l.b16 %v1322
    %v1451 = vunpack.c.l.b16 %v1323
    %v1452 = vunpack.c.l.b16 %v1324
    %v1453 = vunpack.c.l.b16 %v1325
    %v1454 = vunpack.c.l.b16 %v1326
    %v1455 = vunpack.c.l.b16 %v1327
    %v1456 = vunpack.c.l.b16 %v1328
    %v1457 = vunpack.c.l.b16 %v1329
    %v1458 = vunpack.c.l.b16 %v1330
    %v1459 = vunpack.c.l.b16 %v1331
    %v1460 = vunpack.c.l.b16 %v1332
    %v1461 = vunpack.c.l.b16 %v1333
    %v1462 = vunpack.c.l.b16 %v1334
    %v1463 = vunpack.c.l.b16 %v1335
    %v1464 = vunpack.c.l.b16 %v1336
    %v1465 = vunpack.c.l.b16 %v1337
    %v1466 = vunpack.c.l.b16 %v1338
    %v1467 = vunpack.c.l.b16 %v1339
    %v1468 = vunpack.c.l.b16 %v1340
    %v1469 = vunpack.c.l.b16 %v1341
    %v1470 = vunpack.c.l.b16 %v1342
    %v1471 = vunpack.c.l.b16 %v1343
    %v1472 = vunpack.c.l.b16 %v1344
    %v1473 = vunpack.c.l.b16 %v1345
    %v1474 = vunpack.c.l.b16 %v1346
    %v1475 = vunpack.c.l.b16 %v1347
    %v1476 = vunpack.c.l.b16 %v1348
    %v1477 = vunpack.c.l.b16 %v1349
    %v1478 = vunpack.c.l.b16 %v1350
    %v1479 = vunpack.c.l.b16 %v1351
    %v1480 = vunpack.c.l.b16 %v1352
    %v1481 = vunpack.c.l.b16 %v1353
    %v1482 = vunpack.c.l.b16 %v1354
    %v1483 = vunpack.c.l.b16 %v1355
    %v1484 = vunpack.c.l.b16 %v1356
    %v1485 = vunpack.c.l.b16 %v1357
    %v1486 = vunpack.c.l.b16 %v1358
    %v1487 = vunpack.c.l.b16 %v1359
    %v1488 = vunpack.c.l.b16 %v1360
    %v1489 = vunpack.c.l.b16 %v1361
    %v1490 = vunpack.c.l.b16 %v1362
    %v1491 = vunpack.c.l.b16 %v1363
    %v1492 = vunpack.c.l.b16 %v1364
    %v1493 = vunpack.c.l.b16 %v1365
    %v1494 = vunpack.c.l.b16 %v1366
    %v1495 = vunpack.c.l.b16 %v1367
    %v1496 = vpack.c.b16 %v1433, %v1432
    %v1497 = vpack.c.b16 %v1435, %v1434
    %v1498 = vpack.c.b16 %v1437, %v1436
    %v1499 = vpack.c.b16 %v1439, %v1438
    %v1500 = vpack.c.b16 %v1441, %v1440
    %v1501 = vpack.c.b16 %v1443, %v1442
    %v1502 = vpack.c.b16 %v1445, %v1444
    %v1503 = vpack.c.b16 %v1447, %v1446
    %v1504 = vpack.c.b16 %v1449, %v1448
    %v1505 = vpack.c.b16 %v1451, %v1450
    %v1506 = vpack.c.b16 %v1453, %v1452
    %v1507 = vpack.c.b16 %v1455, %v1454
    %v1508 = vpack.c.b16 %v1457, %v1456
    %v1509 = vpack.c.b16 %v1459, %v1458
    %v1510 = vpack.c.b16 %v1461, %v1460
    %v1511 = vpack.c.b16 %v1463, %v1462
    %v1512 = vpack.c.b16 %v1465, %v1464
    %v1513 = vpack.c.b16 %v1467, %v1466
    %v1514 = vpack.c.b16 %v1469, %v1468
    %v1515 = vpack.c.b16 %v1471, %v1470
    %v1516 = vpack.c.b16 %v1473, %v1472
    %v1517 = vpack.c.b16 %v1475, %v1474
    %v1518 = vpack.c.b16 %v1477, %v1476
    %v1519 = vpack.c.b16 %v1479, %v1478
    %v1520 = vpack.c.b16 %v1481, %v1480
    %v1521 = vpack.c.b16 %v1483, %v1482
    %v1522 = vpack.c.b16 %v1485, %v1484
    %v1523 = vpack.c.b16 %v1487, %v1486
    %v1524 = vpack.c.b16 %v1489, %v1488
    %v1525 = vpack.c.b16 %v1491, %v1490
    %v1526 = vpack.c.b16 %v1493, %v1492
    %v1527 = vpack.c.b16 %v1495, %v1494
    %1560 = vmatprep.subr.bf16.mxu0 0
    %1561 = vmatpush1.bf16.msra.mxu0 %v1496
    %1562 = vmatprep.subr.bf16.mxu0 0
    %1563 = vmatpush1.bf16.msra.mxu0 %v1497
    %1564 = vmatprep.subr.bf16.mxu0 0
    %1565 = vmatpush1.bf16.msra.mxu0 %v1498
    %1566 = vmatprep.subr.bf16.mxu0 0
    %1567 = vmatpush1.bf16.msra.mxu0 %v1499
    %1568 = vmatprep.subr.bf16.mxu0 0
    %1569 = vmatpush1.bf16.msra.mxu0 %v1500
    %1570 = vmatprep.subr.bf16.mxu0 0
    %1571 = vmatpush1.bf16.msra.mxu0 %v1501
    %1572 = vmatprep.subr.bf16.mxu0 0
    %1573 = vmatpush1.bf16.msra.mxu0 %v1502
    %1574 = vmatprep.subr.bf16.mxu0 0
    %1575 = vmatpush1.bf16.msra.mxu0 %v1503
    %1576 = vmatprep.subr.bf16.mxu0 0
    %1577 = vmatpush1.bf16.msra.mxu0 %v1504
    %1578 = vmatprep.subr.bf16.mxu0 0
    %1579 = vmatpush1.bf16.msra.mxu0 %v1505
    %1580 = vmatprep.subr.bf16.mxu0 0
    %1581 = vmatpush1.bf16.msra.mxu0 %v1506
    %1582 = vmatprep.subr.bf16.mxu0 0
    %1583 = vmatpush1.bf16.msra.mxu0 %v1507
    %1584 = vmatprep.subr.bf16.mxu0 0
    %1585 = vmatpush1.bf16.msra.mxu0 %v1508
    %1586 = vmatprep.subr.bf16.mxu0 0
    %1587 = vmatpush1.bf16.msra.mxu0 %v1509
    %1588 = vmatprep.subr.bf16.mxu0 0
    %1589 = vmatpush1.bf16.msra.mxu0 %v1510
    %1590 = vmatprep.subr.bf16.mxu0 0
    %1591 = vmatpush1.bf16.msra.mxu0 %v1511
    %1592 = vmatprep.mubr.bf16.mxu0 %v1301
    %1593 = vmatmul.mubr.bf16.gmra.mrb[0].mxu0 %v1300
    %v1594 = vpop.f32.mrb[0].mxu0
    %v1595 = vadd.f32 0.0, %v1594
    %v1596 = vpop.f32.mrb[0].mxu0
    %v1597 = vpop.f32.mrb[0].mxu0
    %v1598 = vadd.f32 0.0, %v1597
    %v1599 = vpop.f32.mrb[0].mxu0
    %1600 = vdwg.mxu0
    %1601 = vmatprep.subr.bf16.mxu0 0
    %1602 = vmatpush1.bf16.msra.mxu0 %v1512
    %1603 = vmatprep.subr.bf16.mxu0 0
    %1604 = vmatpush1.bf16.msra.mxu0 %v1513
    %1605 = vmatprep.subr.bf16.mxu0 0
    %1606 = vmatpush1.bf16.msra.mxu0 %v1514
    %1607 = vmatprep.subr.bf16.mxu0 0
    %1608 = vmatpush1.bf16.msra.mxu0 %v1515
    %1609 = vmatprep.subr.bf16.mxu0 0
    %1610 = vmatpush1.bf16.msra.mxu0 %v1516
    %1611 = vmatprep.subr.bf16.mxu0 0
    %1612 = vmatpush1.bf16.msra.mxu0 %v1517
    %1613 = vmatprep.subr.bf16.mxu0 0
    %1614 = vmatpush1.bf16.msra.mxu0 %v1518
    %1615 = vmatprep.subr.bf16.mxu0 0
    %1616 = vmatpush1.bf16.msra.mxu0 %v1519
    %1617 = vmatprep.subr.bf16.mxu0 0
    %1618 = vmatpush1.bf16.msra.mxu0 %v1520
    %1619 = vmatprep.subr.bf16.mxu0 0
    %1620 = vmatpush1.bf16.msra.mxu0 %v1521
    %1621 = vmatprep.subr.bf16.mxu0 0
    %1622 = vmatpush1.bf16.msra.mxu0 %v1522
    %1623 = vmatprep.subr.bf16.mxu0 0
    %1624 = vmatpush1.bf16.msra.mxu0 %v1523
    %1625 = vmatprep.subr.bf16.mxu0 0
    %1626 = vmatpush1.bf16.msra.mxu0 %v1524
    %1627 = vmatprep.subr.bf16.mxu0 0
    %1628 = vmatpush1.bf16.msra.mxu0 %v1525
    %1629 = vmatprep.subr.bf16.mxu0 0
    %1630 = vmatpush1.bf16.msra.mxu0 %v1526
    %1631 = vmatprep.subr.bf16.mxu0 0
    %1632 = vmatpush1.bf16.msra.mxu0 %v1527
    %1633 = vmatprep.mubr.bf16.mxu0 %v1303
    %1634 = vmatmul.mubr.bf16.gmra.mrb[0].mxu0 %v1302
    %v1635 = vpop.f32.mrb[0].mxu0
    %v1636 = vadd.f32 %v1595, %v1635
    %v1637 = vpop.f32.mrb[0].mxu0
    %v1638 = vpop.f32.mrb[0].mxu0
    %v1639 = vadd.f32 %v1598, %v1638
    %v1640 = vpop.f32.mrb[0].mxu0
    %1641 = vdwg.mxu0
    %1642 = vxpose.xlu0.b32.start [1/16] %v1636, 128
    %1643 = vxpose.xlu0.b32.cont [2/16] %v1639, 128
    %1644 = vxpose.xlu0.b32.cont [3/16] 0.0, 128
    %1645 = vxpose.xlu0.b32.cont [4/16] 0.0, 128
    %1646 = vxpose.xlu0.b32.cont [5/16] 0.0, 128
    %1647 = vxpose.xlu0.b32.cont [6/16] 0.0, 128
    %1648 = vxpose.xlu0.b32.cont [7/16] 0.0, 128
    %1649 = vxpose.xlu0.b32.cont [8/16] 0.0, 128
    %1650 = vxpose.xlu0.b32.cont [9/16] 0.0, 128
    %1651 = vxpose.xlu0.b32.cont [10/16] 0.0, 128
    %1652 = vxpose.xlu0.b32.cont [11/16] 0.0, 128
    %1653 = vxpose.xlu0.b32.cont [12/16] 0.0, 128
    %1654 = vxpose.xlu0.b32.cont [13/16] 0.0, 128
    %1655 = vxpose.xlu0.b32.cont [14/16] 0.0, 128
    %1656 = vxpose.xlu0.b32.cont [15/16] 0.0, 128
    %1657 = vxpose.xlu0.b32.end [16/16] 0.0, 128
    %v1658 = vpop.trf.xlu0
    %v1659 = vpop.trf.xlu0
    %v1660 = vpop.trf.xlu0
    %v1661 = vpop.trf.xlu0
    %v1662 = vpop.trf.xlu0
    %v1663 = vpop.trf.xlu0
    %v1664 = vpop.trf.xlu0
    %v1665 = vpop.trf.xlu0
    %v1666 = vpop.trf.xlu0
    %v1667 = vpop.trf.xlu0
    %v1668 = vpop.trf.xlu0
    %v1669 = vpop.trf.xlu0
    %v1670 = vpop.trf.xlu0
    %v1671 = vpop.trf.xlu0
    %v1672 = vpop.trf.xlu0
    %v1673 = vpop.trf.xlu0
    %1675 = vset.pattern.permute.xlu0 4
    %1676 = vperm.xlu0 %1675, %v1636
    %v1677 = vpop.permute.xlu0 %1676
    %1680 = vset.pattern.permute.xlu0 4
    %1681 = vperm.xlu0 %1680, %v1639
    %v1682 = vpop.permute.xlu0 %1681
    %v1684 = vlaneseq
    %v1685 = vshrl.u32 %v1684, 7
    %v1686 = vsub.s32 0, %v1685
    %v1687 = vrot.slane %v1658, %v1686
    %v1688 = vadd.f32 %v1677, %v1687
    %v1689 = vadd.f32 %v1682, %v1687
    %vm1690 = vcmp.gt.f32.partialorder %v1688, 0.0
    %vm1691 = vcmp.gt.f32.partialorder %v1689, 0.0
    %v1692 = vmul.f32 %v1688, 0.2
    %v1693 = vmul.f32 %v1689, 0.2
    %v1694 = vsel %vm1690, %v1688, %v1692
    %v1695 = vsel %vm1691, %v1689, %v1693
    %v1696 = vsel %vm347, %v1694, -1e+30
    %v1697 = vsel %vm348, %v1695, -1e+30
    %vm1698 = vcmask 130048
    %v1699 = vsel %vm1698, %v1696, -inf
    %1700 = vmax.xlane.f32.xlu0 %v1699
    %v1701 = vpop.xlane.xlu0 %1700
    %v1702 = vsel %vm1698, %v1697, -inf
    %1703 = vmax.xlane.f32.xlu0 %v1702
    %v1704 = vpop.xlane.xlu0 %1703
    %v1705 = vsub.f32 %v1696, %v1701
    %v1706 = vsub.f32 %v1697, %v1704
    %v1707 = vmul.f32 %v1705, 1.442695
    %v1708 = vpow.pop %v1707
    %v1709 = vmul.f32 %v1706, 1.442695
    %v1710 = vpow.pop %v1709
    %v1711 = vsel %vm347, %v1708, 0.0
    %v1712 = vsel %vm348, %v1710, 0.0
    %v1713 = vsel %vm1698, %v1711, 0.0
    %1714 = vadd.xlane.f32.xlu0 %v1713
    %v1715 = vpop.xlane.xlu0 %1714
    %v1716 = vsel %vm1698, %v1712, 0.0
    %1717 = vadd.xlane.f32.xlu0 %v1716
    %v1718 = vpop.xlane.xlu0 %1717
    %v1719 = vrcp.pop %v1715
    %v1720 = vrcp.pop %v1718
    %v1721 = vmul.f32 %v1711, %v1719
    %v1722 = vmul.f32 %v1712, %v1720
    %v1723 = vpack.c.bf16 %v1722, %v1721
    %v1725 = vsel %vm1698, %v1723, 0
    %1727 = vmatprep.subr.bf16.mxu0 0
    %1728 = vmatpush1.bf16.msra.mxu0 %v1300
    %1729 = vmatprep.subr.bf16.mxu0 0
    %1730 = vmatpush1.bf16.msra.mxu0 0
    %1731 = vmatprep.subr.bf16.mxu0 0
    %1732 = vmatpush1.bf16.msra.mxu0 0
    %1733 = vmatprep.subr.bf16.mxu0 0
    %1734 = vmatpush1.bf16.msra.mxu0 0
    %1735 = vmatprep.subr.bf16.mxu0 0
    %1736 = vmatpush1.bf16.msra.mxu0 0
    %1737 = vmatprep.subr.bf16.mxu0 0
    %1738 = vmatpush1.bf16.msra.mxu0 0
    %1739 = vmatprep.subr.bf16.mxu0 0
    %1740 = vmatpush1.bf16.msra.mxu0 0
    %1741 = vmatprep.subr.bf16.mxu0 0
    %1742 = vmatpush1.bf16.msra.mxu0 0
    %1743 = vmatprep.subr.bf16.mxu0 0
    %1744 = vmatpush1.bf16.msra.mxu0 0
    %1745 = vmatprep.subr.bf16.mxu0 0
    %1746 = vmatpush1.bf16.msra.mxu0 0
    %1747 = vmatprep.subr.bf16.mxu0 0
    %1748 = vmatpush1.bf16.msra.mxu0 0
    %1749 = vmatprep.subr.bf16.mxu0 0
    %1750 = vmatpush1.bf16.msra.mxu0 0
    %1751 = vmatprep.subr.bf16.mxu0 0
    %1752 = vmatpush1.bf16.msra.mxu0 0
    %1753 = vmatprep.subr.bf16.mxu0 0
    %1754 = vmatpush1.bf16.msra.mxu0 0
    %1755 = vmatprep.subr.bf16.mxu0 0
    %1756 = vmatpush1.bf16.msra.mxu0 0
    %1757 = vmatprep.subr.bf16.mxu0 0
    %1758 = vmatpush1.bf16.msra.mxu0 0
    %1759 = vmatprep.mubr.bf16.mxu0 0
    %1760 = vmatmul.mubr.bf16.gmra.mrb[0].mxu0 %v1725
    %v1761 = vpop.f32.mrb[0].mxu0
    %v1762 = vadd.f32 0.0, %v1761
    %v1763 = vpop.f32.mrb[0].mxu0
    %v1764 = vpop.f32.mrb[0].mxu0
    %v1765 = vadd.f32 0.0, %v1764
    %v1766 = vpop.f32.mrb[0].mxu0
    %1767 = vdwg.mxu0
    %1768 = vst [vmem:[#allocation5] sm:$0xff] %v1762
    %1769 = vst [vmem:[#allocation5 + $0x20] sm:$0xff] %v1765
    %1770 = vset.pattern.permute.xlu0 5
    %1771 = vperm.xlu0 %1770, %v1636
    %v1772 = vpop.permute.xlu0 %1771
    %1774 = vset.pattern.permute.xlu0 5
    %1775 = vperm.xlu0 %1774, %v1639
    %v1776 = vpop.permute.xlu0 %1775
    %v1778 = vlaneseq
    %v1779 = vshrl.u32 %v1778, 7
    %v1780 = vsub.s32 1, %v1779
    %v1781 = vrot.slane %v1658, %v1780
    %v1782 = vadd.f32 %v1772, %v1781
    %v1783 = vadd.f32 %v1776, %v1781
    %vm1784 = vcmp.gt.f32.partialorder %v1782, 0.0
    %vm1785 = vcmp.gt.f32.partialorder %v1783, 0.0
    %v1786 = vmul.f32 %v1782, 0.2
    %v1787 = vmul.f32 %v1783, 0.2
    %v1788 = vsel %vm1784, %v1782, %v1786
    %v1789 = vsel %vm1785, %v1783, %v1787
    %v1790 = vsel %vm347, %v1788, -1e+30
    %v1791 = vsel %vm348, %v1789, -1e+30
    %v1792 = vsel %vm1698, %v1790, -inf
    %1793 = vmax.xlane.f32.xlu0 %v1792
    %v1794 = vpop.xlane.xlu0 %1793
    %v1795 = vsel %vm1698, %v1791, -inf
    %1796 = vmax.xlane.f32.xlu0 %v1795
    %v1797 = vpop.xlane.xlu0 %1796
    %v1798 = vsub.f32 %v1790, %v1794
    %v1799 = vsub.f32 %v1791, %v1797
    %v1800 = vmul.f32 %v1798, 1.442695
    %v1801 = vpow.pop %v1800
    %v1802 = vmul.f32 %v1799, 1.442695
    %v1803 = vpow.pop %v1802
    %v1804 = vsel %vm347, %v1801, 0.0
    %v1805 = vsel %vm348, %v1803, 0.0
    %v1806 = vsel %vm1698, %v1804, 0.0
    %1807 = vadd.xlane.f32.xlu0 %v1806
    %v1808 = vpop.xlane.xlu0 %1807
    %v1809 = vsel %vm1698, %v1805, 0.0
    %1810 = vadd.xlane.f32.xlu0 %v1809
    %v1811 = vpop.xlane.xlu0 %1810
    %v1812 = vrcp.pop %v1808
    %v1813 = vrcp.pop %v1811
    %v1814 = vmul.f32 %v1804, %v1812
    %v1815 = vmul.f32 %v1805, %v1813
    %v1816 = vpack.c.bf16 %v1815, %v1814
    %v1818 = vsel %vm1698, %v1816, 0
    %1820 = vmatprep.subr.bf16.mxu0 0
    %1821 = vmatpush1.bf16.msra.mxu0 %v1301
    %1822 = vmatprep.subr.bf16.mxu0 0
    %1823 = vmatpush1.bf16.msra.mxu0 0
    %1824 = vmatprep.subr.bf16.mxu0 0
    %1825 = vmatpush1.bf16.msra.mxu0 0
    %1826 = vmatprep.subr.bf16.mxu0 0
    %1827 = vmatpush1.bf16.msra.mxu0 0
    %1828 = vmatprep.subr.bf16.mxu0 0
    %1829 = vmatpush1.bf16.msra.mxu0 0
    %1830 = vmatprep.subr.bf16.mxu0 0
    %1831 = vmatpush1.bf16.msra.mxu0 0
    %1832 = vmatprep.subr.bf16.mxu0 0
    %1833 = vmatpush1.bf16.msra.mxu0 0
    %1834 = vmatprep.subr.bf16.mxu0 0
    %1835 = vmatpush1.bf16.msra.mxu0 0
    %1836 = vmatprep.subr.bf16.mxu0 0
    %1837 = vmatpush1.bf16.msra.mxu0 0
    %1838 = vmatprep.subr.bf16.mxu0 0
    %1839 = vmatpush1.bf16.msra.mxu0 0
    %1840 = vmatprep.subr.bf16.mxu0 0
    %1841 = vmatpush1.bf16.msra.mxu0 0
    %1842 = vmatprep.subr.bf16.mxu0 0
    %1843 = vmatpush1.bf16.msra.mxu0 0
    %1844 = vmatprep.subr.bf16.mxu0 0
    %1845 = vmatpush1.bf16.msra.mxu0 0
    %1846 = vmatprep.subr.bf16.mxu0 0
    %1847 = vmatpush1.bf16.msra.mxu0 0
    %1848 = vmatprep.subr.bf16.mxu0 0
    %1849 = vmatpush1.bf16.msra.mxu0 0
    %1850 = vmatprep.subr.bf16.mxu0 0
    %1851 = vmatpush1.bf16.msra.mxu0 0
    %1852 = vmatprep.mubr.bf16.mxu0 0
    %1853 = vmatmul.mubr.bf16.gmra.mrb[0].mxu0 %v1818
    %v1854 = vpop.f32.mrb[0].mxu0
    %v1855 = vadd.f32 0.0, %v1854
    %v1856 = vpop.f32.mrb[0].mxu0
    %v1857 = vpop.f32.mrb[0].mxu0
    %v1858 = vadd.f32 0.0, %v1857
    %v1859 = vpop.f32.mrb[0].mxu0
    %1860 = vdwg.mxu0
    %1861 = vst [vmem:[#allocation5 + $0x8] sm:$0xff] %v1855
    %1862 = vst [vmem:[#allocation5 + $0x28] sm:$0xff] %v1858
    %1863 = vset.pattern.permute.xlu0 6
    %1864 = vperm.xlu0 %1863, %v1636
    %v1865 = vpop.permute.xlu0 %1864
    %1867 = vset.pattern.permute.xlu0 6
    %1868 = vperm.xlu0 %1867, %v1639
    %v1869 = vpop.permute.xlu0 %1868
    %v1871 = vlaneseq
    %v1872 = vshrl.u32 %v1871, 7
    %v1873 = vsub.s32 2, %v1872
    %v1874 = vrot.slane %v1658, %v1873
    %v1875 = vadd.f32 %v1865, %v1874
    %v1876 = vadd.f32 %v1869, %v1874
    %vm1877 = vcmp.gt.f32.partialorder %v1875, 0.0
    %vm1878 = vcmp.gt.f32.partialorder %v1876, 0.0
    %v1879 = vmul.f32 %v1875, 0.2
    %v1880 = vmul.f32 %v1876, 0.2
    %v1881 = vsel %vm1877, %v1875, %v1879
    %v1882 = vsel %vm1878, %v1876, %v1880
    %v1883 = vsel %vm347, %v1881, -1e+30
    %v1884 = vsel %vm348, %v1882, -1e+30
    %v1885 = vsel %vm1698, %v1883, -inf
    %1886 = vmax.xlane.f32.xlu0 %v1885
    %v1887 = vpop.xlane.xlu0 %1886
    %v1888 = vsel %vm1698, %v1884, -inf
    %1889 = vmax.xlane.f32.xlu0 %v1888
    %v1890 = vpop.xlane.xlu0 %1889
    %v1891 = vsub.f32 %v1883, %v1887
    %v1892 = vsub.f32 %v1884, %v1890
    %v1893 = vmul.f32 %v1891, 1.442695
    %v1894 = vpow.pop %v1893
    %v1895 = vmul.f32 %v1892, 1.442695
    %v1896 = vpow.pop %v1895
    %v1897 = vsel %vm347, %v1894, 0.0
    %v1898 = vsel %vm348, %v1896, 0.0
    %v1899 = vsel %vm1698, %v1897, 0.0
    %1900 = vadd.xlane.f32.xlu0 %v1899
    %v1901 = vpop.xlane.xlu0 %1900
    %v1902 = vsel %vm1698, %v1898, 0.0
    %1903 = vadd.xlane.f32.xlu0 %v1902
    %v1904 = vpop.xlane.xlu0 %1903
    %v1905 = vrcp.pop %v1901
    %v1906 = vrcp.pop %v1904
    %v1907 = vmul.f32 %v1897, %v1905
    %v1908 = vmul.f32 %v1898, %v1906
    %v1909 = vpack.c.bf16 %v1908, %v1907
    %v1911 = vsel %vm1698, %v1909, 0
    %1913 = vmatprep.subr.bf16.mxu0 0
    %1914 = vmatpush1.bf16.msra.mxu0 %v1302
    %1915 = vmatprep.subr.bf16.mxu0 0
    %1916 = vmatpush1.bf16.msra.mxu0 0
    %1917 = vmatprep.subr.bf16.mxu0 0
    %1918 = vmatpush1.bf16.msra.mxu0 0
    %1919 = vmatprep.subr.bf16.mxu0 0
    %1920 = vmatpush1.bf16.msra.mxu0 0
    %1921 = vmatprep.subr.bf16.mxu0 0
    %1922 = vmatpush1.bf16.msra.mxu0 0
    %1923 = vmatprep.subr.bf16.mxu0 0
    %1924 = vmatpush1.bf16.msra.mxu0 0
    %1925 = vmatprep.subr.bf16.mxu0 0
    %1926 = vmatpush1.bf16.msra.mxu0 0
    %1927 = vmatprep.subr.bf16.mxu0 0
    %1928 = vmatpush1.bf16.msra.mxu0 0
    %1929 = vmatprep.subr.bf16.mxu0 0
    %1930 = vmatpush1.bf16.msra.mxu0 0
    %1931 = vmatprep.subr.bf16.mxu0 0
    %1932 = vmatpush1.bf16.msra.mxu0 0
    %1933 = vmatprep.subr.bf16.mxu0 0
    %1934 = vmatpush1.bf16.msra.mxu0 0
    %1935 = vmatprep.subr.bf16.mxu0 0
    %1936 = vmatpush1.bf16.msra.mxu0 0
    %1937 = vmatprep.subr.bf16.mxu0 0
    %1938 = vmatpush1.bf16.msra.mxu0 0
    %1939 = vmatprep.subr.bf16.mxu0 0
    %1940 = vmatpush1.bf16.msra.mxu0 0
    %1941 = vmatprep.subr.bf16.mxu0 0
    %1942 = vmatpush1.bf16.msra.mxu0 0
    %1943 = vmatprep.subr.bf16.mxu0 0
    %1944 = vmatpush1.bf16.msra.mxu0 0
    %1945 = vmatprep.mubr.bf16.mxu0 0
    %1946 = vmatmul.mubr.bf16.gmra.mrb[0].mxu0 %v1911
    %v1947 = vpop.f32.mrb[0].mxu0
    %v1948 = vadd.f32 0.0, %v1947
    %v1949 = vpop.f32.mrb[0].mxu0
    %v1950 = vpop.f32.mrb[0].mxu0
    %v1951 = vadd.f32 0.0, %v1950
    %v1952 = vpop.f32.mrb[0].mxu0
    %1953 = vdwg.mxu0
    %1954 = vst [vmem:[#allocation5 + $0x10] sm:$0xff] %v1948
    %1955 = vst [vmem:[#allocation5 + $0x30] sm:$0xff] %v1951
    %1956 = vset.pattern.permute.xlu0 7
    %1957 = vperm.xlu0 %1956, %v1636
    %v1958 = vpop.permute.xlu0 %1957
    %1960 = vset.pattern.permute.xlu0 7
    %1961 = vperm.xlu0 %1960, %v1639
    %v1962 = vpop.permute.xlu0 %1961
    %v1964 = vlaneseq
    %v1965 = vshrl.u32 %v1964, 7
    %v1966 = vsub.s32 3, %v1965
    %v1967 = vrot.slane %v1658, %v1966
    %v1968 = vadd.f32 %v1958, %v1967
    %v1969 = vadd.f32 %v1962, %v1967
    %vm1970 = vcmp.gt.f32.partialorder %v1968, 0.0
    %vm1971 = vcmp.gt.f32.partialorder %v1969, 0.0
    %v1972 = vmul.f32 %v1968, 0.2
    %v1973 = vmul.f32 %v1969, 0.2
    %v1974 = vsel %vm1970, %v1968, %v1972
    %v1975 = vsel %vm1971, %v1969, %v1973
    %v1976 = vsel %vm347, %v1974, -1e+30
    %v1977 = vsel %vm348, %v1975, -1e+30
    %v1978 = vsel %vm1698, %v1976, -inf
    %1979 = vmax.xlane.f32.xlu0 %v1978
    %v1980 = vpop.xlane.xlu0 %1979
    %v1981 = vsel %vm1698, %v1977, -inf
    %1982 = vmax.xlane.f32.xlu0 %v1981
    %v1983 = vpop.xlane.xlu0 %1982
    %v1984 = vsub.f32 %v1976, %v1980
    %v1985 = vsub.f32 %v1977, %v1983
    %v1986 = vmul.f32 %v1984, 1.442695
    %v1987 = vpow.pop %v1986
    %v1988 = vmul.f32 %v1985, 1.442695
    %v1989 = vpow.pop %v1988
    %v1990 = vsel %vm347, %v1987, 0.0
    %v1991 = vsel %vm348, %v1989, 0.0
    %v1992 = vsel %vm1698, %v1990, 0.0
    %1993 = vadd.xlane.f32.xlu0 %v1992
    %v1994 = vpop.xlane.xlu0 %1993
    %v1995 = vsel %vm1698, %v1991, 0.0
    %1996 = vadd.xlane.f32.xlu0 %v1995
    %v1997 = vpop.xlane.xlu0 %1996
    %v1998 = vrcp.pop %v1994
    %v1999 = vrcp.pop %v1997
    %v2000 = vmul.f32 %v1990, %v1998
    %v2001 = vmul.f32 %v1991, %v1999
    %v2002 = vpack.c.bf16 %v2001, %v2000
    %v2004 = vsel %vm1698, %v2002, 0
    %2006 = vmatprep.subr.bf16.mxu0 0
    %2007 = vmatpush1.bf16.msra.mxu0 %v1303
    %2008 = vmatprep.subr.bf16.mxu0 0
    %2009 = vmatpush1.bf16.msra.mxu0 0
    %2010 = vmatprep.subr.bf16.mxu0 0
    %2011 = vmatpush1.bf16.msra.mxu0 0
    %2012 = vmatprep.subr.bf16.mxu0 0
    %2013 = vmatpush1.bf16.msra.mxu0 0
    %2014 = vmatprep.subr.bf16.mxu0 0
    %2015 = vmatpush1.bf16.msra.mxu0 0
    %2016 = vmatprep.subr.bf16.mxu0 0
    %2017 = vmatpush1.bf16.msra.mxu0 0
    %2018 = vmatprep.subr.bf16.mxu0 0
    %2019 = vmatpush1.bf16.msra.mxu0 0
    %2020 = vmatprep.subr.bf16.mxu0 0
    %2021 = vmatpush1.bf16.msra.mxu0 0
    %2022 = vmatprep.subr.bf16.mxu0 0
    %2023 = vmatpush1.bf16.msra.mxu0 0
    %2024 = vmatprep.subr.bf16.mxu0 0
    %2025 = vmatpush1.bf16.msra.mxu0 0
    %2026 = vmatprep.subr.bf16.mxu0 0
    %2027 = vmatpush1.bf16.msra.mxu0 0
    %2028 = vmatprep.subr.bf16.mxu0 0
    %2029 = vmatpush1.bf16.msra.mxu0 0
    %2030 = vmatprep.subr.bf16.mxu0 0
    %2031 = vmatpush1.bf16.msra.mxu0 0
    %2032 = vmatprep.subr.bf16.mxu0 0
    %2033 = vmatpush1.bf16.msra.mxu0 0
    %2034 = vmatprep.subr.bf16.mxu0 0
    %2035 = vmatpush1.bf16.msra.mxu0 0
    %2036 = vmatprep.subr.bf16.mxu0 0
    %2037 = vmatpush1.bf16.msra.mxu0 0
    %2038 = vmatprep.mubr.bf16.mxu0 0
    %2039 = vmatmul.mubr.bf16.gmra.mrb[0].mxu0 %v2004
    %v2040 = vpop.f32.mrb[0].mxu0
    %v2041 = vadd.f32 0.0, %v2040
    %v2042 = vpop.f32.mrb[0].mxu0
    %v2043 = vpop.f32.mrb[0].mxu0
    %v2044 = vadd.f32 0.0, %v2043
    %v2045 = vpop.f32.mrb[0].mxu0
    %2046 = vdwg.mxu0
    %2047 = vst [vmem:[#allocation5 + $0x18] sm:$0xff] %v2041
    %2048 = vst [vmem:[#allocation5 + $0x38] sm:$0xff] %v2044
    %v2049 = vld [vmem:[#allocation5] sm:$0xff]
    %v2050 = vld [vmem:[#allocation5 + $0x8] sm:$0xff]
    %v2051 = vld [vmem:[#allocation5 + $0x10] sm:$0xff]
    %v2052 = vld [vmem:[#allocation5 + $0x18] sm:$0xff]
    %v2053 = vld [vmem:[#allocation5 + $0x20] sm:$0xff]
    %v2054 = vld [vmem:[#allocation5 + $0x28] sm:$0xff]
    %v2055 = vld [vmem:[#allocation5 + $0x30] sm:$0xff]
    %v2056 = vld [vmem:[#allocation5 + $0x38] sm:$0xff]
    %v2057 = vld [vmem:[#allocation14] sm:$0xf]
    %v2059 = vlaneseq
    %v2060 = vshrl.u32 %v2059, 7
    %v2061 = vsub.s32 0, %v2060
    %v2062 = vrot.slane %v2057, %v2061
    %v2063 = vlaneseq
    %v2064 = vshrl.u32 %v2063, 7
    %v2065 = vsub.s32 1, %v2064
    %v2066 = vrot.slane %v2057, %v2065
    %v2067 = vlaneseq
    %v2068 = vshrl.u32 %v2067, 7
    %v2069 = vsub.s32 2, %v2068
    %v2070 = vrot.slane %v2057, %v2069
    %v2071 = vlaneseq
    %v2072 = vshrl.u32 %v2071, 7
    %v2073 = vsub.s32 3, %v2072
    %v2074 = vrot.slane %v2057, %v2073
    %v2079 = vadd.f32 %v2049, %v2062
    %v2080 = vadd.f32 %v2050, %v2066
    %v2081 = vadd.f32 %v2051, %v2070
    %v2082 = vadd.f32 %v2052, %v2074
    %v2083 = vadd.f32 %v2053, %v2062
    %v2084 = vadd.f32 %v2054, %v2066
    %v2085 = vadd.f32 %v2055, %v2070
    %v2086 = vadd.f32 %v2056, %v2074
    %vm2087 = vcmp.gt.f32.partialorder %v2079, 0.0
    %vm2088 = vcmp.gt.f32.partialorder %v2080, 0.0
    %vm2089 = vcmp.gt.f32.partialorder %v2081, 0.0
    %vm2090 = vcmp.gt.f32.partialorder %v2082, 0.0
    %vm2091 = vcmp.gt.f32.partialorder %v2083, 0.0
    %vm2092 = vcmp.gt.f32.partialorder %v2084, 0.0
    %vm2093 = vcmp.gt.f32.partialorder %v2085, 0.0
    %vm2094 = vcmp.gt.f32.partialorder %v2086, 0.0
    %v2095 = vmul.f32 %v2079, 1.442695
    %v2096 = vpow.pop %v2095
    %v2097 = vmul.f32 %v2080, 1.442695
    %v2098 = vpow.pop %v2097
    %v2099 = vmul.f32 %v2081, 1.442695
    %v2100 = vpow.pop %v2099
    %v2101 = vmul.f32 %v2082, 1.442695
    %v2102 = vpow.pop %v2101
    %v2103 = vmul.f32 %v2083, 1.442695
    %v2104 = vpow.pop %v2103
    %v2105 = vmul.f32 %v2084, 1.442695
    %v2106 = vpow.pop %v2105
    %v2107 = vmul.f32 %v2085, 1.442695
    %v2108 = vpow.pop %v2107
    %v2109 = vmul.f32 %v2086, 1.442695
    %v2110 = vpow.pop %v2109
    %v2111 = vsub.f32 %v2096, 1.0
    %v2112 = vsub.f32 %v2098, 1.0
    %v2113 = vsub.f32 %v2100, 1.0
    %v2114 = vsub.f32 %v2102, 1.0
    %v2115 = vsub.f32 %v2104, 1.0
    %v2116 = vsub.f32 %v2106, 1.0
    %v2117 = vsub.f32 %v2108, 1.0
    %v2118 = vsub.f32 %v2110, 1.0
    %v2119 = vsel %vm2087, %v2079, %v2111
    %v2120 = vsel %vm2088, %v2080, %v2112
    %v2121 = vsel %vm2089, %v2081, %v2113
    %v2122 = vsel %vm2090, %v2082, %v2114
    %v2123 = vsel %vm2091, %v2083, %v2115
    %v2124 = vsel %vm2092, %v2084, %v2116
    %v2125 = vsel %vm2093, %v2085, %v2117
    %v2126 = vsel %vm2094, %v2086, %v2118
    %v2127 = vpack.c.bf16 %v2123, %v2119
    %v2128 = vpack.c.bf16 %v2124, %v2120
    %v2129 = vpack.c.bf16 %v2125, %v2121
    %v2130 = vpack.c.bf16 %v2126, %v2122
    %s2131 = smul.u32 4, 64
    %s2132 = smul.u32 %s2131, 4
    %s2133 = sshll.u32 %s2132, 4
    %2134 = dma.done [#allocation8], %s2133
    %v2135 = vld [vmem:[#allocation3] sm:$0xff]
    %v2136 = vld [vmem:[#allocation3 + $0x8] sm:$0xff]
    %v2137 = vld [vmem:[#allocation3 + $0x10] sm:$0xff]
    %v2138 = vld [vmem:[#allocation3 + $0x18] sm:$0xff]
    %v2139 = vld [vmem:[#allocation3 + $0x20] sm:$0xff]
    %v2140 = vld [vmem:[#allocation3 + $0x28] sm:$0xff]
    %v2141 = vld [vmem:[#allocation3 + $0x30] sm:$0xff]
    %v2142 = vld [vmem:[#allocation3 + $0x38] sm:$0xff]
    %v2143 = vld [vmem:[#allocation3 + $0x40] sm:$0xff]
    %v2144 = vld [vmem:[#allocation3 + $0x48] sm:$0xff]
    %v2145 = vld [vmem:[#allocation3 + $0x50] sm:$0xff]
    %v2146 = vld [vmem:[#allocation3 + $0x58] sm:$0xff]
    %v2147 = vld [vmem:[#allocation3 + $0x60] sm:$0xff]
    %v2148 = vld [vmem:[#allocation3 + $0x68] sm:$0xff]
    %v2149 = vld [vmem:[#allocation3 + $0x70] sm:$0xff]
    %v2150 = vld [vmem:[#allocation3 + $0x78] sm:$0xff]
    %v2151 = vld [vmem:[#allocation3 + $0x80] sm:$0xff]
    %v2152 = vld [vmem:[#allocation3 + $0x88] sm:$0xff]
    %v2153 = vld [vmem:[#allocation3 + $0x90] sm:$0xff]
    %v2154 = vld [vmem:[#allocation3 + $0x98] sm:$0xff]
    %v2155 = vld [vmem:[#allocation3 + $0xa0] sm:$0xff]
    %v2156 = vld [vmem:[#allocation3 + $0xa8] sm:$0xff]
    %v2157 = vld [vmem:[#allocation3 + $0xb0] sm:$0xff]
    %v2158 = vld [vmem:[#allocation3 + $0xb8] sm:$0xff]
    %v2159 = vld [vmem:[#allocation3 + $0xc0] sm:$0xff]
    %v2160 = vld [vmem:[#allocation3 + $0xc8] sm:$0xff]
    %v2161 = vld [vmem:[#allocation3 + $0xd0] sm:$0xff]
    %v2162 = vld [vmem:[#allocation3 + $0xd8] sm:$0xff]
    %v2163 = vld [vmem:[#allocation3 + $0xe0] sm:$0xff]
    %v2164 = vld [vmem:[#allocation3 + $0xe8] sm:$0xff]
    %v2165 = vld [vmem:[#allocation3 + $0xf0] sm:$0xff]
    %v2166 = vld [vmem:[#allocation3 + $0xf8] sm:$0xff]
    %v2167 = vld [vmem:[#allocation3 + $0x100] sm:$0xff]
    %v2168 = vld [vmem:[#allocation3 + $0x108] sm:$0xff]
    %v2169 = vld [vmem:[#allocation3 + $0x110] sm:$0xff]
    %v2170 = vld [vmem:[#allocation3 + $0x118] sm:$0xff]
    %v2171 = vld [vmem:[#allocation3 + $0x120] sm:$0xff]
    %v2172 = vld [vmem:[#allocation3 + $0x128] sm:$0xff]
    %v2173 = vld [vmem:[#allocation3 + $0x130] sm:$0xff]
    %v2174 = vld [vmem:[#allocation3 + $0x138] sm:$0xff]
    %v2175 = vld [vmem:[#allocation3 + $0x140] sm:$0xff]
    %v2176 = vld [vmem:[#allocation3 + $0x148] sm:$0xff]
    %v2177 = vld [vmem:[#allocation3 + $0x150] sm:$0xff]
    %v2178 = vld [vmem:[#allocation3 + $0x158] sm:$0xff]
    %v2179 = vld [vmem:[#allocation3 + $0x160] sm:$0xff]
    %v2180 = vld [vmem:[#allocation3 + $0x168] sm:$0xff]
    %v2181 = vld [vmem:[#allocation3 + $0x170] sm:$0xff]
    %v2182 = vld [vmem:[#allocation3 + $0x178] sm:$0xff]
    %v2183 = vld [vmem:[#allocation3 + $0x180] sm:$0xff]
    %v2184 = vld [vmem:[#allocation3 + $0x188] sm:$0xff]
    %v2185 = vld [vmem:[#allocation3 + $0x190] sm:$0xff]
    %v2186 = vld [vmem:[#allocation3 + $0x198] sm:$0xff]
    %v2187 = vld [vmem:[#allocation3 + $0x1a0] sm:$0xff]
    %v2188 = vld [vmem:[#allocation3 + $0x1a8] sm:$0xff]
    %v2189 = vld [vmem:[#allocation3 + $0x1b0] sm:$0xff]
    %v2190 = vld [vmem:[#allocation3 + $0x1b8] sm:$0xff]
    %v2191 = vld [vmem:[#allocation3 + $0x1c0] sm:$0xff]
    %v2192 = vld [vmem:[#allocation3 + $0x1c8] sm:$0xff]
    %v2193 = vld [vmem:[#allocation3 + $0x1d0] sm:$0xff]
    %v2194 = vld [vmem:[#allocation3 + $0x1d8] sm:$0xff]
    %v2195 = vld [vmem:[#allocation3 + $0x1e0] sm:$0xff]
    %v2196 = vld [vmem:[#allocation3 + $0x1e8] sm:$0xff]
    %v2197 = vld [vmem:[#allocation3 + $0x1f0] sm:$0xff]
    %v2198 = vld [vmem:[#allocation3 + $0x1f8] sm:$0xff]
    %v2199 = vld [vmem:[#allocation3 + $0x200] sm:$0xff]
    %v2200 = vld [vmem:[#allocation3 + $0x208] sm:$0xff]
    %v2201 = vld [vmem:[#allocation3 + $0x210] sm:$0xff]
    %v2202 = vld [vmem:[#allocation3 + $0x218] sm:$0xff]
    %v2203 = vld [vmem:[#allocation3 + $0x220] sm:$0xff]
    %v2204 = vld [vmem:[#allocation3 + $0x228] sm:$0xff]
    %v2205 = vld [vmem:[#allocation3 + $0x230] sm:$0xff]
    %v2206 = vld [vmem:[#allocation3 + $0x238] sm:$0xff]
    %v2207 = vld [vmem:[#allocation3 + $0x240] sm:$0xff]
    %v2208 = vld [vmem:[#allocation3 + $0x248] sm:$0xff]
    %v2209 = vld [vmem:[#allocation3 + $0x250] sm:$0xff]
    %v2210 = vld [vmem:[#allocation3 + $0x258] sm:$0xff]
    %v2211 = vld [vmem:[#allocation3 + $0x260] sm:$0xff]
    %v2212 = vld [vmem:[#allocation3 + $0x268] sm:$0xff]
    %v2213 = vld [vmem:[#allocation3 + $0x270] sm:$0xff]
    %v2214 = vld [vmem:[#allocation3 + $0x278] sm:$0xff]
    %v2215 = vld [vmem:[#allocation3 + $0x280] sm:$0xff]
    %v2216 = vld [vmem:[#allocation3 + $0x288] sm:$0xff]
    %v2217 = vld [vmem:[#allocation3 + $0x290] sm:$0xff]
    %v2218 = vld [vmem:[#allocation3 + $0x298] sm:$0xff]
    %v2219 = vld [vmem:[#allocation3 + $0x2a0] sm:$0xff]
    %v2220 = vld [vmem:[#allocation3 + $0x2a8] sm:$0xff]
    %v2221 = vld [vmem:[#allocation3 + $0x2b0] sm:$0xff]
    %v2222 = vld [vmem:[#allocation3 + $0x2b8] sm:$0xff]
    %v2223 = vld [vmem:[#allocation3 + $0x2c0] sm:$0xff]
    %v2224 = vld [vmem:[#allocation3 + $0x2c8] sm:$0xff]
    %v2225 = vld [vmem:[#allocation3 + $0x2d0] sm:$0xff]
    %v2226 = vld [vmem:[#allocation3 + $0x2d8] sm:$0xff]
    %v2227 = vld [vmem:[#allocation3 + $0x2e0] sm:$0xff]
    %v2228 = vld [vmem:[#allocation3 + $0x2e8] sm:$0xff]
    %v2229 = vld [vmem:[#allocation3 + $0x2f0] sm:$0xff]
    %v2230 = vld [vmem:[#allocation3 + $0x2f8] sm:$0xff]
    %v2231 = vld [vmem:[#allocation3 + $0x300] sm:$0xff]
    %v2232 = vld [vmem:[#allocation3 + $0x308] sm:$0xff]
    %v2233 = vld [vmem:[#allocation3 + $0x310] sm:$0xff]
    %v2234 = vld [vmem:[#allocation3 + $0x318] sm:$0xff]
    %v2235 = vld [vmem:[#allocation3 + $0x320] sm:$0xff]
    %v2236 = vld [vmem:[#allocation3 + $0x328] sm:$0xff]
    %v2237 = vld [vmem:[#allocation3 + $0x330] sm:$0xff]
    %v2238 = vld [vmem:[#allocation3 + $0x338] sm:$0xff]
    %v2239 = vld [vmem:[#allocation3 + $0x340] sm:$0xff]
    %v2240 = vld [vmem:[#allocation3 + $0x348] sm:$0xff]
    %v2241 = vld [vmem:[#allocation3 + $0x350] sm:$0xff]
    %v2242 = vld [vmem:[#allocation3 + $0x358] sm:$0xff]
    %v2243 = vld [vmem:[#allocation3 + $0x360] sm:$0xff]
    %v2244 = vld [vmem:[#allocation3 + $0x368] sm:$0xff]
    %v2245 = vld [vmem:[#allocation3 + $0x370] sm:$0xff]
    %v2246 = vld [vmem:[#allocation3 + $0x378] sm:$0xff]
    %v2247 = vld [vmem:[#allocation3 + $0x380] sm:$0xff]
    %v2248 = vld [vmem:[#allocation3 + $0x388] sm:$0xff]
    %v2249 = vld [vmem:[#allocation3 + $0x390] sm:$0xff]
    %v2250 = vld [vmem:[#allocation3 + $0x398] sm:$0xff]
    %v2251 = vld [vmem:[#allocation3 + $0x3a0] sm:$0xff]
    %v2252 = vld [vmem:[#allocation3 + $0x3a8] sm:$0xff]
    %v2253 = vld [vmem:[#allocation3 + $0x3b0] sm:$0xff]
    %v2254 = vld [vmem:[#allocation3 + $0x3b8] sm:$0xff]
    %v2255 = vld [vmem:[#allocation3 + $0x3c0] sm:$0xff]
    %v2256 = vld [vmem:[#allocation3 + $0x3c8] sm:$0xff]
    %v2257 = vld [vmem:[#allocation3 + $0x3d0] sm:$0xff]
    %v2258 = vld [vmem:[#allocation3 + $0x3d8] sm:$0xff]
    %v2259 = vld [vmem:[#allocation3 + $0x3e0] sm:$0xff]
    %v2260 = vld [vmem:[#allocation3 + $0x3e8] sm:$0xff]
    %v2261 = vld [vmem:[#allocation3 + $0x3f0] sm:$0xff]
    %v2262 = vld [vmem:[#allocation3 + $0x3f8] sm:$0xff]
    %2263 = vmatprep.subr.bf16.mxu0 %v2136
    %2264 = vmatpush1.bf16.msra.mxu0 %v2135
    %2265 = vmatprep.subr.bf16.mxu0 %v2140
    %2266 = vmatpush1.bf16.msra.mxu0 %v2139
    %2267 = vmatprep.subr.bf16.mxu0 %v2144
    %2268 = vmatpush1.bf16.msra.mxu0 %v2143
    %2269 = vmatprep.subr.bf16.mxu0 %v2148
    %2270 = vmatpush1.bf16.msra.mxu0 %v2147
    %2271 = vmatprep.subr.bf16.mxu0 %v2152
    %2272 = vmatpush1.bf16.msra.mxu0 %v2151
    %2273 = vmatprep.subr.bf16.mxu0 %v2156
    %2274 = vmatpush1.bf16.msra.mxu0 %v2155
    %2275 = vmatprep.subr.bf16.mxu0 %v2160
    %2276 = vmatpush1.bf16.msra.mxu0 %v2159
    %2277 = vmatprep.subr.bf16.mxu0 %v2164
    %2278 = vmatpush1.bf16.msra.mxu0 %v2163
    %2279 = vmatprep.subr.bf16.mxu0 %v2168
    %2280 = vmatpush1.bf16.msra.mxu0 %v2167
    %2281 = vmatprep.subr.bf16.mxu0 %v2172
    %2282 = vmatpush1.bf16.msra.mxu0 %v2171
    %2283 = vmatprep.subr.bf16.mxu0 %v2176
    %2284 = vmatpush1.bf16.msra.mxu0 %v2175
    %2285 = vmatprep.subr.bf16.mxu0 %v2180
    %2286 = vmatpush1.bf16.msra.mxu0 %v2179
    %2287 = vmatprep.subr.bf16.mxu0 %v2184
    %2288 = vmatpush1.bf16.msra.mxu0 %v2183
    %2289 = vmatprep.subr.bf16.mxu0 %v2188
    %2290 = vmatpush1.bf16.msra.mxu0 %v2187
    %2291 = vmatprep.subr.bf16.mxu0 %v2192
    %2292 = vmatpush1.bf16.msra.mxu0 %v2191
    %2293 = vmatprep.subr.bf16.mxu0 %v2196
    %2294 = vmatpush1.bf16.msra.mxu0 %v2195
    %2295 = vmatprep.mubr.bf16.mxu0 %v2128
    %2296 = vmatmul.mubr.bf16.gmra.mrb[0].mxu0 %v2127
    %v2297 = vpop.f32.mrb[0].mxu0
    %v2298 = vadd.f32 0.0, %v2297
    %v2299 = vpop.f32.mrb[0].mxu0
    %v2300 = vadd.f32 0.0, %v2299
    %v2301 = vpop.f32.mrb[0].mxu0
    %v2302 = vadd.f32 0.0, %v2301
    %v2303 = vpop.f32.mrb[0].mxu0
    %v2304 = vadd.f32 0.0, %v2303
    %2305 = vdwg.mxu0
    %2306 = vmatprep.subr.bf16.mxu0 %v2200
    %2307 = vmatpush1.bf16.msra.mxu0 %v2199
    %2308 = vmatprep.subr.bf16.mxu0 %v2204
    %2309 = vmatpush1.bf16.msra.mxu0 %v2203
    %2310 = vmatprep.subr.bf16.mxu0 %v2208
    %2311 = vmatpush1.bf16.msra.mxu0 %v2207
    %2312 = vmatprep.subr.bf16.mxu0 %v2212
    %2313 = vmatpush1.bf16.msra.mxu0 %v2211
    %2314 = vmatprep.subr.bf16.mxu0 %v2216
    %2315 = vmatpush1.bf16.msra.mxu0 %v2215
    %2316 = vmatprep.subr.bf16.mxu0 %v2220
    %2317 = vmatpush1.bf16.msra.mxu0 %v2219
    %2318 = vmatprep.subr.bf16.mxu0 %v2224
    %2319 = vmatpush1.bf16.msra.mxu0 %v2223
    %2320 = vmatprep.subr.bf16.mxu0 %v2228
    %2321 = vmatpush1.bf16.msra.mxu0 %v2227
    %2322 = vmatprep.subr.bf16.mxu0 %v2232
    %2323 = vmatpush1.bf16.msra.mxu0 %v2231
    %2324 = vmatprep.subr.bf16.mxu0 %v2236
    %2325 = vmatpush1.bf16.msra.mxu0 %v2235
    %2326 = vmatprep.subr.bf16.mxu0 %v2240
    %2327 = vmatpush1.bf16.msra.mxu0 %v2239
    %2328 = vmatprep.subr.bf16.mxu0 %v2244
    %2329 = vmatpush1.bf16.msra.mxu0 %v2243
    %2330 = vmatprep.subr.bf16.mxu0 %v2248
    %2331 = vmatpush1.bf16.msra.mxu0 %v2247
    %2332 = vmatprep.subr.bf16.mxu0 %v2252
    %2333 = vmatpush1.bf16.msra.mxu0 %v2251
    %2334 = vmatprep.subr.bf16.mxu0 %v2256
    %2335 = vmatpush1.bf16.msra.mxu0 %v2255
    %2336 = vmatprep.subr.bf16.mxu0 %v2260
    %2337 = vmatpush1.bf16.msra.mxu0 %v2259
    %2338 = vmatprep.mubr.bf16.mxu0 %v2130
    %2339 = vmatmul.mubr.bf16.gmra.mrb[0].mxu0 %v2129
    %v2340 = vpop.f32.mrb[0].mxu0
    %v2341 = vadd.f32 %v2298, %v2340
    %v2342 = vpop.f32.mrb[0].mxu0
    %v2343 = vadd.f32 %v2300, %v2342
    %v2344 = vpop.f32.mrb[0].mxu0
    %v2345 = vadd.f32 %v2302, %v2344
    %v2346 = vpop.f32.mrb[0].mxu0
    %v2347 = vadd.f32 %v2304, %v2346
    %2348 = vdwg.mxu0
    %2349 = vmatprep.subr.bf16.mxu0 %v2138
    %2350 = vmatpush1.bf16.msra.mxu0 %v2137
    %2351 = vmatprep.subr.bf16.mxu0 %v2142
    %2352 = vmatpush1.bf16.msra.mxu0 %v2141
    %2353 = vmatprep.subr.bf16.mxu0 %v2146
    %2354 = vmatpush1.bf16.msra.mxu0 %v2145
    %2355 = vmatprep.subr.bf16.mxu0 %v2150
    %2356 = vmatpush1.bf16.msra.mxu0 %v2149
    %2357 = vmatprep.subr.bf16.mxu0 %v2154
    %2358 = vmatpush1.bf16.msra.mxu0 %v2153
    %2359 = vmatprep.subr.bf16.mxu0 %v2158
    %2360 = vmatpush1.bf16.msra.mxu0 %v2157
    %2361 = vmatprep.subr.bf16.mxu0 %v2162
    %2362 = vmatpush1.bf16.msra.mxu0 %v2161
    %2363 = vmatprep.subr.bf16.mxu0 %v2166
    %2364 = vmatpush1.bf16.msra.mxu0 %v2165
    %2365 = vmatprep.subr.bf16.mxu0 %v2170
    %2366 = vmatpush1.bf16.msra.mxu0 %v2169
    %2367 = vmatprep.subr.bf16.mxu0 %v2174
    %2368 = vmatpush1.bf16.msra.mxu0 %v2173
    %2369 = vmatprep.subr.bf16.mxu0 %v2178
    %2370 = vmatpush1.bf16.msra.mxu0 %v2177
    %2371 = vmatprep.subr.bf16.mxu0 %v2182
    %2372 = vmatpush1.bf16.msra.mxu0 %v2181
    %2373 = vmatprep.subr.bf16.mxu0 %v2186
    %2374 = vmatpush1.bf16.msra.mxu0 %v2185
    %2375 = vmatprep.subr.bf16.mxu0 %v2190
    %2376 = vmatpush1.bf16.msra.mxu0 %v2189
    %2377 = vmatprep.subr.bf16.mxu0 %v2194
    %2378 = vmatpush1.bf16.msra.mxu0 %v2193
    %2379 = vmatprep.subr.bf16.mxu0 %v2198
    %2380 = vmatpush1.bf16.msra.mxu0 %v2197
    %2381 = vmatprep.mubr.bf16.mxu0 %v2128
    %2382 = vmatmul.mubr.bf16.gmra.mrb[0].mxu0 %v2127
    %v2383 = vpop.f32.mrb[0].mxu0
    %v2384 = vadd.f32 0.0, %v2383
    %v2385 = vpop.f32.mrb[0].mxu0
    %v2386 = vadd.f32 0.0, %v2385
    %v2387 = vpop.f32.mrb[0].mxu0
    %v2388 = vadd.f32 0.0, %v2387
    %v2389 = vpop.f32.mrb[0].mxu0
    %v2390 = vadd.f32 0.0, %v2389
    %2391 = vdwg.mxu0
    %2392 = vmatprep.subr.bf16.mxu0 %v2202
    %2393 = vmatpush1.bf16.msra.mxu0 %v2201
    %2394 = vmatprep.subr.bf16.mxu0 %v2206
    %2395 = vmatpush1.bf16.msra.mxu0 %v2205
    %2396 = vmatprep.subr.bf16.mxu0 %v2210
    %2397 = vmatpush1.bf16.msra.mxu0 %v2209
    %2398 = vmatprep.subr.bf16.mxu0 %v2214
    %2399 = vmatpush1.bf16.msra.mxu0 %v2213
    %2400 = vmatprep.subr.bf16.mxu0 %v2218
    %2401 = vmatpush1.bf16.msra.mxu0 %v2217
    %2402 = vmatprep.subr.bf16.mxu0 %v2222
    %2403 = vmatpush1.bf16.msra.mxu0 %v2221
    %2404 = vmatprep.subr.bf16.mxu0 %v2226
    %2405 = vmatpush1.bf16.msra.mxu0 %v2225
    %2406 = vmatprep.subr.bf16.mxu0 %v2230
    %2407 = vmatpush1.bf16.msra.mxu0 %v2229
    %2408 = vmatprep.subr.bf16.mxu0 %v2234
    %2409 = vmatpush1.bf16.msra.mxu0 %v2233
    %2410 = vmatprep.subr.bf16.mxu0 %v2238
    %2411 = vmatpush1.bf16.msra.mxu0 %v2237
    %2412 = vmatprep.subr.bf16.mxu0 %v2242
    %2413 = vmatpush1.bf16.msra.mxu0 %v2241
    %2414 = vmatprep.subr.bf16.mxu0 %v2246
    %2415 = vmatpush1.bf16.msra.mxu0 %v2245
    %2416 = vmatprep.subr.bf16.mxu0 %v2250
    %2417 = vmatpush1.bf16.msra.mxu0 %v2249
    %2418 = vmatprep.subr.bf16.mxu0 %v2254
    %2419 = vmatpush1.bf16.msra.mxu0 %v2253
    %2420 = vmatprep.subr.bf16.mxu0 %v2258
    %2421 = vmatpush1.bf16.msra.mxu0 %v2257
    %2422 = vmatprep.subr.bf16.mxu0 %v2262
    %2423 = vmatpush1.bf16.msra.mxu0 %v2261
    %2424 = vmatprep.mubr.bf16.mxu0 %v2130
    %2425 = vmatmul.mubr.bf16.gmra.mrb[0].mxu0 %v2129
    %v2426 = vpop.f32.mrb[0].mxu0
    %v2427 = vadd.f32 %v2384, %v2426
    %v2428 = vpop.f32.mrb[0].mxu0
    %v2429 = vadd.f32 %v2386, %v2428
    %v2430 = vpop.f32.mrb[0].mxu0
    %v2431 = vadd.f32 %v2388, %v2430
    %v2432 = vpop.f32.mrb[0].mxu0
    %v2433 = vadd.f32 %v2390, %v2432
    %2434 = vdwg.mxu0
    %v2435 = vpack.c.bf16 %v2345, %v2341
    %v2436 = vpack.c.bf16 %v2347, %v2343
    %v2437 = vpack.c.bf16 %v2431, %v2427
    %v2438 = vpack.c.bf16 %v2433, %v2429
    %v2439 = vld [vmem:[%s6] sm:$0xf]
    %v2440 = vld [vmem:[%s6 + $0x4] sm:$0xf]
    %v2441 = vld [vmem:[%s6 + $0x8] sm:$0xf]
    %v2442 = vld [vmem:[%s6 + $0xc] sm:$0xf]
    %v2443 = vld [vmem:[%s6 + $0x10] sm:$0xf]
    %v2444 = vld [vmem:[%s6 + $0x14] sm:$0xf]
    %v2445 = vld [vmem:[%s6 + $0x18] sm:$0xf]
    %v2446 = vld [vmem:[%s6 + $0x1c] sm:$0xf]
    %v2447 = vld [vmem:[%s6 + $0x20] sm:$0xf]
    %v2448 = vld [vmem:[%s6 + $0x24] sm:$0xf]
    %v2449 = vld [vmem:[%s6 + $0x28] sm:$0xf]
    %v2450 = vld [vmem:[%s6 + $0x2c] sm:$0xf]
    %v2451 = vld [vmem:[%s6 + $0x30] sm:$0xf]
    %v2452 = vld [vmem:[%s6 + $0x34] sm:$0xf]
    %v2453 = vld [vmem:[%s6 + $0x38] sm:$0xf]
    %v2454 = vld [vmem:[%s6 + $0x3c] sm:$0xf]
    %v2455 = vld [vmem:[%s6 + $0x40] sm:$0xf]
    %v2456 = vld [vmem:[%s6 + $0x44] sm:$0xf]
    %v2457 = vld [vmem:[%s6 + $0x48] sm:$0xf]
    %v2458 = vld [vmem:[%s6 + $0x4c] sm:$0xf]
    %v2459 = vld [vmem:[%s6 + $0x50] sm:$0xf]
    %v2460 = vld [vmem:[%s6 + $0x54] sm:$0xf]
    %v2461 = vld [vmem:[%s6 + $0x58] sm:$0xf]
    %v2462 = vld [vmem:[%s6 + $0x5c] sm:$0xf]
    %v2463 = vld [vmem:[%s6 + $0x60] sm:$0xf]
    %v2464 = vld [vmem:[%s6 + $0x64] sm:$0xf]
    %v2465 = vld [vmem:[%s6 + $0x68] sm:$0xf]
    %v2466 = vld [vmem:[%s6 + $0x6c] sm:$0xf]
    %v2467 = vld [vmem:[%s6 + $0x70] sm:$0xf]
    %v2468 = vld [vmem:[%s6 + $0x74] sm:$0xf]
    %v2469 = vld [vmem:[%s6 + $0x78] sm:$0xf]
    %v2470 = vld [vmem:[%s6 + $0x7c] sm:$0xf]
    %v2471 = vld [vmem:[%s6 + $0x80] sm:$0xf]
    %v2472 = vld [vmem:[%s6 + $0x84] sm:$0xf]
    %v2473 = vld [vmem:[%s6 + $0x88] sm:$0xf]
    %v2474 = vld [vmem:[%s6 + $0x8c] sm:$0xf]
    %v2475 = vld [vmem:[%s6 + $0x90] sm:$0xf]
    %v2476 = vld [vmem:[%s6 + $0x94] sm:$0xf]
    %v2477 = vld [vmem:[%s6 + $0x98] sm:$0xf]
    %v2478 = vld [vmem:[%s6 + $0x9c] sm:$0xf]
    %v2479 = vld [vmem:[%s6 + $0xa0] sm:$0xf]
    %v2480 = vld [vmem:[%s6 + $0xa4] sm:$0xf]
    %v2481 = vld [vmem:[%s6 + $0xa8] sm:$0xf]
    %v2482 = vld [vmem:[%s6 + $0xac] sm:$0xf]
    %v2483 = vld [vmem:[%s6 + $0xb0] sm:$0xf]
    %v2484 = vld [vmem:[%s6 + $0xb4] sm:$0xf]
    %v2485 = vld [vmem:[%s6 + $0xb8] sm:$0xf]
    %v2486 = vld [vmem:[%s6 + $0xbc] sm:$0xf]
    %v2487 = vld [vmem:[%s6 + $0xc0] sm:$0xf]
    %v2488 = vld [vmem:[%s6 + $0xc4] sm:$0xf]
    %v2489 = vld [vmem:[%s6 + $0xc8] sm:$0xf]
    %v2490 = vld [vmem:[%s6 + $0xcc] sm:$0xf]
    %v2491 = vld [vmem:[%s6 + $0xd0] sm:$0xf]
    %v2492 = vld [vmem:[%s6 + $0xd4] sm:$0xf]
    %v2493 = vld [vmem:[%s6 + $0xd8] sm:$0xf]
    %v2494 = vld [vmem:[%s6 + $0xdc] sm:$0xf]
    %v2495 = vld [vmem:[%s6 + $0xe0] sm:$0xf]
    %v2496 = vld [vmem:[%s6 + $0xe4] sm:$0xf]
    %v2497 = vld [vmem:[%s6 + $0xe8] sm:$0xf]
    %v2498 = vld [vmem:[%s6 + $0xec] sm:$0xf]
    %v2499 = vld [vmem:[%s6 + $0xf0] sm:$0xf]
    %v2500 = vld [vmem:[%s6 + $0xf4] sm:$0xf]
    %v2501 = vld [vmem:[%s6 + $0xf8] sm:$0xf]
    %v2502 = vld [vmem:[%s6 + $0xfc] sm:$0xf]
    %v2567 = vunpack.c.l.b16 %v2439
    %v2568 = vunpack.c.l.b16 %v2440
    %v2569 = vunpack.c.l.b16 %v2441
    %v2570 = vunpack.c.l.b16 %v2442
    %v2571 = vunpack.c.l.b16 %v2443
    %v2572 = vunpack.c.l.b16 %v2444
    %v2573 = vunpack.c.l.b16 %v2445
    %v2574 = vunpack.c.l.b16 %v2446
    %v2575 = vunpack.c.l.b16 %v2447
    %v2576 = vunpack.c.l.b16 %v2448
    %v2577 = vunpack.c.l.b16 %v2449
    %v2578 = vunpack.c.l.b16 %v2450
    %v2579 = vunpack.c.l.b16 %v2451
    %v2580 = vunpack.c.l.b16 %v2452
    %v2581 = vunpack.c.l.b16 %v2453
    %v2582 = vunpack.c.l.b16 %v2454
    %v2583 = vunpack.c.l.b16 %v2455
    %v2584 = vunpack.c.l.b16 %v2456
    %v2585 = vunpack.c.l.b16 %v2457
    %v2586 = vunpack.c.l.b16 %v2458
    %v2587 = vunpack.c.l.b16 %v2459
    %v2588 = vunpack.c.l.b16 %v2460
    %v2589 = vunpack.c.l.b16 %v2461
    %v2590 = vunpack.c.l.b16 %v2462
    %v2591 = vunpack.c.l.b16 %v2463
    %v2592 = vunpack.c.l.b16 %v2464
    %v2593 = vunpack.c.l.b16 %v2465
    %v2594 = vunpack.c.l.b16 %v2466
    %v2595 = vunpack.c.l.b16 %v2467
    %v2596 = vunpack.c.l.b16 %v2468
    %v2597 = vunpack.c.l.b16 %v2469
    %v2598 = vunpack.c.l.b16 %v2470
    %v2599 = vunpack.c.l.b16 %v2471
    %v2600 = vunpack.c.l.b16 %v2472
    %v2601 = vunpack.c.l.b16 %v2473
    %v2602 = vunpack.c.l.b16 %v2474
    %v2603 = vunpack.c.l.b16 %v2475
    %v2604 = vunpack.c.l.b16 %v2476
    %v2605 = vunpack.c.l.b16 %v2477
    %v2606 = vunpack.c.l.b16 %v2478
    %v2607 = vunpack.c.l.b16 %v2479
    %v2608 = vunpack.c.l.b16 %v2480
    %v2609 = vunpack.c.l.b16 %v2481
    %v2610 = vunpack.c.l.b16 %v2482
    %v2611 = vunpack.c.l.b16 %v2483
    %v2612 = vunpack.c.l.b16 %v2484
    %v2613 = vunpack.c.l.b16 %v2485
    %v2614 = vunpack.c.l.b16 %v2486
    %v2615 = vunpack.c.l.b16 %v2487
    %v2616 = vunpack.c.l.b16 %v2488
    %v2617 = vunpack.c.l.b16 %v2489
    %v2618 = vunpack.c.l.b16 %v2490
    %v2619 = vunpack.c.l.b16 %v2491
    %v2620 = vunpack.c.l.b16 %v2492
    %v2621 = vunpack.c.l.b16 %v2493
    %v2622 = vunpack.c.l.b16 %v2494
    %v2623 = vunpack.c.l.b16 %v2495
    %v2624 = vunpack.c.l.b16 %v2496
    %v2625 = vunpack.c.l.b16 %v2497
    %v2626 = vunpack.c.l.b16 %v2498
    %v2627 = vunpack.c.l.b16 %v2499
    %v2628 = vunpack.c.l.b16 %v2500
    %v2629 = vunpack.c.l.b16 %v2501
    %v2630 = vunpack.c.l.b16 %v2502
    %v2631 = vpack.c.b16 %v2568, %v2567
    %v2632 = vpack.c.b16 %v2570, %v2569
    %v2633 = vpack.c.b16 %v2572, %v2571
    %v2634 = vpack.c.b16 %v2574, %v2573
    %v2635 = vpack.c.b16 %v2576, %v2575
    %v2636 = vpack.c.b16 %v2578, %v2577
    %v2637 = vpack.c.b16 %v2580, %v2579
    %v2638 = vpack.c.b16 %v2582, %v2581
    %v2639 = vpack.c.b16 %v2584, %v2583
    %v2640 = vpack.c.b16 %v2586, %v2585
    %v2641 = vpack.c.b16 %v2588, %v2587
    %v2642 = vpack.c.b16 %v2590, %v2589
    %v2643 = vpack.c.b16 %v2592, %v2591
    %v2644 = vpack.c.b16 %v2594, %v2593
    %v2645 = vpack.c.b16 %v2596, %v2595
    %v2646 = vpack.c.b16 %v2598, %v2597
    %v2647 = vpack.c.b16 %v2600, %v2599
    %v2648 = vpack.c.b16 %v2602, %v2601
    %v2649 = vpack.c.b16 %v2604, %v2603
    %v2650 = vpack.c.b16 %v2606, %v2605
    %v2651 = vpack.c.b16 %v2608, %v2607
    %v2652 = vpack.c.b16 %v2610, %v2609
    %v2653 = vpack.c.b16 %v2612, %v2611
    %v2654 = vpack.c.b16 %v2614, %v2613
    %v2655 = vpack.c.b16 %v2616, %v2615
    %v2656 = vpack.c.b16 %v2618, %v2617
    %v2657 = vpack.c.b16 %v2620, %v2619
    %v2658 = vpack.c.b16 %v2622, %v2621
    %v2659 = vpack.c.b16 %v2624, %v2623
    %v2660 = vpack.c.b16 %v2626, %v2625
    %v2661 = vpack.c.b16 %v2628, %v2627
    %v2662 = vpack.c.b16 %v2630, %v2629
    %2695 = vmatprep.subr.bf16.mxu0 0
    %2696 = vmatpush1.bf16.msra.mxu0 %v2631
    %2697 = vmatprep.subr.bf16.mxu0 0
    %2698 = vmatpush1.bf16.msra.mxu0 %v2632
    %2699 = vmatprep.subr.bf16.mxu0 0
    %2700 = vmatpush1.bf16.msra.mxu0 %v2633
    %2701 = vmatprep.subr.bf16.mxu0 0
    %2702 = vmatpush1.bf16.msra.mxu0 %v2634
    %2703 = vmatprep.subr.bf16.mxu0 0
    %2704 = vmatpush1.bf16.msra.mxu0 %v2635
    %2705 = vmatprep.subr.bf16.mxu0 0
    %2706 = vmatpush1.bf16.msra.mxu0 %v2636
    %2707 = vmatprep.subr.bf16.mxu0 0
    %2708 = vmatpush1.bf16.msra.mxu0 %v2637
    %2709 = vmatprep.subr.bf16.mxu0 0
    %2710 = vmatpush1.bf16.msra.mxu0 %v2638
    %2711 = vmatprep.subr.bf16.mxu0 0
    %2712 = vmatpush1.bf16.msra.mxu0 %v2639
    %2713 = vmatprep.subr.bf16.mxu0 0
    %2714 = vmatpush1.bf16.msra.mxu0 %v2640
    %2715 = vmatprep.subr.bf16.mxu0 0
    %2716 = vmatpush1.bf16.msra.mxu0 %v2641
    %2717 = vmatprep.subr.bf16.mxu0 0
    %2718 = vmatpush1.bf16.msra.mxu0 %v2642
    %2719 = vmatprep.subr.bf16.mxu0 0
    %2720 = vmatpush1.bf16.msra.mxu0 %v2643
    %2721 = vmatprep.subr.bf16.mxu0 0
    %2722 = vmatpush1.bf16.msra.mxu0 %v2644
    %2723 = vmatprep.subr.bf16.mxu0 0
    %2724 = vmatpush1.bf16.msra.mxu0 %v2645
    %2725 = vmatprep.subr.bf16.mxu0 0
    %2726 = vmatpush1.bf16.msra.mxu0 %v2646
    %2727 = vmatprep.mubr.bf16.mxu0 %v2436
    %2728 = vmatmul.mubr.bf16.gmra.mrb[0].mxu0 %v2435
    %v2729 = vpop.f32.mrb[0].mxu0
    %v2730 = vadd.f32 0.0, %v2729
    %v2731 = vpop.f32.mrb[0].mxu0
    %v2732 = vpop.f32.mrb[0].mxu0
    %v2733 = vadd.f32 0.0, %v2732
    %v2734 = vpop.f32.mrb[0].mxu0
    %2735 = vdwg.mxu0
    %2736 = vmatprep.subr.bf16.mxu0 0
    %2737 = vmatpush1.bf16.msra.mxu0 %v2647
    %2738 = vmatprep.subr.bf16.mxu0 0
    %2739 = vmatpush1.bf16.msra.mxu0 %v2648
    %2740 = vmatprep.subr.bf16.mxu0 0
    %2741 = vmatpush1.bf16.msra.mxu0 %v2649
    %2742 = vmatprep.subr.bf16.mxu0 0
    %2743 = vmatpush1.bf16.msra.mxu0 %v2650
    %2744 = vmatprep.subr.bf16.mxu0 0
    %2745 = vmatpush1.bf16.msra.mxu0 %v2651
    %2746 = vmatprep.subr.bf16.mxu0 0
    %2747 = vmatpush1.bf16.msra.mxu0 %v2652
    %2748 = vmatprep.subr.bf16.mxu0 0
    %2749 = vmatpush1.bf16.msra.mxu0 %v2653
    %2750 = vmatprep.subr.bf16.mxu0 0
    %2751 = vmatpush1.bf16.msra.mxu0 %v2654
    %2752 = vmatprep.subr.bf16.mxu0 0
    %2753 = vmatpush1.bf16.msra.mxu0 %v2655
    %2754 = vmatprep.subr.bf16.mxu0 0
    %2755 = vmatpush1.bf16.msra.mxu0 %v2656
    %2756 = vmatprep.subr.bf16.mxu0 0
    %2757 = vmatpush1.bf16.msra.mxu0 %v2657
    %2758 = vmatprep.subr.bf16.mxu0 0
    %2759 = vmatpush1.bf16.msra.mxu0 %v2658
    %2760 = vmatprep.subr.bf16.mxu0 0
    %2761 = vmatpush1.bf16.msra.mxu0 %v2659
    %2762 = vmatprep.subr.bf16.mxu0 0
    %2763 = vmatpush1.bf16.msra.mxu0 %v2660
    %2764 = vmatprep.subr.bf16.mxu0 0
    %2765 = vmatpush1.bf16.msra.mxu0 %v2661
    %2766 = vmatprep.subr.bf16.mxu0 0
    %2767 = vmatpush1.bf16.msra.mxu0 %v2662
    %2768 = vmatprep.mubr.bf16.mxu0 %v2438
    %2769 = vmatmul.mubr.bf16.gmra.mrb[0].mxu0 %v2437
    %v2770 = vpop.f32.mrb[0].mxu0
    %v2771 = vadd.f32 %v2730, %v2770
    %v2772 = vpop.f32.mrb[0].mxu0
    %v2773 = vpop.f32.mrb[0].mxu0
    %v2774 = vadd.f32 %v2733, %v2773
    %v2775 = vpop.f32.mrb[0].mxu0
    %2776 = vdwg.mxu0
    %2777 = vxpose.xlu0.b32.start [1/16] %v2771, 128
    %2778 = vxpose.xlu0.b32.cont [2/16] %v2774, 128
    %2779 = vxpose.xlu0.b32.cont [3/16] 0.0, 128
    %2780 = vxpose.xlu0.b32.cont [4/16] 0.0, 128
    %2781 = vxpose.xlu0.b32.cont [5/16] 0.0, 128
    %2782 = vxpose.xlu0.b32.cont [6/16] 0.0, 128
    %2783 = vxpose.xlu0.b32.cont [7/16] 0.0, 128
    %2784 = vxpose.xlu0.b32.cont [8/16] 0.0, 128
    %2785 = vxpose.xlu0.b32.cont [9/16] 0.0, 128
    %2786 = vxpose.xlu0.b32.cont [10/16] 0.0, 128
    %2787 = vxpose.xlu0.b32.cont [11/16] 0.0, 128
    %2788 = vxpose.xlu0.b32.cont [12/16] 0.0, 128
    %2789 = vxpose.xlu0.b32.cont [13/16] 0.0, 128
    %2790 = vxpose.xlu0.b32.cont [14/16] 0.0, 128
    %2791 = vxpose.xlu0.b32.cont [15/16] 0.0, 128
    %2792 = vxpose.xlu0.b32.end [16/16] 0.0, 128
    %v2793 = vpop.trf.xlu0
    %v2794 = vpop.trf.xlu0
    %v2795 = vpop.trf.xlu0
    %v2796 = vpop.trf.xlu0
    %v2797 = vpop.trf.xlu0
    %v2798 = vpop.trf.xlu0
    %v2799 = vpop.trf.xlu0
    %v2800 = vpop.trf.xlu0
    %v2801 = vpop.trf.xlu0
    %v2802 = vpop.trf.xlu0
    %v2803 = vpop.trf.xlu0
    %v2804 = vpop.trf.xlu0
    %v2805 = vpop.trf.xlu0
    %v2806 = vpop.trf.xlu0
    %v2807 = vpop.trf.xlu0
    %v2808 = vpop.trf.xlu0
    %2810 = vset.pattern.permute.xlu0 4
    %2811 = vperm.xlu0 %2810, %v2771
    %v2812 = vpop.permute.xlu0 %2811
    %2815 = vset.pattern.permute.xlu0 4
    %2816 = vperm.xlu0 %2815, %v2774
    %v2817 = vpop.permute.xlu0 %2816
    %v2819 = vlaneseq
    %v2820 = vshrl.u32 %v2819, 7
    %v2821 = vsub.s32 0, %v2820
    %v2822 = vrot.slane %v2793, %v2821
    %v2823 = vadd.f32 %v2812, %v2822
    %v2824 = vadd.f32 %v2817, %v2822
    %vm2825 = vcmp.gt.f32.partialorder %v2823, 0.0
    %vm2826 = vcmp.gt.f32.partialorder %v2824, 0.0
    %v2827 = vmul.f32 %v2823, 0.2
    %v2828 = vmul.f32 %v2824, 0.2
    %v2829 = vsel %vm2825, %v2823, %v2827
    %v2830 = vsel %vm2826, %v2824, %v2828
    %v2831 = vsel %vm347, %v2829, -1e+30
    %v2832 = vsel %vm348, %v2830, -1e+30
    %v2833 = vsel %vm1698, %v2831, -inf
    %2834 = vmax.xlane.f32.xlu0 %v2833
    %v2835 = vpop.xlane.xlu0 %2834
    %v2836 = vsel %vm1698, %v2832, -inf
    %2837 = vmax.xlane.f32.xlu0 %v2836
    %v2838 = vpop.xlane.xlu0 %2837
    %v2839 = vsub.f32 %v2831, %v2835
    %v2840 = vsub.f32 %v2832, %v2838
    %v2841 = vmul.f32 %v2839, 1.442695
    %v2842 = vpow.pop %v2841
    %v2843 = vmul.f32 %v2840, 1.442695
    %v2844 = vpow.pop %v2843
    %v2845 = vsel %vm347, %v2842, 0.0
    %v2846 = vsel %vm348, %v2844, 0.0
    %v2847 = vsel %vm1698, %v2845, 0.0
    %2848 = vadd.xlane.f32.xlu0 %v2847
    %v2849 = vpop.xlane.xlu0 %2848
    %v2850 = vsel %vm1698, %v2846, 0.0
    %2851 = vadd.xlane.f32.xlu0 %v2850
    %v2852 = vpop.xlane.xlu0 %2851
    %v2853 = vrcp.pop %v2849
    %v2854 = vrcp.pop %v2852
    %v2855 = vmul.f32 %v2845, %v2853
    %v2856 = vmul.f32 %v2846, %v2854
    %v2857 = vpack.c.bf16 %v2856, %v2855
    %v2859 = vsel %vm1698, %v2857, 0
    %2861 = vmatprep.subr.bf16.mxu0 0
    %2862 = vmatpush1.bf16.msra.mxu0 %v2435
    %2863 = vmatprep.subr.bf16.mxu0 0
    %2864 = vmatpush1.bf16.msra.mxu0 0
    %2865 = vmatprep.subr.bf16.mxu0 0
    %2866 = vmatpush1.bf16.msra.mxu0 0
    %2867 = vmatprep.subr.bf16.mxu0 0
    %2868 = vmatpush1.bf16.msra.mxu0 0
    %2869 = vmatprep.subr.bf16.mxu0 0
    %2870 = vmatpush1.bf16.msra.mxu0 0
    %2871 = vmatprep.subr.bf16.mxu0 0
    %2872 = vmatpush1.bf16.msra.mxu0 0
    %2873 = vmatprep.subr.bf16.mxu0 0
    %2874 = vmatpush1.bf16.msra.mxu0 0
    %2875 = vmatprep.subr.bf16.mxu0 0
    %2876 = vmatpush1.bf16.msra.mxu0 0
    %2877 = vmatprep.subr.bf16.mxu0 0
    %2878 = vmatpush1.bf16.msra.mxu0 0
    %2879 = vmatprep.subr.bf16.mxu0 0
    %2880 = vmatpush1.bf16.msra.mxu0 0
    %2881 = vmatprep.subr.bf16.mxu0 0
    %2882 = vmatpush1.bf16.msra.mxu0 0
    %2883 = vmatprep.subr.bf16.mxu0 0
    %2884 = vmatpush1.bf16.msra.mxu0 0
    %2885 = vmatprep.subr.bf16.mxu0 0
    %2886 = vmatpush1.bf16.msra.mxu0 0
    %2887 = vmatprep.subr.bf16.mxu0 0
    %2888 = vmatpush1.bf16.msra.mxu0 0
    %2889 = vmatprep.subr.bf16.mxu0 0
    %2890 = vmatpush1.bf16.msra.mxu0 0
    %2891 = vmatprep.subr.bf16.mxu0 0
    %2892 = vmatpush1.bf16.msra.mxu0 0
    %2893 = vmatprep.mubr.bf16.mxu0 0
    %2894 = vmatmul.mubr.bf16.gmra.mrb[0].mxu0 %v2859
    %v2895 = vpop.f32.mrb[0].mxu0
    %v2896 = vadd.f32 0.0, %v2895
    %v2897 = vpop.f32.mrb[0].mxu0
    %v2898 = vpop.f32.mrb[0].mxu0
    %v2899 = vadd.f32 0.0, %v2898
    %v2900 = vpop.f32.mrb[0].mxu0
    %2901 = vdwg.mxu0
    %2902 = vst [vmem:[#allocation6] sm:$0xff] %v2896
    %2903 = vst [vmem:[#allocation6 + $0x20] sm:$0xff] %v2899
    %2904 = vset.pattern.permute.xlu0 5
    %2905 = vperm.xlu0 %2904, %v2771
    %v2906 = vpop.permute.xlu0 %2905
    %2908 = vset.pattern.permute.xlu0 5
    %2909 = vperm.xlu0 %2908, %v2774
    %v2910 = vpop.permute.xlu0 %2909
    %v2912 = vlaneseq
    %v2913 = vshrl.u32 %v2912, 7
    %v2914 = vsub.s32 1, %v2913
    %v2915 = vrot.slane %v2793, %v2914
    %v2916 = vadd.f32 %v2906, %v2915
    %v2917 = vadd.f32 %v2910, %v2915
    %vm2918 = vcmp.gt.f32.partialorder %v2916, 0.0
    %vm2919 = vcmp.gt.f32.partialorder %v2917, 0.0
    %v2920 = vmul.f32 %v2916, 0.2
    %v2921 = vmul.f32 %v2917, 0.2
    %v2922 = vsel %vm2918, %v2916, %v2920
    %v2923 = vsel %vm2919, %v2917, %v2921
    %v2924 = vsel %vm347, %v2922, -1e+30
    %v2925 = vsel %vm348, %v2923, -1e+30
    %v2926 = vsel %vm1698, %v2924, -inf
    %2927 = vmax.xlane.f32.xlu0 %v2926
    %v2928 = vpop.xlane.xlu0 %2927
    %v2929 = vsel %vm1698, %v2925, -inf
    %2930 = vmax.xlane.f32.xlu0 %v2929
    %v2931 = vpop.xlane.xlu0 %2930
    %v2932 = vsub.f32 %v2924, %v2928
    %v2933 = vsub.f32 %v2925, %v2931
    %v2934 = vmul.f32 %v2932, 1.442695
    %v2935 = vpow.pop %v2934
    %v2936 = vmul.f32 %v2933, 1.442695
    %v2937 = vpow.pop %v2936
    %v2938 = vsel %vm347, %v2935, 0.0
    %v2939 = vsel %vm348, %v2937, 0.0
    %v2940 = vsel %vm1698, %v2938, 0.0
    %2941 = vadd.xlane.f32.xlu0 %v2940
    %v2942 = vpop.xlane.xlu0 %2941
    %v2943 = vsel %vm1698, %v2939, 0.0
    %2944 = vadd.xlane.f32.xlu0 %v2943
    %v2945 = vpop.xlane.xlu0 %2944
    %v2946 = vrcp.pop %v2942
    %v2947 = vrcp.pop %v2945
    %v2948 = vmul.f32 %v2938, %v2946
    %v2949 = vmul.f32 %v2939, %v2947
    %v2950 = vpack.c.bf16 %v2949, %v2948
    %v2952 = vsel %vm1698, %v2950, 0
    %2954 = vmatprep.subr.bf16.mxu0 0
    %2955 = vmatpush1.bf16.msra.mxu0 %v2436
    %2956 = vmatprep.subr.bf16.mxu0 0
    %2957 = vmatpush1.bf16.msra.mxu0 0
    %2958 = vmatprep.subr.bf16.mxu0 0
    %2959 = vmatpush1.bf16.msra.mxu0 0
    %2960 = vmatprep.subr.bf16.mxu0 0
    %2961 = vmatpush1.bf16.msra.mxu0 0
    %2962 = vmatprep.subr.bf16.mxu0 0
    %2963 = vmatpush1.bf16.msra.mxu0 0
    %2964 = vmatprep.subr.bf16.mxu0 0
    %2965 = vmatpush1.bf16.msra.mxu0 0
    %2966 = vmatprep.subr.bf16.mxu0 0
    %2967 = vmatpush1.bf16.msra.mxu0 0
    %2968 = vmatprep.subr.bf16.mxu0 0
    %2969 = vmatpush1.bf16.msra.mxu0 0
    %2970 = vmatprep.subr.bf16.mxu0 0
    %2971 = vmatpush1.bf16.msra.mxu0 0
    %2972 = vmatprep.subr.bf16.mxu0 0
    %2973 = vmatpush1.bf16.msra.mxu0 0
    %2974 = vmatprep.subr.bf16.mxu0 0
    %2975 = vmatpush1.bf16.msra.mxu0 0
    %2976 = vmatprep.subr.bf16.mxu0 0
    %2977 = vmatpush1.bf16.msra.mxu0 0
    %2978 = vmatprep.subr.bf16.mxu0 0
    %2979 = vmatpush1.bf16.msra.mxu0 0
    %2980 = vmatprep.subr.bf16.mxu0 0
    %2981 = vmatpush1.bf16.msra.mxu0 0
    %2982 = vmatprep.subr.bf16.mxu0 0
    %2983 = vmatpush1.bf16.msra.mxu0 0
    %2984 = vmatprep.subr.bf16.mxu0 0
    %2985 = vmatpush1.bf16.msra.mxu0 0
    %2986 = vmatprep.mubr.bf16.mxu0 0
    %2987 = vmatmul.mubr.bf16.gmra.mrb[0].mxu0 %v2952
    %v2988 = vpop.f32.mrb[0].mxu0
    %v2989 = vadd.f32 0.0, %v2988
    %v2990 = vpop.f32.mrb[0].mxu0
    %v2991 = vpop.f32.mrb[0].mxu0
    %v2992 = vadd.f32 0.0, %v2991
    %v2993 = vpop.f32.mrb[0].mxu0
    %2994 = vdwg.mxu0
    %2995 = vst [vmem:[#allocation6 + $0x8] sm:$0xff] %v2989
    %2996 = vst [vmem:[#allocation6 + $0x28] sm:$0xff] %v2992
    %2997 = vset.pattern.permute.xlu0 6
    %2998 = vperm.xlu0 %2997, %v2771
    %v2999 = vpop.permute.xlu0 %2998
    %3001 = vset.pattern.permute.xlu0 6
    %3002 = vperm.xlu0 %3001, %v2774
    %v3003 = vpop.permute.xlu0 %3002
    %v3005 = vlaneseq
    %v3006 = vshrl.u32 %v3005, 7
    %v3007 = vsub.s32 2, %v3006
    %v3008 = vrot.slane %v2793, %v3007
    %v3009 = vadd.f32 %v2999, %v3008
    %v3010 = vadd.f32 %v3003, %v3008
    %vm3011 = vcmp.gt.f32.partialorder %v3009, 0.0
    %vm3012 = vcmp.gt.f32.partialorder %v3010, 0.0
    %v3013 = vmul.f32 %v3009, 0.2
    %v3014 = vmul.f32 %v3010, 0.2
    %v3015 = vsel %vm3011, %v3009, %v3013
    %v3016 = vsel %vm3012, %v3010, %v3014
    %v3017 = vsel %vm347, %v3015, -1e+30
    %v3018 = vsel %vm348, %v3016, -1e+30
    %v3019 = vsel %vm1698, %v3017, -inf
    %3020 = vmax.xlane.f32.xlu0 %v3019
    %v3021 = vpop.xlane.xlu0 %3020
    %v3022 = vsel %vm1698, %v3018, -inf
    %3023 = vmax.xlane.f32.xlu0 %v3022
    %v3024 = vpop.xlane.xlu0 %3023
    %v3025 = vsub.f32 %v3017, %v3021
    %v3026 = vsub.f32 %v3018, %v3024
    %v3027 = vmul.f32 %v3025, 1.442695
    %v3028 = vpow.pop %v3027
    %v3029 = vmul.f32 %v3026, 1.442695
    %v3030 = vpow.pop %v3029
    %v3031 = vsel %vm347, %v3028, 0.0
    %v3032 = vsel %vm348, %v3030, 0.0
    %v3033 = vsel %vm1698, %v3031, 0.0
    %3034 = vadd.xlane.f32.xlu0 %v3033
    %v3035 = vpop.xlane.xlu0 %3034
    %v3036 = vsel %vm1698, %v3032, 0.0
    %3037 = vadd.xlane.f32.xlu0 %v3036
    %v3038 = vpop.xlane.xlu0 %3037
    %v3039 = vrcp.pop %v3035
    %v3040 = vrcp.pop %v3038
    %v3041 = vmul.f32 %v3031, %v3039
    %v3042 = vmul.f32 %v3032, %v3040
    %v3043 = vpack.c.bf16 %v3042, %v3041
    %v3045 = vsel %vm1698, %v3043, 0
    %3047 = vmatprep.subr.bf16.mxu0 0
    %3048 = vmatpush1.bf16.msra.mxu0 %v2437
    %3049 = vmatprep.subr.bf16.mxu0 0
    %3050 = vmatpush1.bf16.msra.mxu0 0
    %3051 = vmatprep.subr.bf16.mxu0 0
    %3052 = vmatpush1.bf16.msra.mxu0 0
    %3053 = vmatprep.subr.bf16.mxu0 0
    %3054 = vmatpush1.bf16.msra.mxu0 0
    %3055 = vmatprep.subr.bf16.mxu0 0
    %3056 = vmatpush1.bf16.msra.mxu0 0
    %3057 = vmatprep.subr.bf16.mxu0 0
    %3058 = vmatpush1.bf16.msra.mxu0 0
    %3059 = vmatprep.subr.bf16.mxu0 0
    %3060 = vmatpush1.bf16.msra.mxu0 0
    %3061 = vmatprep.subr.bf16.mxu0 0
    %3062 = vmatpush1.bf16.msra.mxu0 0
    %3063 = vmatprep.subr.bf16.mxu0 0
    %3064 = vmatpush1.bf16.msra.mxu0 0
    %3065 = vmatprep.subr.bf16.mxu0 0
    %3066 = vmatpush1.bf16.msra.mxu0 0
    %3067 = vmatprep.subr.bf16.mxu0 0
    %3068 = vmatpush1.bf16.msra.mxu0 0
    %3069 = vmatprep.subr.bf16.mxu0 0
    %3070 = vmatpush1.bf16.msra.mxu0 0
    %3071 = vmatprep.subr.bf16.mxu0 0
    %3072 = vmatpush1.bf16.msra.mxu0 0
    %3073 = vmatprep.subr.bf16.mxu0 0
    %3074 = vmatpush1.bf16.msra.mxu0 0
    %3075 = vmatprep.subr.bf16.mxu0 0
    %3076 = vmatpush1.bf16.msra.mxu0 0
    %3077 = vmatprep.subr.bf16.mxu0 0
    %3078 = vmatpush1.bf16.msra.mxu0 0
    %3079 = vmatprep.mubr.bf16.mxu0 0
    %3080 = vmatmul.mubr.bf16.gmra.mrb[0].mxu0 %v3045
    %v3081 = vpop.f32.mrb[0].mxu0
    %v3082 = vadd.f32 0.0, %v3081
    %v3083 = vpop.f32.mrb[0].mxu0
    %v3084 = vpop.f32.mrb[0].mxu0
    %v3085 = vadd.f32 0.0, %v3084
    %v3086 = vpop.f32.mrb[0].mxu0
    %3087 = vdwg.mxu0
    %3088 = vst [vmem:[#allocation6 + $0x10] sm:$0xff] %v3082
    %3089 = vst [vmem:[#allocation6 + $0x30] sm:$0xff] %v3085
    %3090 = vset.pattern.permute.xlu0 7
    %3091 = vperm.xlu0 %3090, %v2771
    %v3092 = vpop.permute.xlu0 %3091
    %3094 = vset.pattern.permute.xlu0 7
    %3095 = vperm.xlu0 %3094, %v2774
    %v3096 = vpop.permute.xlu0 %3095
    %v3098 = vlaneseq
    %v3099 = vshrl.u32 %v3098, 7
    %v3100 = vsub.s32 3, %v3099
    %v3101 = vrot.slane %v2793, %v3100
    %v3102 = vadd.f32 %v3092, %v3101
    %v3103 = vadd.f32 %v3096, %v3101
    %vm3104 = vcmp.gt.f32.partialorder %v3102, 0.0
    %vm3105 = vcmp.gt.f32.partialorder %v3103, 0.0
    %v3106 = vmul.f32 %v3102, 0.2
    %v3107 = vmul.f32 %v3103, 0.2
    %v3108 = vsel %vm3104, %v3102, %v3106
    %v3109 = vsel %vm3105, %v3103, %v3107
    %v3110 = vsel %vm347, %v3108, -1e+30
    %v3111 = vsel %vm348, %v3109, -1e+30
    %v3112 = vsel %vm1698, %v3110, -inf
    %3113 = vmax.xlane.f32.xlu0 %v3112
    %v3114 = vpop.xlane.xlu0 %3113
    %v3115 = vsel %vm1698, %v3111, -inf
    %3116 = vmax.xlane.f32.xlu0 %v3115
    %v3117 = vpop.xlane.xlu0 %3116
    %v3118 = vsub.f32 %v3110, %v3114
    %v3119 = vsub.f32 %v3111, %v3117
    %v3120 = vmul.f32 %v3118, 1.442695
    %v3121 = vpow.pop %v3120
    %v3122 = vmul.f32 %v3119, 1.442695
    %v3123 = vpow.pop %v3122
    %v3124 = vsel %vm347, %v3121, 0.0
    %v3125 = vsel %vm348, %v3123, 0.0
    %v3126 = vsel %vm1698, %v3124, 0.0
    %3127 = vadd.xlane.f32.xlu0 %v3126
    %v3128 = vpop.xlane.xlu0 %3127
    %v3129 = vsel %vm1698, %v3125, 0.0
    %3130 = vadd.xlane.f32.xlu0 %v3129
    %v3131 = vpop.xlane.xlu0 %3130
    %v3132 = vrcp.pop %v3128
    %v3133 = vrcp.pop %v3131
    %v3134 = vmul.f32 %v3124, %v3132
    %v3135 = vmul.f32 %v3125, %v3133
    %v3136 = vpack.c.bf16 %v3135, %v3134
    %v3138 = vsel %vm1698, %v3136, 0
    %3140 = vmatprep.subr.bf16.mxu0 0
    %3141 = vmatpush1.bf16.msra.mxu0 %v2438
    %3142 = vmatprep.subr.bf16.mxu0 0
    %3143 = vmatpush1.bf16.msra.mxu0 0
    %3144 = vmatprep.subr.bf16.mxu0 0
    %3145 = vmatpush1.bf16.msra.mxu0 0
    %3146 = vmatprep.subr.bf16.mxu0 0
    %3147 = vmatpush1.bf16.msra.mxu0 0
    %3148 = vmatprep.subr.bf16.mxu0 0
    %3149 = vmatpush1.bf16.msra.mxu0 0
    %3150 = vmatprep.subr.bf16.mxu0 0
    %3151 = vmatpush1.bf16.msra.mxu0 0
    %3152 = vmatprep.subr.bf16.mxu0 0
    %3153 = vmatpush1.bf16.msra.mxu0 0
    %3154 = vmatprep.subr.bf16.mxu0 0
    %3155 = vmatpush1.bf16.msra.mxu0 0
    %3156 = vmatprep.subr.bf16.mxu0 0
    %3157 = vmatpush1.bf16.msra.mxu0 0
    %3158 = vmatprep.subr.bf16.mxu0 0
    %3159 = vmatpush1.bf16.msra.mxu0 0
    %3160 = vmatprep.subr.bf16.mxu0 0
    %3161 = vmatpush1.bf16.msra.mxu0 0
    %3162 = vmatprep.subr.bf16.mxu0 0
    %3163 = vmatpush1.bf16.msra.mxu0 0
    %3164 = vmatprep.subr.bf16.mxu0 0
    %3165 = vmatpush1.bf16.msra.mxu0 0
    %3166 = vmatprep.subr.bf16.mxu0 0
    %3167 = vmatpush1.bf16.msra.mxu0 0
    %3168 = vmatprep.subr.bf16.mxu0 0
    %3169 = vmatpush1.bf16.msra.mxu0 0
    %3170 = vmatprep.subr.bf16.mxu0 0
    %3171 = vmatpush1.bf16.msra.mxu0 0
    %3172 = vmatprep.mubr.bf16.mxu0 0
    %3173 = vmatmul.mubr.bf16.gmra.mrb[0].mxu0 %v3138
    %v3174 = vpop.f32.mrb[0].mxu0
    %v3175 = vadd.f32 0.0, %v3174
    %v3176 = vpop.f32.mrb[0].mxu0
    %v3177 = vpop.f32.mrb[0].mxu0
    %v3178 = vadd.f32 0.0, %v3177
    %v3179 = vpop.f32.mrb[0].mxu0
    %3180 = vdwg.mxu0
    %3181 = vst [vmem:[#allocation6 + $0x18] sm:$0xff] %v3175
    %3182 = vst [vmem:[#allocation6 + $0x38] sm:$0xff] %v3178
    %v3183 = vld [vmem:[#allocation6] sm:$0xff]
    %v3184 = vld [vmem:[#allocation6 + $0x8] sm:$0xff]
    %v3185 = vld [vmem:[#allocation6 + $0x10] sm:$0xff]
    %v3186 = vld [vmem:[#allocation6 + $0x18] sm:$0xff]
    %v3187 = vld [vmem:[#allocation6 + $0x20] sm:$0xff]
    %v3188 = vld [vmem:[#allocation6 + $0x28] sm:$0xff]
    %v3189 = vld [vmem:[#allocation6 + $0x30] sm:$0xff]
    %v3190 = vld [vmem:[#allocation6 + $0x38] sm:$0xff]
    %v3191 = vld [vmem:[#allocation15] sm:$0xf]
    %v3193 = vlaneseq
    %v3194 = vshrl.u32 %v3193, 7
    %v3195 = vsub.s32 0, %v3194
    %v3196 = vrot.slane %v3191, %v3195
    %v3197 = vlaneseq
    %v3198 = vshrl.u32 %v3197, 7
    %v3199 = vsub.s32 1, %v3198
    %v3200 = vrot.slane %v3191, %v3199
    %v3201 = vlaneseq
    %v3202 = vshrl.u32 %v3201, 7
    %v3203 = vsub.s32 2, %v3202
    %v3204 = vrot.slane %v3191, %v3203
    %v3205 = vlaneseq
    %v3206 = vshrl.u32 %v3205, 7
    %v3207 = vsub.s32 3, %v3206
    %v3208 = vrot.slane %v3191, %v3207
    %v3213 = vadd.f32 %v3183, %v3196
    %v3214 = vadd.f32 %v3184, %v3200
    %v3215 = vadd.f32 %v3185, %v3204
    %v3216 = vadd.f32 %v3186, %v3208
    %v3217 = vadd.f32 %v3187, %v3196
    %v3218 = vadd.f32 %v3188, %v3200
    %v3219 = vadd.f32 %v3189, %v3204
    %v3220 = vadd.f32 %v3190, %v3208
    %vm3221 = vcmp.gt.f32.partialorder %v3213, 0.0
    %vm3222 = vcmp.gt.f32.partialorder %v3214, 0.0
    %vm3223 = vcmp.gt.f32.partialorder %v3215, 0.0
    %vm3224 = vcmp.gt.f32.partialorder %v3216, 0.0
    %vm3225 = vcmp.gt.f32.partialorder %v3217, 0.0
    %vm3226 = vcmp.gt.f32.partialorder %v3218, 0.0
    %vm3227 = vcmp.gt.f32.partialorder %v3219, 0.0
    %vm3228 = vcmp.gt.f32.partialorder %v3220, 0.0
    %v3229 = vmul.f32 %v3213, 1.442695
    %v3230 = vpow.pop %v3229
    %v3231 = vmul.f32 %v3214, 1.442695
    %v3232 = vpow.pop %v3231
    %v3233 = vmul.f32 %v3215, 1.442695
    %v3234 = vpow.pop %v3233
    %v3235 = vmul.f32 %v3216, 1.442695
    %v3236 = vpow.pop %v3235
    %v3237 = vmul.f32 %v3217, 1.442695
    %v3238 = vpow.pop %v3237
    %v3239 = vmul.f32 %v3218, 1.442695
    %v3240 = vpow.pop %v3239
    %v3241 = vmul.f32 %v3219, 1.442695
    %v3242 = vpow.pop %v3241
    %v3243 = vmul.f32 %v3220, 1.442695
    %v3244 = vpow.pop %v3243
    %v3245 = vsub.f32 %v3230, 1.0
    %v3246 = vsub.f32 %v3232, 1.0
    %v3247 = vsub.f32 %v3234, 1.0
    %v3248 = vsub.f32 %v3236, 1.0
    %v3249 = vsub.f32 %v3238, 1.0
    %v3250 = vsub.f32 %v3240, 1.0
    %v3251 = vsub.f32 %v3242, 1.0
    %v3252 = vsub.f32 %v3244, 1.0
    %v3253 = vsel %vm3221, %v3213, %v3245
    %v3254 = vsel %vm3222, %v3214, %v3246
    %v3255 = vsel %vm3223, %v3215, %v3247
    %v3256 = vsel %vm3224, %v3216, %v3248
    %v3257 = vsel %vm3225, %v3217, %v3249
    %v3258 = vsel %vm3226, %v3218, %v3250
    %v3259 = vsel %vm3227, %v3219, %v3251
    %v3260 = vsel %vm3228, %v3220, %v3252
    %v3261 = vpack.c.bf16 %v3257, %v3253
    %v3262 = vpack.c.bf16 %v3258, %v3254
    %v3263 = vpack.c.bf16 %v3259, %v3255
    %v3264 = vpack.c.bf16 %v3260, %v3256
    %s3265 = smul.u32 %s2131, 1
    %s3266 = sshll.u32 %s3265, 4
    %3267 = dma.done %s199, %s3266
    %v3268 = vld [vmem:[#allocation4] sm:$0xff]
    %v3269 = vld [vmem:[#allocation4 + $0x8] sm:$0xff]
    %v3270 = vld [vmem:[#allocation4 + $0x10] sm:$0xff]
    %v3271 = vld [vmem:[#allocation4 + $0x18] sm:$0xff]
    %v3272 = vld [vmem:[#allocation4 + $0x20] sm:$0xff]
    %v3273 = vld [vmem:[#allocation4 + $0x28] sm:$0xff]
    %v3274 = vld [vmem:[#allocation4 + $0x30] sm:$0xff]
    %v3275 = vld [vmem:[#allocation4 + $0x38] sm:$0xff]
    %v3276 = vld [vmem:[#allocation4 + $0x40] sm:$0xff]
    %v3277 = vld [vmem:[#allocation4 + $0x48] sm:$0xff]
    %v3278 = vld [vmem:[#allocation4 + $0x50] sm:$0xff]
    %v3279 = vld [vmem:[#allocation4 + $0x58] sm:$0xff]
    %v3280 = vld [vmem:[#allocation4 + $0x60] sm:$0xff]
    %v3281 = vld [vmem:[#allocation4 + $0x68] sm:$0xff]
    %v3282 = vld [vmem:[#allocation4 + $0x70] sm:$0xff]
    %v3283 = vld [vmem:[#allocation4 + $0x78] sm:$0xff]
    %v3284 = vld [vmem:[#allocation4 + $0x80] sm:$0xff]
    %v3285 = vld [vmem:[#allocation4 + $0x88] sm:$0xff]
    %v3286 = vld [vmem:[#allocation4 + $0x90] sm:$0xff]
    %v3287 = vld [vmem:[#allocation4 + $0x98] sm:$0xff]
    %v3288 = vld [vmem:[#allocation4 + $0xa0] sm:$0xff]
    %v3289 = vld [vmem:[#allocation4 + $0xa8] sm:$0xff]
    %v3290 = vld [vmem:[#allocation4 + $0xb0] sm:$0xff]
    %v3291 = vld [vmem:[#allocation4 + $0xb8] sm:$0xff]
    %v3292 = vld [vmem:[#allocation4 + $0xc0] sm:$0xff]
    %v3293 = vld [vmem:[#allocation4 + $0xc8] sm:$0xff]
    %v3294 = vld [vmem:[#allocation4 + $0xd0] sm:$0xff]
    %v3295 = vld [vmem:[#allocation4 + $0xd8] sm:$0xff]
    %v3296 = vld [vmem:[#allocation4 + $0xe0] sm:$0xff]
    %v3297 = vld [vmem:[#allocation4 + $0xe8] sm:$0xff]
    %v3298 = vld [vmem:[#allocation4 + $0xf0] sm:$0xff]
    %v3299 = vld [vmem:[#allocation4 + $0xf8] sm:$0xff]
    %v3300 = vld [vmem:[#allocation17] sm:$0x1]
    %v3302 = vlaneseq
    %v3303 = vshrl.u32 %v3302, 7
    %v3304 = vsub.s32 0, %v3303
    %v3305 = vrot.slane %v3300, %v3304
    %3307 = vmatprep.subr.bf16.mxu0 0
    %3308 = vmatpush1.bf16.msra.mxu0 %v3268
    %3309 = vmatprep.subr.bf16.mxu0 0
    %3310 = vmatpush1.bf16.msra.mxu0 %v3269
    %3311 = vmatprep.subr.bf16.mxu0 0
    %3312 = vmatpush1.bf16.msra.mxu0 %v3270
    %3313 = vmatprep.subr.bf16.mxu0 0
    %3314 = vmatpush1.bf16.msra.mxu0 %v3271
    %3315 = vmatprep.subr.bf16.mxu0 0
    %3316 = vmatpush1.bf16.msra.mxu0 %v3272
    %3317 = vmatprep.subr.bf16.mxu0 0
    %3318 = vmatpush1.bf16.msra.mxu0 %v3273
    %3319 = vmatprep.subr.bf16.mxu0 0
    %3320 = vmatpush1.bf16.msra.mxu0 %v3274
    %3321 = vmatprep.subr.bf16.mxu0 0
    %3322 = vmatpush1.bf16.msra.mxu0 %v3275
    %3323 = vmatprep.subr.bf16.mxu0 0
    %3324 = vmatpush1.bf16.msra.mxu0 %v3276
    %3325 = vmatprep.subr.bf16.mxu0 0
    %3326 = vmatpush1.bf16.msra.mxu0 %v3277
    %3327 = vmatprep.subr.bf16.mxu0 0
    %3328 = vmatpush1.bf16.msra.mxu0 %v3278
    %3329 = vmatprep.subr.bf16.mxu0 0
    %3330 = vmatpush1.bf16.msra.mxu0 %v3279
    %3331 = vmatprep.subr.bf16.mxu0 0
    %3332 = vmatpush1.bf16.msra.mxu0 %v3280
    %3333 = vmatprep.subr.bf16.mxu0 0
    %3334 = vmatpush1.bf16.msra.mxu0 %v3281
    %3335 = vmatprep.subr.bf16.mxu0 0
    %3336 = vmatpush1.bf16.msra.mxu0 %v3282
    %3337 = vmatprep.subr.bf16.mxu0 0
    %3338 = vmatpush1.bf16.msra.mxu0 %v3283
    %3339 = vmatprep.mubr.bf16.mxu0 %v3262
    %3340 = vmatmul.mubr.bf16.gmra.mrb[0].mxu0 %v3261
    %v3341 = vpop.f32.mrb[0].mxu0
    %v3342 = vadd.f32 %v3305, %v3341
    %v3343 = vpop.f32.mrb[0].mxu0
    %v3344 = vpop.f32.mrb[0].mxu0
    %v3345 = vadd.f32 %v3305, %v3344
    %v3346 = vpop.f32.mrb[0].mxu0
    %3347 = vdwg.mxu0
    %3348 = vmatprep.subr.bf16.mxu0 0
    %3349 = vmatpush1.bf16.msra.mxu0 %v3284
    %3350 = vmatprep.subr.bf16.mxu0 0
    %3351 = vmatpush1.bf16.msra.mxu0 %v3285
    %3352 = vmatprep.subr.bf16.mxu0 0
    %3353 = vmatpush1.bf16.msra.mxu0 %v3286
    %3354 = vmatprep.subr.bf16.mxu0 0
    %3355 = vmatpush1.bf16.msra.mxu0 %v3287
    %3356 = vmatprep.subr.bf16.mxu0 0
    %3357 = vmatpush1.bf16.msra.mxu0 %v3288
    %3358 = vmatprep.subr.bf16.mxu0 0
    %3359 = vmatpush1.bf16.msra.mxu0 %v3289
    %3360 = vmatprep.subr.bf16.mxu0 0
    %3361 = vmatpush1.bf16.msra.mxu0 %v3290
    %3362 = vmatprep.subr.bf16.mxu0 0
    %3363 = vmatpush1.bf16.msra.mxu0 %v3291
    %3364 = vmatprep.subr.bf16.mxu0 0
    %3365 = vmatpush1.bf16.msra.mxu0 %v3292
    %3366 = vmatprep.subr.bf16.mxu0 0
    %3367 = vmatpush1.bf16.msra.mxu0 %v3293
    %3368 = vmatprep.subr.bf16.mxu0 0
    %3369 = vmatpush1.bf16.msra.mxu0 %v3294
    %3370 = vmatprep.subr.bf16.mxu0 0
    %3371 = vmatpush1.bf16.msra.mxu0 %v3295
    %3372 = vmatprep.subr.bf16.mxu0 0
    %3373 = vmatpush1.bf16.msra.mxu0 %v3296
    %3374 = vmatprep.subr.bf16.mxu0 0
    %3375 = vmatpush1.bf16.msra.mxu0 %v3297
    %3376 = vmatprep.subr.bf16.mxu0 0
    %3377 = vmatpush1.bf16.msra.mxu0 %v3298
    %3378 = vmatprep.subr.bf16.mxu0 0
    %3379 = vmatpush1.bf16.msra.mxu0 %v3299
    %3380 = vmatprep.mubr.bf16.mxu0 %v3264
    %3381 = vmatmul.mubr.bf16.gmra.mrb[0].mxu0 %v3263
    %v3382 = vpop.f32.mrb[0].mxu0
    %v3383 = vadd.f32 %v3342, %v3382
    %v3384 = vpop.f32.mrb[0].mxu0
    %v3385 = vpop.f32.mrb[0].mxu0
    %v3386 = vadd.f32 %v3345, %v3385
    %v3387 = vpop.f32.mrb[0].mxu0
    %3388 = vdwg.mxu0
    %vm3389 = vcmp.gt.f32.partialorder %v3383, 0.0
    %vm3390 = vcmp.gt.f32.partialorder %v3386, 0.0
    %v3391 = vmul.f32 %v3383, 1.442695
    %v3392 = vpow.pop %v3391
    %v3393 = vmul.f32 %v3386, 1.442695
    %v3394 = vpow.pop %v3393
    %v3395 = vsub.f32 %v3392, 1.0
    %v3396 = vsub.f32 %v3394, 1.0
    %v3397 = vsel %vm3389, %v3383, %v3395
    %v3398 = vsel %vm3390, %v3386, %v3396
    %vm3399 = vcmask 523264
    %3400 = vst.msk [vmem:[#allocation18] sm:$0xff] %vm3399, %v3397
    %3401 = vst.msk [vmem:[#allocation18 + $0x8] sm:$0xff] %vm3399, %v3398
    // Predicated region
    $region84: #{net_forward.1} parent=1 // pred_check
      _
    $region85: #{net_forward.1} parent=1 // pred_check_branch
      %3403 = sbr.rel (0) target = $region87
    $region86: #{net_forward.1} parent=1 // pred_region
      %s3405 = ssub.s32 256, 256
      %3406 = vsyncadd [#allocation11], %s3405
      %s3407 = sshll.u32 [#allocation18], 4
      %s3408 = int_to_ptr.vmem [resolvable:$true] %s3407
      %3413 = dma.vmem_to_hbm [thread:$0]  %s3408, 256, %s10, [#allocation11], 128, 128, 8
    $region87: #{net_forward.1} parent=1 // pred_fallthru
      _
    // Predicated region
    $region88: #{net_forward.1} parent=1 // pred_check
      _
    $region89: #{net_forward.1} parent=1 // pred_check_branch
      %3415 = sbr.rel (0) target = $region91
    $region90: #{net_forward.1} parent=1 // pred_region
      %3416 = dma.done [#allocation11], 256
    $region91: #{net_forward.1} parent=1 // pred_fallthru
      _
    %3417 = vsyncpa [#allocation10], 1
    %3418 = vsyncpa [#allocation13], 1
    %3419 = vsyncpa [#allocation16], 1
    %3420 = vsyncpa [#allocation11], 1
  %3421 = vsyncmov [#allocation7]
  %s3422 = vpop.sfrf %3421
  %p3423 = scmp.eq.s32.totalorder %s3422, 0
  %p3424 = pneg %p3423
  %3426 = shalt.err (%p3424)
  %s3427 = scalar_lea.sflag [#allocation7], 1
  %3428 = vsyncmov %s3427
  %s3429 = vpop.sfrf %3428
  %p3430 = scmp.eq.s32.totalorder %s3429, 0
  %p3431 = pneg %p3430
  %3433 = shalt.err (%p3431)
  %3434 = vsyncmov [#allocation8]
  %s3435 = vpop.sfrf %3434
  %p3436 = scmp.eq.s32.totalorder %s3435, 0
  %p3437 = pneg %p3436
  %3439 = shalt.err (%p3437)
  %s3440 = scalar_lea.sflag [#allocation8], 1
  %3441 = vsyncmov %s3440
  %s3442 = vpop.sfrf %3441
  %p3443 = scmp.eq.s32.totalorder %s3442, 0
  %p3444 = pneg %p3443
  %3446 = shalt.err (%p3444)

</llo_original>
